<compile_context>
chip_gen: v7x
topology: tpu7x:2x2x1
jax: 0.10.0
libtpu: 0.0.40
codegen_flags: <defaults>
</compile_context>

<pallas_src>
import functools

import jax
import jax.numpy as jnp
from jax.experimental import pallas as pl
from jax.experimental.pallas import tpu as pltpu

# ------------------------- configuration ----------------------------------
VOCAB = 32
HIDDEN = 32
TOPIC_SIZE = [16, 8]          # args.topic_size
EMBED = 16
BATCH = 8
TOPIC = [VOCAB] + TOPIC_SIZE  # [32, 16, 8]
L = len(TOPIC) - 1            # layer_num = 2

REAL_MIN = 1e-30
WEI_SHAPE_MAX = 10.0
EULER_GAMMA = 0.5772
SAMPLE_NUM = 50
BN_EPS = 1e-5

_VMEM = pl.BlockSpec(memory_space=pltpu.MemorySpace.VMEM)
_SMEM = pl.BlockSpec(memory_space=pltpu.MemorySpace.SMEM)


# ------------------------- in-kernel helpers --------------------------------
def _softplus(x):
    # Numerically stable softplus using only exp/log/abs/max (all lower on TPU).
    return jnp.maximum(x, 0.0) + jnp.log(1.0 + jnp.exp(-jnp.abs(x)))


# ------------------------- Pallas kernels ----------------------------------
def _encoder_kernel(x_ref, w1_ref, b1_ref, w2_ref, b2_ref, g_ref, beta_ref,
                    o_ref, *, residual):
    """Fused DeepConv1D/ResConv1D + BatchNorm1d(train) + ReLU."""
    x = x_ref[...]
    h = _softplus(jnp.dot(x, w1_ref[...], preferred_element_type=jnp.float32)
                  + b1_ref[...])
    h = _softplus(jnp.dot(h, w2_ref[...], preferred_element_type=jnp.float32)
                  + b2_ref[...])
    if residual:
        h = h + x
    # nn.BatchNorm1d in training mode: batch statistics, biased variance.
    mu = jnp.mean(h, axis=0, keepdims=True)
    d = h - mu
    var = jnp.mean(d * d, axis=0, keepdims=True)
    hn = d * jax.lax.rsqrt(var + BN_EPS)
    o_ref[...] = jnp.maximum(hn * g_ref[...] + beta_ref[...], 0.0)


def encoder_layer(x, w1, b1, w2, b2, gamma, beta, residual):
    b_ = x.shape[0]
    h = w1.shape[1]
    return pl.pallas_call(
        functools.partial(_encoder_kernel, residual=residual),
        out_shape=jax.ShapeDtypeStruct((b_, h), jnp.float32),
        in_specs=[_VMEM] * 7,
        out_specs=_VMEM,
    )(x, w1, b1.reshape(1, -1), w2, b2.reshape(1, -1),
      gamma.reshape(1, -1), beta.reshape(1, -1))


def _phi_t_kernel(alphas_ref, rho_ref, o_ref):
    # phi = softmax(rho @ alphas^T, dim=0).  We compute phi^T directly:
    #   phi^T = softmax(alphas @ rho^T, axis=-1)
    # so the max/sum reductions run along the lane axis.
    w = jax.lax.dot_general(
        alphas_ref[...], rho_ref[...],
        (((1,), (1,)), ((), ())),
        preferred_element_type=jnp.float32)          # (K, V)
    w = w - jnp.max(w, axis=-1, keepdims=True)
    e = jnp.exp(w)
    o_ref[...] = e / jnp.sum(e, axis=-1, keepdims=True)


def get_phi_t(alphas, rho):
    k = alphas.shape[0]
    v = rho.shape[0]
    return pl.pallas_call(
        _phi_t_kernel,
        out_shape=jax.ShapeDtypeStruct((k, v), jnp.float32),
        in_specs=[_VMEM] * 2,
        out_specs=_VMEM,
    )(alphas, rho)


def _shape_scale_kernel(inp_ref, wk_ref, bk_ref, wl_ref, bl_ref, k_ref, l_ref):
    """Fused shape_encoder + scale_encoder with their activation epilogues."""
    inp = inp_ref[...]
    yk = jnp.dot(inp, wk_ref[...], preferred_element_type=jnp.float32) + bk_ref[...]
    yl = jnp.dot(inp, wl_ref[...], preferred_element_type=jnp.float32) + bl_ref[...]
    k_ref[...] = jnp.minimum(jnp.maximum(_softplus(yk), REAL_MIN), WEI_SHAPE_MAX)
    l_ref[...] = jnp.maximum(_softplus(yl), REAL_MIN)


def shape_scale_encode(inp, wk, bk, wl, bl):
    b_ = inp.shape[0]
    n_topic = wk.shape[1]
    return pl.pallas_call(
        _shape_scale_kernel,
        out_shape=(jax.ShapeDtypeStruct((b_, n_topic), jnp.float32),
                   jax.ShapeDtypeStruct((b_, n_topic), jnp.float32)),
        in_specs=[_VMEM] * 5,
        out_specs=(_VMEM, _VMEM),
    )(inp, wk, bk.reshape(1, -1), wl, bl.reshape(1, -1))


def _reparam_decode_kernel(k_ref, l_ref, eps_ref, phit_ref,
                           theta_ref, phitheta_ref, *, sample_num):
    """Single-shot Weibull reparameterization + decoder matmul.

    theta = mean_s[ scale * (-log(1 - eps_s))**shape ]      (batch, topic)
    phi_theta = theta @ phi^T                               (batch, vocab_t)
    """
    k = k_ref[...]                                   # (B, K)
    l = l_ref[...]                                   # (B, K)
    eps = eps_ref[...]                               # (S, B, K)
    lam = -jnp.log(jnp.maximum(1.0 - eps, REAL_MIN))          # >= 0
    lam_safe = jnp.where(lam > 0.0, lam, 1.0)
    powed = jnp.where(lam > 0.0, jnp.exp(k * jnp.log(lam_safe)), 0.0)
    theta = l * (jnp.sum(powed, axis=0) / float(sample_num))  # (B, K)
    theta_ref[...] = theta
    phitheta_ref[...] = jnp.dot(theta, phit_ref[...],
                                preferred_element_type=jnp.float32)


def reparam_decode(k_rec, l_scale, eps, phi_t):
    b_, kt = k_rec.shape
    v = phi_t.shape[1]
    return pl.pallas_call(
        functools.partial(_reparam_decode_kernel, sample_num=eps.shape[0]),
        out_shape=(jax.ShapeDtypeStruct((b_, kt), jnp.float32),
                   jax.ShapeDtypeStruct((b_, v), jnp.float32)),
        in_specs=[_VMEM] * 4,
        out_specs=(_VMEM, _VMEM),
    )(k_rec, l_scale, eps, phi_t)


def _matmul_kernel(a_ref, b_ref, o_ref):
    o_ref[...] = jnp.dot(a_ref[...], b_ref[...], preferred_element_type=jnp.float32)


def matmul(a, b):
    return pl.pallas_call(
        _matmul_kernel,
        out_shape=jax.ShapeDtypeStruct((a.shape[0], b.shape[1]), jnp.float32),
        in_specs=[_VMEM] * 2,
        out_specs=_VMEM,
    )(a, b)


def _poisson_losses_kernel(x_ref, lgx_ref, re_ref, o_ref, *, n_cand, batch):
    """Batched Poisson NLL: one pass over x / lgamma(x+1), n_cand scalar sums."""
    x = x_ref[...]
    lgx = lgx_ref[...]
    inv = -1.0 / float(batch)
    for i in range(n_cand):                       # static unroll
        re = re_ref[i]
        ll = jnp.sum(x * jnp.log(jnp.maximum(re, REAL_MIN)) - re - lgx)
        o_ref[i] = ll * inv


def poisson_losses(x, lgx, re_stack):
    n_cand = re_stack.shape[0]
    return pl.pallas_call(
        functools.partial(_poisson_losses_kernel, n_cand=n_cand, batch=x.shape[0]),
        out_shape=jax.ShapeDtypeStruct((n_cand,), jnp.float32),
        in_specs=[_VMEM] * 3,
        out_specs=_SMEM,
    )(x, lgx, re_stack)


# ------------------------- JAX glue -----------------------------------------
def log_max(x):
    return jnp.log(jnp.maximum(x, REAL_MIN))


def kl_gamwei(gam_shape, gam_scale, wei_shape, wei_scale, batch):
    # All arrays in (batch, topic) orientation; the normalizer matches the
    # PyTorch Wei_scale.shape[1] == batch in (topic, batch) orientation.
    # TODO(synk): lgamma has no Pallas TPU lowering; this tiny reduction stays in XLA.
    part1 = (gam_shape * log_max(wei_scale)
             - EULER_GAMMA * gam_shape * wei_shape
             + log_max(wei_shape))
    part2 = -gam_scale * wei_scale * jnp.exp(jax.lax.lgamma(1.0 + wei_shape))
    part3 = (EULER_GAMMA + 1.0 + gam_shape * log_max(gam_scale)
             - jax.lax.lgamma(gam_shape))
    return -jnp.sum(part1 + part2 + part3) / batch


def init_params(key):
    keys = iter(jax.random.split(key, 64))

    def nrm(shape):
        return (0.02 * jax.random.normal(next(keys), shape)).astype(jnp.float32)

    def zeros(n):
        return jnp.zeros((n,), jnp.float32)

    # h_encoder: DeepConv1D then ResConv1D (each two Conv1D + softplus)
    he = [(nrm((VOCAB, HIDDEN)), zeros(HIDDEN),
           nrm((HIDDEN, HIDDEN)), zeros(HIDDEN))]
    for _ in range(L - 1):
        he.append((nrm((HIDDEN, HIDDEN)), zeros(HIDDEN),
                   nrm((HIDDEN, HIDDEN)), zeros(HIDDEN)))

    bn = [(jnp.ones((HIDDEN,), jnp.float32), zeros(HIDDEN)) for _ in range(L + 1)]

    # shape / scale encoders; input is [hidden, phi_theta_{t+1}] for t < L-1.
    shape_enc, scale_enc = [], []
    for i in range(L - 1):
        nin, nout = HIDDEN + TOPIC[i + 1], TOPIC[i + 1]
        shape_enc.append((nrm((nin, nout)), zeros(nout)))
        scale_enc.append((nrm((nin, nout)), zeros(nout)))
    shape_enc.append((nrm((HIDDEN, TOPIC[L])), zeros(TOPIC[L])))
    scale_enc.append((nrm((HIDDEN, TOPIC[L])), zeros(TOPIC[L])))

    rho0 = nrm((TOPIC[0], EMBED))
    alphas = [nrm((TOPIC[t + 1], EMBED)) for t in range(L)]   # rho[t+1] tied to alphas[t]
    layer_alpha = jnp.ones((L,), jnp.float32) / L

    return {'he': he, 'bn': bn, 'shape_enc': shape_enc, 'scale_enc': scale_enc,
            'rho0': rho0, 'alphas': alphas, 'layer_alpha': layer_alpha}


def dcetm_forward(params, x, key):
    # ---- h_encoder stack (fused linear/softplus/residual/BN/ReLU kernels) ----
    hidden_list = []
    h_in = x
    for t in range(L):
        w1, b1, w2, b2 = params['he'][t]
        g, bt = params['bn'][t]
        hidden = encoder_layer(h_in, w1, b1, w2, b2, g, bt, residual=(t > 0))
        hidden_list.append(hidden)
        h_in = hidden

    # ---- decoder phi^T (rho of layer t+1 is tied to alphas of layer t) ----
    rho = [params['rho0']] + [params['alphas'][t] for t in range(L - 1)]
    phi_t = [get_phi_t(params['alphas'][t], rho[t]) for t in range(L)]   # (K_t, V_t)

    k_rec = [None] * L          # (batch, topic[t+1])
    l_scale = [None] * L        # (batch, topic[t+1])
    theta_bt = [None] * L       # (batch, topic[t+1])
    phi_theta_bt = [None] * L   # (batch, topic[t])
    keys = jax.random.split(key, L)

    for t in range(L - 1, -1, -1):
        if t == L - 1:
            inp = hidden_list[t]
        else:
            inp = jnp.concatenate([hidden_list[t], phi_theta_bt[t + 1]], axis=1)
        wk, bk = params['shape_enc'][t]
        wl, bl = params['scale_enc'][t]
        k_rec[t], l_tmp = shape_scale_encode(inp, wk, bk, wl, bl)
        # l = l_tmp / Gamma(1 + k)   (matches the PyTorch reference; lgamma in XLA)
        l_scale[t] = l_tmp / jnp.exp(jax.lax.lgamma(1.0 + k_rec[t]))
        eps = jax.random.uniform(keys[t], (SAMPLE_NUM, BATCH, TOPIC[t + 1]),
                                 dtype=jnp.float32)
        theta_bt[t], phi_theta_bt[t] = reparam_decode(k_rec[t], l_scale[t],
                                                      eps, phi_t[t])

    # ---- KL losses (tiny lgamma reductions stay in XLA glue) ----
    loss = [None] * (L + 1)
    for t in range(1, L + 1):
        if t == L:
            loss[t] = kl_gamwei(jnp.float32(0.1), jnp.float32(1.0),
                                k_rec[t - 1], l_scale[t - 1], BATCH)
        else:
            loss[t] = kl_gamwei(phi_theta_bt[t], jnp.float32(1.0),
                                k_rec[t - 1], l_scale[t - 1], BATCH)

    # ---- projected reconstructions (batch, vocab) ----
    pt_tmp = [None] * L
    for t in range(L):
        pt = phi_theta_bt[t]
        for j in range(t):
            pt = matmul(pt, phi_t[t - j - 1])
        pt_tmp[t] = pt

    act = jax.nn.sigmoid(params['layer_alpha'])
    w_alpha = jax.nn.softmax(act, axis=0)
    add_phi_theta = 0.0
    for t in range(L):
        add_phi_theta = add_phi_theta + w_alpha[t] * pt_tmp[t]

    # ---- batched Poisson log-likelihood reductions (one kernel) ----
    lg_x1 = jax.lax.lgamma(x + 1.0)
    re_stack = jnp.stack(pt_tmp + [add_phi_theta], axis=0)     # (L+1, B, V)
    ll = poisson_losses(x, lg_x1, re_stack)                    # (L+1,)

    loss[0] = ll[0]
    likelihood = [None] * (L + 1)
    for t in range(L):
        likelihood[t + 1] = ll[t]
    division_likeli_loss = ll[L]
    likelihood[0] = division_likeli_loss

    # ---- restore the original PyTorch (topic, batch) orientation at the output ----
    phi_theta = [p.T for p in phi_theta_bt]
    theta = [th.T for th in theta_bt]

    return {'phi_theta': phi_theta, 'theta': theta, 'loss': loss,
            'likelihood': likelihood,
            'division_likeli_loss': division_likeli_loss}


# ------------------------- main ---------------------------------------------
if __name__ == "__main__":
    root = jax.random.PRNGKey(0)
    pkey, xkey, ekey = jax.random.split(root, 3)

    params = init_params(pkey)
    x = jax.random.poisson(xkey, 1.0, (BATCH, VOCAB)).astype(jnp.float32)

    fwd = jax.jit(dcetm_forward)
    out = fwd(params, x, ekey)
    out = jax.block_until_ready(out)

    scalars = list(out['loss']) + list(out['likelihood'])
    assert all(bool(jnp.isfinite(v)) for v in scalars)
    assert out['phi_theta'][0].shape == (VOCAB, BATCH)
    assert out['theta'][0].shape == (TOPIC[1], BATCH)

    print("KERNEL_OK")
</pallas_src>

<mosaic_0001>
module attributes {stable_mosaic.version = 11 : i64} {
  func.func @_encoder_kernel(%arg0: memref<8x32xf32, #tpu.memory_space<vmem>>, %arg1: memref<32x32xf32, #tpu.memory_space<vmem>>, %arg2: memref<1x32xf32, #tpu.memory_space<vmem>>, %arg3: memref<32x32xf32, #tpu.memory_space<vmem>>, %arg4: memref<1x32xf32, #tpu.memory_space<vmem>>, %arg5: memref<1x32xf32, #tpu.memory_space<vmem>>, %arg6: memref<1x32xf32, #tpu.memory_space<vmem>>, %arg7: memref<8x32xf32, #tpu.memory_space<vmem>>) attributes {dimension_semantics = [], scalar_prefetch = 0 : i64, scratch_operands = 0 : i64, tpu.core_type = #tpu.core_type<tc>} {
    %c0 = arith.constant 0 : index
    %c0_0 = arith.constant 0 : index
    %0 = vector.load %arg0[%c0, %c0_0] : memref<8x32xf32, #tpu.memory_space<vmem>>, vector<8x32xf32>
    %c0_1 = arith.constant 0 : index
    %c0_2 = arith.constant 0 : index
    %1 = vector.load %arg1[%c0_1, %c0_2] : memref<32x32xf32, #tpu.memory_space<vmem>>, vector<32x32xf32>
    %cst = arith.constant dense<0.000000e+00> : vector<8x32xf32>
    %2 = tpu.matmul %0, %1, %cst {dimension_numbers = #tpu.dot_dimension_numbers<[1], [0], [0], [1], [0, 0, 1, 1], [], []>} : vector<8x32xf32>, vector<32x32xf32>, vector<8x32xf32> -> vector<8x32xf32>
    %c0_3 = arith.constant 0 : index
    %c0_4 = arith.constant 0 : index
    %3 = vector.load %arg2[%c0_3, %c0_4] : memref<1x32xf32, #tpu.memory_space<vmem>>, vector<1x32xf32>
    %4 = vector.broadcast %3 : vector<1x32xf32> to vector<8x32xf32>
    %5 = arith.addf %2, %4 : vector<8x32xf32>
    %cst_5 = arith.constant 0.000000e+00 : f32
    %6 = vector.broadcast %cst_5 : f32 to vector<8x32xf32>
    %7 = arith.maximumf %5, %6 : vector<8x32xf32>
    %8 = math.absf %5 : vector<8x32xf32>
    %cst_6 = arith.constant 0.000000e+00 : f32
    %9 = vector.broadcast %cst_6 : f32 to vector<8x32xf32>
    %10 = arith.subf %9, %8 : vector<8x32xf32>
    %11 = math.exp %10 : vector<8x32xf32>
    %cst_7 = arith.constant 1.000000e+00 : f32
    %12 = vector.broadcast %cst_7 : f32 to vector<8x32xf32>
    %13 = arith.addf %12, %11 : vector<8x32xf32>
    %14 = math.log %13 : vector<8x32xf32>
    %15 = arith.addf %7, %14 : vector<8x32xf32>
    %c0_8 = arith.constant 0 : index
    %c0_9 = arith.constant 0 : index
    %16 = vector.load %arg3[%c0_8, %c0_9] : memref<32x32xf32, #tpu.memory_space<vmem>>, vector<32x32xf32>
    %cst_10 = arith.constant dense<0.000000e+00> : vector<8x32xf32>
    %17 = tpu.matmul %15, %16, %cst_10 {dimension_numbers = #tpu.dot_dimension_numbers<[1], [0], [0], [1], [0, 0, 1, 1], [], []>} : vector<8x32xf32>, vector<32x32xf32>, vector<8x32xf32> -> vector<8x32xf32>
    %c0_11 = arith.constant 0 : index
    %c0_12 = arith.constant 0 : index
    %18 = vector.load %arg4[%c0_11, %c0_12] : memref<1x32xf32, #tpu.memory_space<vmem>>, vector<1x32xf32>
    %19 = vector.broadcast %18 : vector<1x32xf32> to vector<8x32xf32>
    %20 = arith.addf %17, %19 : vector<8x32xf32>
    %cst_13 = arith.constant 0.000000e+00 : f32
    %21 = vector.broadcast %cst_13 : f32 to vector<8x32xf32>
    %22 = arith.maximumf %20, %21 : vector<8x32xf32>
    %23 = math.absf %20 : vector<8x32xf32>
    %cst_14 = arith.constant 0.000000e+00 : f32
    %24 = vector.broadcast %cst_14 : f32 to vector<8x32xf32>
    %25 = arith.subf %24, %23 : vector<8x32xf32>
    %26 = math.exp %25 : vector<8x32xf32>
    %cst_15 = arith.constant 1.000000e+00 : f32
    %27 = vector.broadcast %cst_15 : f32 to vector<8x32xf32>
    %28 = arith.addf %27, %26 : vector<8x32xf32>
    %29 = math.log %28 : vector<8x32xf32>
    %30 = arith.addf %22, %29 : vector<8x32xf32>
    %31 = arith.addf %30, %0 : vector<8x32xf32>
    %cst_16 = arith.constant dense<0.000000e+00> : vector<32xf32>
    %32 = vector.multi_reduction <add>, %31, %cst_16 [0] : vector<8x32xf32> to vector<32xf32>
    %33 = vector.shape_cast %32 : vector<32xf32> to vector<1x32xf32>
    %cst_17 = arith.constant 8.000000e+00 : f32
    %34 = vector.broadcast %cst_17 : f32 to vector<1x32xf32>
    %35 = arith.divf %33, %34 : vector<1x32xf32>
    %36 = vector.broadcast %35 : vector<1x32xf32> to vector<8x32xf32>
    %37 = arith.subf %31, %36 : vector<8x32xf32>
    %38 = arith.mulf %37, %37 : vector<8x32xf32>
    %cst_18 = arith.constant dense<0.000000e+00> : vector<32xf32>
    %39 = vector.multi_reduction <add>, %38, %cst_18 [0] : vector<8x32xf32> to vector<32xf32>
    %40 = vector.shape_cast %39 : vector<32xf32> to vector<1x32xf32>
    %cst_19 = arith.constant 8.000000e+00 : f32
    %41 = vector.broadcast %cst_19 : f32 to vector<1x32xf32>
    %42 = arith.divf %40, %41 : vector<1x32xf32>
    %cst_20 = arith.constant 9.99999974E-6 : f32
    %43 = vector.broadcast %cst_20 : f32 to vector<1x32xf32>
    %44 = arith.addf %42, %43 : vector<1x32xf32>
    %45 = math.rsqrt %44 : vector<1x32xf32>
    %46 = vector.broadcast %45 : vector<1x32xf32> to vector<8x32xf32>
    %47 = arith.mulf %37, %46 : vector<8x32xf32>
    %c0_21 = arith.constant 0 : index
    %c0_22 = arith.constant 0 : index
    %48 = vector.load %arg5[%c0_21, %c0_22] : memref<1x32xf32, #tpu.memory_space<vmem>>, vector<1x32xf32>
    %49 = vector.broadcast %48 : vector<1x32xf32> to vector<8x32xf32>
    %50 = arith.mulf %47, %49 : vector<8x32xf32>
    %c0_23 = arith.constant 0 : index
    %c0_24 = arith.constant 0 : index
    %51 = vector.load %arg6[%c0_23, %c0_24] : memref<1x32xf32, #tpu.memory_space<vmem>>, vector<1x32xf32>
    %52 = vector.broadcast %51 : vector<1x32xf32> to vector<8x32xf32>
    %53 = arith.addf %50, %52 : vector<8x32xf32>
    %cst_25 = arith.constant 0.000000e+00 : f32
    %54 = vector.broadcast %cst_25 : f32 to vector<8x32xf32>
    %55 = arith.maximumf %53, %54 : vector<8x32xf32>
    %c0_26 = arith.constant 0 : index
    %c0_27 = arith.constant 0 : index
    %56 = vector.load %arg7[%c0_26, %c0_27] : memref<8x32xf32, #tpu.memory_space<vmem>>, vector<8x32xf32>
    tpu.vector_store %arg7[%c0_26, %c0_27], %55 {strides = array<i32>} : memref<8x32xf32, #tpu.memory_space<vmem>>, vector<8x32xf32>,
    return
  }
}

module attributes {stable_mosaic.version = 11 : i64} {
  func.func @_encoder_kernel(%arg0: memref<8x32xf32, #tpu.memory_space<vmem>>, %arg1: memref<32x32xf32, #tpu.memory_space<vmem>>, %arg2: memref<1x32xf32, #tpu.memory_space<vmem>>, %arg3: memref<32x32xf32, #tpu.memory_space<vmem>>, %arg4: memref<1x32xf32, #tpu.memory_space<vmem>>, %arg5: memref<1x32xf32, #tpu.memory_space<vmem>>, %arg6: memref<1x32xf32, #tpu.memory_space<vmem>>, %arg7: memref<8x32xf32, #tpu.memory_space<vmem>>) attributes {dimension_semantics = [], scalar_prefetch = 0 : i64, scratch_operands = 0 : i64, tpu.core_type = #tpu.core_type<tc>} {
    %c0 = arith.constant 0 : index
    %c0_0 = arith.constant 0 : index
    %0 = vector.load %arg0[%c0, %c0_0] : memref<8x32xf32, #tpu.memory_space<vmem>>, vector<8x32xf32>
    %c0_1 = arith.constant 0 : index
    %c0_2 = arith.constant 0 : index
    %1 = vector.load %arg1[%c0_1, %c0_2] : memref<32x32xf32, #tpu.memory_space<vmem>>, vector<32x32xf32>
    %cst = arith.constant dense<0.000000e+00> : vector<8x32xf32>
    %2 = tpu.matmul %0, %1, %cst {dimension_numbers = #tpu.dot_dimension_numbers<[1], [0], [0], [1], [0, 0, 1, 1], [], []>} : vector<8x32xf32>, vector<32x32xf32>, vector<8x32xf32> -> vector<8x32xf32>
    %c0_3 = arith.constant 0 : index
    %c0_4 = arith.constant 0 : index
    %3 = vector.load %arg2[%c0_3, %c0_4] : memref<1x32xf32, #tpu.memory_space<vmem>>, vector<1x32xf32>
    %4 = vector.broadcast %3 : vector<1x32xf32> to vector<8x32xf32>
    %5 = arith.addf %2, %4 : vector<8x32xf32>
    %cst_5 = arith.constant 0.000000e+00 : f32
    %6 = vector.broadcast %cst_5 : f32 to vector<8x32xf32>
    %7 = arith.maximumf %5, %6 : vector<8x32xf32>
    %8 = math.absf %5 : vector<8x32xf32>
    %cst_6 = arith.constant 0.000000e+00 : f32
    %9 = vector.broadcast %cst_6 : f32 to vector<8x32xf32>
    %10 = arith.subf %9, %8 : vector<8x32xf32>
    %11 = math.exp %10 : vector<8x32xf32>
    %cst_7 = arith.constant 1.000000e+00 : f32
    %12 = vector.broadcast %cst_7 : f32 to vector<8x32xf32>
    %13 = arith.addf %12, %11 : vector<8x32xf32>
    %14 = math.log %13 : vector<8x32xf32>
    %15 = arith.addf %7, %14 : vector<8x32xf32>
    %c0_8 = arith.constant 0 : index
    %c0_9 = arith.constant 0 : index
    %16 = vector.load %arg3[%c0_8, %c0_9] : memref<32x32xf32, #tpu.memory_space<vmem>>, vector<32x32xf32>
    %cst_10 = arith.constant dense<0.000000e+00> : vector<8x32xf32>
    %17 = tpu.matmul %15, %16, %cst_10 {dimension_numbers = #tpu.dot_dimension_numbers<[1], [0], [0], [1], [0, 0, 1, 1], [], []>} : vector<8x32xf32>, vector<32x32xf32>, vector<8x32xf32> -> vector<8x32xf32>
    %c0_11 = arith.constant 0 : index
    %c0_12 = arith.constant 0 : index
    %18 = vector.load %arg4[%c0_11, %c0_12] : memref<1x32xf32, #tpu.memory_space<vmem>>, vector<1x32xf32>
    %19 = vector.broadcast %18 : vector<1x32xf32> to vector<8x32xf32>
    %20 = arith.addf %17, %19 : vector<8x32xf32>
    %cst_13 = arith.constant 0.000000e+00 : f32
    %21 = vector.broadcast %cst_13 : f32 to vector<8x32xf32>
    %22 = arith.maximumf %20, %21 : vector<8x32xf32>
    %23 = math.absf %20 : vector<8x32xf32>
    %cst_14 = arith.constant 0.000000e+00 : f32
    %24 = vector.broadcast %cst_14 : f32 to vector<8x32xf32>
    %25 = arith.subf %24, %23 : vector<8x32xf32>
    %26 = math.exp %25 : vector<8x32xf32>
    %cst_15 = arith.constant 1.000000e+00 : f32
    %27 = vector.broadcast %cst_15 : f32 to vector<8x32xf32>
    %28 = arith.addf %27, %26 : vector<8x32xf32>
    %29 = math.log %28 : vector<8x32xf32>
    %30 = arith.addf %22, %29 : vector<8x32xf32>
    %cst_16 = arith.constant dense<0.000000e+00> : vector<32xf32>
    %31 = vector.multi_reduction <add>, %30, %cst_16 [0] : vector<8x32xf32> to vector<32xf32>
    %32 = vector.shape_cast %31 : vector<32xf32> to vector<1x32xf32>
    %cst_17 = arith.constant 8.000000e+00 : f32
    %33 = vector.broadcast %cst_17 : f32 to vector<1x32xf32>
    %34 = arith.divf %32, %33 : vector<1x32xf32>
    %35 = vector.broadcast %34 : vector<1x32xf32> to vector<8x32xf32>
    %36 = arith.subf %30, %35 : vector<8x32xf32>
    %37 = arith.mulf %36, %36 : vector<8x32xf32>
    %cst_18 = arith.constant dense<0.000000e+00> : vector<32xf32>
    %38 = vector.multi_reduction <add>, %37, %cst_18 [0] : vector<8x32xf32> to vector<32xf32>
    %39 = vector.shape_cast %38 : vector<32xf32> to vector<1x32xf32>
    %cst_19 = arith.constant 8.000000e+00 : f32
    %40 = vector.broadcast %cst_19 : f32 to vector<1x32xf32>
    %41 = arith.divf %39, %40 : vector<1x32xf32>
    %cst_20 = arith.constant 9.99999974E-6 : f32
    %42 = vector.broadcast %cst_20 : f32 to vector<1x32xf32>
    %43 = arith.addf %41, %42 : vector<1x32xf32>
    %44 = math.rsqrt %43 : vector<1x32xf32>
    %45 = vector.broadcast %44 : vector<1x32xf32> to vector<8x32xf32>
    %46 = arith.mulf %36, %45 : vector<8x32xf32>
    %c0_21 = arith.constant 0 : index
    %c0_22 = arith.constant 0 : index
    %47 = vector.load %arg5[%c0_21, %c0_22] : memref<1x32xf32, #tpu.memory_space<vmem>>, vector<1x32xf32>
    %48 = vector.broadcast %47 : vector<1x32xf32> to vector<8x32xf32>
    %49 = arith.mulf %46, %48 : vector<8x32xf32>
    %c0_23 = arith.constant 0 : index
    %c0_24 = arith.constant 0 : index
    %50 = vector.load %arg6[%c0_23, %c0_24] : memref<1x32xf32, #tpu.memory_space<vmem>>, vector<1x32xf32>
    %51 = vector.broadcast %50 : vector<1x32xf32> to vector<8x32xf32>
    %52 = arith.addf %49, %51 : vector<8x32xf32>
    %cst_25 = arith.constant 0.000000e+00 : f32
    %53 = vector.broadcast %cst_25 : f32 to vector<8x32xf32>
    %54 = arith.maximumf %52, %53 : vector<8x32xf32>
    %c0_26 = arith.constant 0 : index
    %c0_27 = arith.constant 0 : index
    %55 = vector.load %arg7[%c0_26, %c0_27] : memref<8x32xf32, #tpu.memory_space<vmem>>, vector<8x32xf32>
    tpu.vector_store %arg7[%c0_26, %c0_27], %54 {strides = array<i32>} : memref<8x32xf32, #tpu.memory_space<vmem>>, vector<8x32xf32>,
    return
  }
}

module attributes {stable_mosaic.version = 11 : i64} {
  func.func @_shape_scale_kernel(%arg0: memref<8x32xf32, #tpu.memory_space<vmem>>, %arg1: memref<32x8xf32, #tpu.memory_space<vmem>>, %arg2: memref<1x8xf32, #tpu.memory_space<vmem>>, %arg3: memref<32x8xf32, #tpu.memory_space<vmem>>, %arg4: memref<1x8xf32, #tpu.memory_space<vmem>>, %arg5: memref<8x8xf32, #tpu.memory_space<vmem>>, %arg6: memref<8x8xf32, #tpu.memory_space<vmem>>) attributes {dimension_semantics = [], scalar_prefetch = 0 : i64, scratch_operands = 0 : i64, tpu.core_type = #tpu.core_type<tc>} {
    %c0 = arith.constant 0 : index
    %c0_0 = arith.constant 0 : index
    %0 = vector.load %arg0[%c0, %c0_0] : memref<8x32xf32, #tpu.memory_space<vmem>>, vector<8x32xf32>
    %c0_1 = arith.constant 0 : index
    %c0_2 = arith.constant 0 : index
    %1 = vector.load %arg1[%c0_1, %c0_2] : memref<32x8xf32, #tpu.memory_space<vmem>>, vector<32x8xf32>
    %cst = arith.constant dense<0.000000e+00> : vector<8x8xf32>
    %2 = tpu.matmul %0, %1, %cst {dimension_numbers = #tpu.dot_dimension_numbers<[1], [0], [0], [1], [0, 0, 1, 1], [], []>} : vector<8x32xf32>, vector<32x8xf32>, vector<8x8xf32> -> vector<8x8xf32>
    %c0_3 = arith.constant 0 : index
    %c0_4 = arith.constant 0 : index
    %3 = vector.load %arg2[%c0_3, %c0_4] : memref<1x8xf32, #tpu.memory_space<vmem>>, vector<1x8xf32>
    %4 = vector.broadcast %3 : vector<1x8xf32> to vector<8x8xf32>
    %5 = arith.addf %2, %4 : vector<8x8xf32>
    %c0_5 = arith.constant 0 : index
    %c0_6 = arith.constant 0 : index
    %6 = vector.load %arg3[%c0_5, %c0_6] : memref<32x8xf32, #tpu.memory_space<vmem>>, vector<32x8xf32>
    %cst_7 = arith.constant dense<0.000000e+00> : vector<8x8xf32>
    %7 = tpu.matmul %0, %6, %cst_7 {dimension_numbers = #tpu.dot_dimension_numbers<[1], [0], [0], [1], [0, 0, 1, 1], [], []>} : vector<8x32xf32>, vector<32x8xf32>, vector<8x8xf32> -> vector<8x8xf32>
    %c0_8 = arith.constant 0 : index
    %c0_9 = arith.constant 0 : index
    %8 = vector.load %arg4[%c0_8, %c0_9] : memref<1x8xf32, #tpu.memory_space<vmem>>, vector<1x8xf32>
    %9 = vector.broadcast %8 : vector<1x8xf32> to vector<8x8xf32>
    %10 = arith.addf %7, %9 : vector<8x8xf32>
    %cst_10 = arith.constant 0.000000e+00 : f32
    %11 = vector.broadcast %cst_10 : f32 to vector<8x8xf32>
    %12 = arith.maximumf %5, %11 : vector<8x8xf32>
    %13 = math.absf %5 : vector<8x8xf32>
    %cst_11 = arith.constant 0.000000e+00 : f32
    %14 = vector.broadcast %cst_11 : f32 to vector<8x8xf32>
    %15 = arith.subf %14, %13 : vector<8x8xf32>
    %16 = math.exp %15 : vector<8x8xf32>
    %cst_12 = arith.constant 1.000000e+00 : f32
    %17 = vector.broadcast %cst_12 : f32 to vector<8x8xf32>
    %18 = arith.addf %17, %16 : vector<8x8xf32>
    %19 = math.log %18 : vector<8x8xf32>
    %20 = arith.addf %12, %19 : vector<8x8xf32>
    %cst_13 = arith.constant 1.000000e-30 : f32
    %21 = vector.broadcast %cst_13 : f32 to vector<8x8xf32>
    %22 = arith.maximumf %20, %21 : vector<8x8xf32>
    %cst_14 = arith.constant 1.000000e+01 : f32
    %23 = vector.broadcast %cst_14 : f32 to vector<8x8xf32>
    %24 = arith.minimumf %22, %23 : vector<8x8xf32>
    %c0_15 = arith.constant 0 : index
    %c0_16 = arith.constant 0 : index
    %25 = vector.load %arg5[%c0_15, %c0_16] : memref<8x8xf32, #tpu.memory_space<vmem>>, vector<8x8xf32>
    tpu.vector_store %arg5[%c0_15, %c0_16], %24 {strides = array<i32>} : memref<8x8xf32, #tpu.memory_space<vmem>>, vector<8x8xf32>,
    %cst_17 = arith.constant 0.000000e+00 : f32
    %26 = vector.broadcast %cst_17 : f32 to vector<8x8xf32>
    %27 = arith.maximumf %10, %26 : vector<8x8xf32>
    %28 = math.absf %10 : vector<8x8xf32>
    %cst_18 = arith.constant 0.000000e+00 : f32
    %29 = vector.broadcast %cst_18 : f32 to vector<8x8xf32>
    %30 = arith.subf %29, %28 : vector<8x8xf32>
    %31 = math.exp %30 : vector<8x8xf32>
    %cst_19 = arith.constant 1.000000e+00 : f32
    %32 = vector.broadcast %cst_19 : f32 to vector<8x8xf32>
    %33 = arith.addf %32, %31 : vector<8x8xf32>
    %34 = math.log %33 : vector<8x8xf32>
    %35 = arith.addf %27, %34 : vector<8x8xf32>
    %cst_20 = arith.constant 1.000000e-30 : f32
    %36 = vector.broadcast %cst_20 : f32 to vector<8x8xf32>
    %37 = arith.maximumf %35, %36 : vector<8x8xf32>
    %c0_21 = arith.constant 0 : index
    %c0_22 = arith.constant 0 : index
    %38 = vector.load %arg6[%c0_21, %c0_22] : memref<8x8xf32, #tpu.memory_space<vmem>>, vector<8x8xf32>
    tpu.vector_store %arg6[%c0_21, %c0_22], %37 {strides = array<i32>} : memref<8x8xf32, #tpu.memory_space<vmem>>, vector<8x8xf32>,
    return
  }
}

module attributes {stable_mosaic.version = 11 : i64} {
  func.func @_reparam_decode_kernel(%arg0: memref<8x8xf32, #tpu.memory_space<vmem>>, %arg1: memref<8x8xf32, #tpu.memory_space<vmem>>, %arg2: memref<50x8x8xf32, #tpu.memory_space<vmem>>, %arg3: memref<8x16xf32, #tpu.memory_space<vmem>>, %arg4: memref<8x8xf32, #tpu.memory_space<vmem>>, %arg5: memref<8x16xf32, #tpu.memory_space<vmem>>) attributes {dimension_semantics = [], scalar_prefetch = 0 : i64, scratch_operands = 0 : i64, tpu.core_type = #tpu.core_type<tc>} {
    %c0 = arith.constant 0 : index
    %c0_0 = arith.constant 0 : index
    %0 = vector.load %arg0[%c0, %c0_0] : memref<8x8xf32, #tpu.memory_space<vmem>>, vector<8x8xf32>
    %c0_1 = arith.constant 0 : index
    %c0_2 = arith.constant 0 : index
    %1 = vector.load %arg1[%c0_1, %c0_2] : memref<8x8xf32, #tpu.memory_space<vmem>>, vector<8x8xf32>
    %c0_3 = arith.constant 0 : index
    %c0_4 = arith.constant 0 : index
    %c0_5 = arith.constant 0 : index
    %2 = vector.load %arg2[%c0_3, %c0_4, %c0_5] : memref<50x8x8xf32, #tpu.memory_space<vmem>>, vector<50x8x8xf32>
    %cst = arith.constant 1.000000e+00 : f32
    %3 = vector.broadcast %cst : f32 to vector<50x8x8xf32>
    %4 = arith.subf %3, %2 : vector<50x8x8xf32>
    %cst_6 = arith.constant 1.000000e-30 : f32
    %5 = vector.broadcast %cst_6 : f32 to vector<50x8x8xf32>
    %6 = arith.maximumf %4, %5 : vector<50x8x8xf32>
    %7 = math.log %6 : vector<50x8x8xf32>
    %cst_7 = arith.constant 0.000000e+00 : f32
    %8 = vector.broadcast %cst_7 : f32 to vector<50x8x8xf32>
    %9 = arith.subf %8, %7 : vector<50x8x8xf32>
    %cst_8 = arith.constant 0.000000e+00 : f32
    %10 = vector.broadcast %cst_8 : f32 to vector<50x8x8xf32>
    %11 = arith.cmpf ogt, %9, %10 : vector<50x8x8xf32>
    %cst_9 = arith.constant 1.000000e+00 : f32
    %12 = vector.broadcast %cst_9 : f32 to vector<50x8x8xf32>
    %13 = arith.select %11, %9, %12 : vector<50x8x8xi1>, vector<50x8x8xf32>
    %cst_10 = arith.constant 0.000000e+00 : f32
    %14 = vector.broadcast %cst_10 : f32 to vector<50x8x8xf32>
    %15 = arith.cmpf ogt, %9, %14 : vector<50x8x8xf32>
    %16 = math.log %13 : vector<50x8x8xf32>
    %17 = vector.shape_cast %0 : vector<8x8xf32> to vector<1x8x8xf32>
    %18 = vector.broadcast %17 : vector<1x8x8xf32> to vector<50x8x8xf32>
    %19 = arith.mulf %18, %16 : vector<50x8x8xf32>
    %20 = math.exp %19 : vector<50x8x8xf32>
    %cst_11 = arith.constant 0.000000e+00 : f32
    %21 = vector.broadcast %cst_11 : f32 to vector<50x8x8xf32>
    %22 = arith.select %15, %20, %21 : vector<50x8x8xi1>, vector<50x8x8xf32>
    %cst_12 = arith.constant dense<0.000000e+00> : vector<8x8xf32>
    %23 = vector.multi_reduction <add>, %22, %cst_12 [0] : vector<50x8x8xf32> to vector<8x8xf32>
    %cst_13 = arith.constant 5.000000e+01 : f32
    %24 = vector.broadcast %cst_13 : f32 to vector<8x8xf32>
    %25 = arith.divf %23, %24 : vector<8x8xf32>
    %26 = arith.mulf %1, %25 : vector<8x8xf32>
    %c0_14 = arith.constant 0 : index
    %c0_15 = arith.constant 0 : index
    %27 = vector.load %arg4[%c0_14, %c0_15] : memref<8x8xf32, #tpu.memory_space<vmem>>, vector<8x8xf32>
    tpu.vector_store %arg4[%c0_14, %c0_15], %26 {strides = array<i32>} : memref<8x8xf32, #tpu.memory_space<vmem>>, vector<8x8xf32>,
    %c0_16 = arith.constant 0 : index
    %c0_17 = arith.constant 0 : index
    %28 = vector.load %arg3[%c0_16, %c0_17] : memref<8x16xf32, #tpu.memory_space<vmem>>, vector<8x16xf32>
    %cst_18 = arith.constant dense<0.000000e+00> : vector<8x16xf32>
    %29 = tpu.matmul %26, %28, %cst_18 {dimension_numbers = #tpu.dot_dimension_numbers<[1], [0], [0], [1], [0, 0, 1, 1], [], []>} : vector<8x8xf32>, vector<8x16xf32>, vector<8x16xf32> -> vector<8x16xf32>
    %c0_19 = arith.constant 0 : index
    %c0_20 = arith.constant 0 : index
    %30 = vector.load %arg5[%c0_19, %c0_20] : memref<8x16xf32, #tpu.memory_space<vmem>>, vector<8x16xf32>
    tpu.vector_store %arg5[%c0_19, %c0_20], %29 {strides = array<i32>} : memref<8x16xf32, #tpu.memory_space<vmem>>, vector<8x16xf32>,
    return
  }
}

module attributes {stable_mosaic.version = 11 : i64} {
  func.func @_phi_t_kernel(%arg0: memref<8x16xf32, #tpu.memory_space<vmem>>, %arg1: memref<16x16xf32, #tpu.memory_space<vmem>>, %arg2: memref<8x16xf32, #tpu.memory_space<vmem>>) attributes {dimension_semantics = [], scalar_prefetch = 0 : i64, scratch_operands = 0 : i64, tpu.core_type = #tpu.core_type<tc>} {
    %c0 = arith.constant 0 : index
    %c0_0 = arith.constant 0 : index
    %0 = vector.load %arg0[%c0, %c0_0] : memref<8x16xf32, #tpu.memory_space<vmem>>, vector<8x16xf32>
    %c0_1 = arith.constant 0 : index
    %c0_2 = arith.constant 0 : index
    %1 = vector.load %arg1[%c0_1, %c0_2] : memref<16x16xf32, #tpu.memory_space<vmem>>, vector<16x16xf32>
    %cst = arith.constant dense<0.000000e+00> : vector<8x16xf32>
    %2 = tpu.matmul %0, %1, %cst {dimension_numbers = #tpu.dot_dimension_numbers<[1], [1], [0], [0], [0, 0, 1, 0], [], []>} : vector<8x16xf32>, vector<16x16xf32>, vector<8x16xf32> -> vector<8x16xf32>
    %cst_3 = arith.constant dense<0xFF800000> : vector<8xf32>
    %3 = vector.multi_reduction <maximumf>, %2, %cst_3 [1] : vector<8x16xf32> to vector<8xf32>
    %4 = vector.shape_cast %3 : vector<8xf32> to vector<8x1xf32>
    %5 = vector.broadcast %4 : vector<8x1xf32> to vector<8x16xf32>
    %6 = arith.subf %2, %5 : vector<8x16xf32>
    %7 = math.exp %6 : vector<8x16xf32>
    %cst_4 = arith.constant dense<0.000000e+00> : vector<8xf32>
    %8 = vector.multi_reduction <add>, %7, %cst_4 [1] : vector<8x16xf32> to vector<8xf32>
    %9 = vector.shape_cast %8 : vector<8xf32> to vector<8x1xf32>
    %10 = vector.broadcast %9 : vector<8x1xf32> to vector<8x16xf32>
    %11 = arith.divf %7, %10 : vector<8x16xf32>
    %c0_5 = arith.constant 0 : index
    %c0_6 = arith.constant 0 : index
    %12 = vector.load %arg2[%c0_5, %c0_6] : memref<8x16xf32, #tpu.memory_space<vmem>>, vector<8x16xf32>
    tpu.vector_store %arg2[%c0_5, %c0_6], %11 {strides = array<i32>} : memref<8x16xf32, #tpu.memory_space<vmem>>, vector<8x16xf32>,
    return
  }
}

module attributes {stable_mosaic.version = 11 : i64} {
  func.func @_phi_t_kernel(%arg0: memref<16x16xf32, #tpu.memory_space<vmem>>, %arg1: memref<32x16xf32, #tpu.memory_space<vmem>>, %arg2: memref<16x32xf32, #tpu.memory_space<vmem>>) attributes {dimension_semantics = [], scalar_prefetch = 0 : i64, scratch_operands = 0 : i64, tpu.core_type = #tpu.core_type<tc>} {
    %c0 = arith.constant 0 : index
    %c0_0 = arith.constant 0 : index
    %0 = vector.load %arg0[%c0, %c0_0] : memref<16x16xf32, #tpu.memory_space<vmem>>, vector<16x16xf32>
    %c0_1 = arith.constant 0 : index
    %c0_2 = arith.constant 0 : index
    %1 = vector.load %arg1[%c0_1, %c0_2] : memref<32x16xf32, #tpu.memory_space<vmem>>, vector<32x16xf32>
    %cst = arith.constant dense<0.000000e+00> : vector<16x32xf32>
    %2 = tpu.matmul %0, %1, %cst {dimension_numbers = #tpu.dot_dimension_numbers<[1], [1], [0], [0], [0, 0, 1, 0], [], []>} : vector<16x16xf32>, vector<32x16xf32>, vector<16x32xf32> -> vector<16x32xf32>
    %cst_3 = arith.constant dense<0xFF800000> : vector<16xf32>
    %3 = vector.multi_reduction <maximumf>, %2, %cst_3 [1] : vector<16x32xf32> to vector<16xf32>
    %4 = vector.shape_cast %3 : vector<16xf32> to vector<16x1xf32>
    %5 = vector.broadcast %4 : vector<16x1xf32> to vector<16x32xf32>
    %6 = arith.subf %2, %5 : vector<16x32xf32>
    %7 = math.exp %6 : vector<16x32xf32>
    %cst_4 = arith.constant dense<0.000000e+00> : vector<16xf32>
    %8 = vector.multi_reduction <add>, %7, %cst_4 [1] : vector<16x32xf32> to vector<16xf32>
    %9 = vector.shape_cast %8 : vector<16xf32> to vector<16x1xf32>
    %10 = vector.broadcast %9 : vector<16x1xf32> to vector<16x32xf32>
    %11 = arith.divf %7, %10 : vector<16x32xf32>
    %c0_5 = arith.constant 0 : index
    %c0_6 = arith.constant 0 : index
    %12 = vector.load %arg2[%c0_5, %c0_6] : memref<16x32xf32, #tpu.memory_space<vmem>>, vector<16x32xf32>
    tpu.vector_store %arg2[%c0_5, %c0_6], %11 {strides = array<i32>} : memref<16x32xf32, #tpu.memory_space<vmem>>, vector<16x32xf32>,
    return
  }
}

module attributes {stable_mosaic.version = 11 : i64} {
  func.func @_matmul_kernel(%arg0: memref<8x16xf32, #tpu.memory_space<vmem>>, %arg1: memref<16x32xf32, #tpu.memory_space<vmem>>, %arg2: memref<8x32xf32, #tpu.memory_space<vmem>>) attributes {dimension_semantics = [], scalar_prefetch = 0 : i64, scratch_operands = 0 : i64, tpu.core_type = #tpu.core_type<tc>} {
    %c0 = arith.constant 0 : index
    %c0_0 = arith.constant 0 : index
    %0 = vector.load %arg0[%c0, %c0_0] : memref<8x16xf32, #tpu.memory_space<vmem>>, vector<8x16xf32>
    %c0_1 = arith.constant 0 : index
    %c0_2 = arith.constant 0 : index
    %1 = vector.load %arg1[%c0_1, %c0_2] : memref<16x32xf32, #tpu.memory_space<vmem>>, vector<16x32xf32>
    %cst = arith.constant dense<0.000000e+00> : vector<8x32xf32>
    %2 = tpu.matmul %0, %1, %cst {dimension_numbers = #tpu.dot_dimension_numbers<[1], [0], [0], [1], [0, 0, 1, 1], [], []>} : vector<8x16xf32>, vector<16x32xf32>, vector<8x32xf32> -> vector<8x32xf32>
    %c0_3 = arith.constant 0 : index
    %c0_4 = arith.constant 0 : index
    %3 = vector.load %arg2[%c0_3, %c0_4] : memref<8x32xf32, #tpu.memory_space<vmem>>, vector<8x32xf32>
    tpu.vector_store %arg2[%c0_3, %c0_4], %2 {strides = array<i32>} : memref<8x32xf32, #tpu.memory_space<vmem>>, vector<8x32xf32>,
    return
  }
}

module attributes {stable_mosaic.version = 11 : i64} {
  func.func @_shape_scale_kernel(%arg0: memref<8x48xf32, #tpu.memory_space<vmem>>, %arg1: memref<48x16xf32, #tpu.memory_space<vmem>>, %arg2: memref<1x16xf32, #tpu.memory_space<vmem>>, %arg3: memref<48x16xf32, #tpu.memory_space<vmem>>, %arg4: memref<1x16xf32, #tpu.memory_space<vmem>>, %arg5: memref<8x16xf32, #tpu.memory_space<vmem>>, %arg6: memref<8x16xf32, #tpu.memory_space<vmem>>) attributes {dimension_semantics = [], scalar_prefetch = 0 : i64, scratch_operands = 0 : i64, tpu.core_type = #tpu.core_type<tc>} {
    %c0 = arith.constant 0 : index
    %c0_0 = arith.constant 0 : index
    %0 = vector.load %arg0[%c0, %c0_0] : memref<8x48xf32, #tpu.memory_space<vmem>>, vector<8x48xf32>
    %c0_1 = arith.constant 0 : index
    %c0_2 = arith.constant 0 : index
    %1 = vector.load %arg1[%c0_1, %c0_2] : memref<48x16xf32, #tpu.memory_space<vmem>>, vector<48x16xf32>
    %cst = arith.constant dense<0.000000e+00> : vector<8x16xf32>
    %2 = tpu.matmul %0, %1, %cst {dimension_numbers = #tpu.dot_dimension_numbers<[1], [0], [0], [1], [0, 0, 1, 1], [], []>} : vector<8x48xf32>, vector<48x16xf32>, vector<8x16xf32> -> vector<8x16xf32>
    %c0_3 = arith.constant 0 : index
    %c0_4 = arith.constant 0 : index
    %3 = vector.load %arg2[%c0_3, %c0_4] : memref<1x16xf32, #tpu.memory_space<vmem>>, vector<1x16xf32>
    %4 = vector.broadcast %3 : vector<1x16xf32> to vector<8x16xf32>
    %5 = arith.addf %2, %4 : vector<8x16xf32>
    %c0_5 = arith.constant 0 : index
    %c0_6 = arith.constant 0 : index
    %6 = vector.load %arg3[%c0_5, %c0_6] : memref<48x16xf32, #tpu.memory_space<vmem>>, vector<48x16xf32>
    %cst_7 = arith.constant dense<0.000000e+00> : vector<8x16xf32>
    %7 = tpu.matmul %0, %6, %cst_7 {dimension_numbers = #tpu.dot_dimension_numbers<[1], [0], [0], [1], [0, 0, 1, 1], [], []>} : vector<8x48xf32>, vector<48x16xf32>, vector<8x16xf32> -> vector<8x16xf32>
    %c0_8 = arith.constant 0 : index
    %c0_9 = arith.constant 0 : index
    %8 = vector.load %arg4[%c0_8, %c0_9] : memref<1x16xf32, #tpu.memory_space<vmem>>, vector<1x16xf32>
    %9 = vector.broadcast %8 : vector<1x16xf32> to vector<8x16xf32>
    %10 = arith.addf %7, %9 : vector<8x16xf32>
    %cst_10 = arith.constant 0.000000e+00 : f32
    %11 = vector.broadcast %cst_10 : f32 to vector<8x16xf32>
    %12 = arith.maximumf %5, %11 : vector<8x16xf32>
    %13 = math.absf %5 : vector<8x16xf32>
    %cst_11 = arith.constant 0.000000e+00 : f32
    %14 = vector.broadcast %cst_11 : f32 to vector<8x16xf32>
    %15 = arith.subf %14, %13 : vector<8x16xf32>
    %16 = math.exp %15 : vector<8x16xf32>
    %cst_12 = arith.constant 1.000000e+00 : f32
    %17 = vector.broadcast %cst_12 : f32 to vector<8x16xf32>
    %18 = arith.addf %17, %16 : vector<8x16xf32>
    %19 = math.log %18 : vector<8x16xf32>
    %20 = arith.addf %12, %19 : vector<8x16xf32>
    %cst_13 = arith.constant 1.000000e-30 : f32
    %21 = vector.broadcast %cst_13 : f32 to vector<8x16xf32>
    %22 = arith.maximumf %20, %21 : vector<8x16xf32>
    %cst_14 = arith.constant 1.000000e+01 : f32
    %23 = vector.broadcast %cst_14 : f32 to vector<8x16xf32>
    %24 = arith.minimumf %22, %23 : vector<8x16xf32>
    %c0_15 = arith.constant 0 : index
    %c0_16 = arith.constant 0 : index
    %25 = vector.load %arg5[%c0_15, %c0_16] : memref<8x16xf32, #tpu.memory_space<vmem>>, vector<8x16xf32>
    tpu.vector_store %arg5[%c0_15, %c0_16], %24 {strides = array<i32>} : memref<8x16xf32, #tpu.memory_space<vmem>>, vector<8x16xf32>,
    %cst_17 = arith.constant 0.000000e+00 : f32
    %26 = vector.broadcast %cst_17 : f32 to vector<8x16xf32>
    %27 = arith.maximumf %10, %26 : vector<8x16xf32>
    %28 = math.absf %10 : vector<8x16xf32>
    %cst_18 = arith.constant 0.000000e+00 : f32
    %29 = vector.broadcast %cst_18 : f32 to vector<8x16xf32>
    %30 = arith.subf %29, %28 : vector<8x16xf32>
    %31 = math.exp %30 : vector<8x16xf32>
    %cst_19 = arith.constant 1.000000e+00 : f32
    %32 = vector.broadcast %cst_19 : f32 to vector<8x16xf32>
    %33 = arith.addf %32, %31 : vector<8x16xf32>
    %34 = math.log %33 : vector<8x16xf32>
    %35 = arith.addf %27, %34 : vector<8x16xf32>
    %cst_20 = arith.constant 1.000000e-30 : f32
    %36 = vector.broadcast %cst_20 : f32 to vector<8x16xf32>
    %37 = arith.maximumf %35, %36 : vector<8x16xf32>
    %c0_21 = arith.constant 0 : index
    %c0_22 = arith.constant 0 : index
    %38 = vector.load %arg6[%c0_21, %c0_22] : memref<8x16xf32, #tpu.memory_space<vmem>>, vector<8x16xf32>
    tpu.vector_store %arg6[%c0_21, %c0_22], %37 {strides = array<i32>} : memref<8x16xf32, #tpu.memory_space<vmem>>, vector<8x16xf32>,
    return
  }
}

module attributes {stable_mosaic.version = 11 : i64} {
  func.func @_reparam_decode_kernel(%arg0: memref<8x16xf32, #tpu.memory_space<vmem>>, %arg1: memref<8x16xf32, #tpu.memory_space<vmem>>, %arg2: memref<50x8x16xf32, #tpu.memory_space<vmem>>, %arg3: memref<16x32xf32, #tpu.memory_space<vmem>>, %arg4: memref<8x16xf32, #tpu.memory_space<vmem>>, %arg5: memref<8x32xf32, #tpu.memory_space<vmem>>) attributes {dimension_semantics = [], scalar_prefetch = 0 : i64, scratch_operands = 0 : i64, tpu.core_type = #tpu.core_type<tc>} {
    %c0 = arith.constant 0 : index
    %c0_0 = arith.constant 0 : index
    %0 = vector.load %arg0[%c0, %c0_0] : memref<8x16xf32, #tpu.memory_space<vmem>>, vector<8x16xf32>
    %c0_1 = arith.constant 0 : index
    %c0_2 = arith.constant 0 : index
    %1 = vector.load %arg1[%c0_1, %c0_2] : memref<8x16xf32, #tpu.memory_space<vmem>>, vector<8x16xf32>
    %c0_3 = arith.constant 0 : index
    %c0_4 = arith.constant 0 : index
    %c0_5 = arith.constant 0 : index
    %2 = vector.load %arg2[%c0_3, %c0_4, %c0_5] : memref<50x8x16xf32, #tpu.memory_space<vmem>>, vector<50x8x16xf32>
    %cst = arith.constant 1.000000e+00 : f32
    %3 = vector.broadcast %cst : f32 to vector<50x8x16xf32>
    %4 = arith.subf %3, %2 : vector<50x8x16xf32>
    %cst_6 = arith.constant 1.000000e-30 : f32
    %5 = vector.broadcast %cst_6 : f32 to vector<50x8x16xf32>
    %6 = arith.maximumf %4, %5 : vector<50x8x16xf32>
    %7 = math.log %6 : vector<50x8x16xf32>
    %cst_7 = arith.constant 0.000000e+00 : f32
    %8 = vector.broadcast %cst_7 : f32 to vector<50x8x16xf32>
    %9 = arith.subf %8, %7 : vector<50x8x16xf32>
    %cst_8 = arith.constant 0.000000e+00 : f32
    %10 = vector.broadcast %cst_8 : f32 to vector<50x8x16xf32>
    %11 = arith.cmpf ogt, %9, %10 : vector<50x8x16xf32>
    %cst_9 = arith.constant 1.000000e+00 : f32
    %12 = vector.broadcast %cst_9 : f32 to vector<50x8x16xf32>
    %13 = arith.select %11, %9, %12 : vector<50x8x16xi1>, vector<50x8x16xf32>
    %cst_10 = arith.constant 0.000000e+00 : f32
    %14 = vector.broadcast %cst_10 : f32 to vector<50x8x16xf32>
    %15 = arith.cmpf ogt, %9, %14 : vector<50x8x16xf32>
    %16 = math.log %13 : vector<50x8x16xf32>
    %17 = vector.shape_cast %0 : vector<8x16xf32> to vector<1x8x16xf32>
    %18 = vector.broadcast %17 : vector<1x8x16xf32> to vector<50x8x16xf32>
    %19 = arith.mulf %18, %16 : vector<50x8x16xf32>
    %20 = math.exp %19 : vector<50x8x16xf32>
    %cst_11 = arith.constant 0.000000e+00 : f32
    %21 = vector.broadcast %cst_11 : f32 to vector<50x8x16xf32>
    %22 = arith.select %15, %20, %21 : vector<50x8x16xi1>, vector<50x8x16xf32>
    %cst_12 = arith.constant dense<0.000000e+00> : vector<8x16xf32>
    %23 = vector.multi_reduction <add>, %22, %cst_12 [0] : vector<50x8x16xf32> to vector<8x16xf32>
    %cst_13 = arith.constant 5.000000e+01 : f32
    %24 = vector.broadcast %cst_13 : f32 to vector<8x16xf32>
    %25 = arith.divf %23, %24 : vector<8x16xf32>
    %26 = arith.mulf %1, %25 : vector<8x16xf32>
    %c0_14 = arith.constant 0 : index
    %c0_15 = arith.constant 0 : index
    %27 = vector.load %arg4[%c0_14, %c0_15] : memref<8x16xf32, #tpu.memory_space<vmem>>, vector<8x16xf32>
    tpu.vector_store %arg4[%c0_14, %c0_15], %26 {strides = array<i32>} : memref<8x16xf32, #tpu.memory_space<vmem>>, vector<8x16xf32>,
    %c0_16 = arith.constant 0 : index
    %c0_17 = arith.constant 0 : index
    %28 = vector.load %arg3[%c0_16, %c0_17] : memref<16x32xf32, #tpu.memory_space<vmem>>, vector<16x32xf32>
    %cst_18 = arith.constant dense<0.000000e+00> : vector<8x32xf32>
    %29 = tpu.matmul %26, %28, %cst_18 {dimension_numbers = #tpu.dot_dimension_numbers<[1], [0], [0], [1], [0, 0, 1, 1], [], []>} : vector<8x16xf32>, vector<16x32xf32>, vector<8x32xf32> -> vector<8x32xf32>
    %c0_19 = arith.constant 0 : index
    %c0_20 = arith.constant 0 : index
    %30 = vector.load %arg5[%c0_19, %c0_20] : memref<8x32xf32, #tpu.memory_space<vmem>>, vector<8x32xf32>
    tpu.vector_store %arg5[%c0_19, %c0_20], %29 {strides = array<i32>} : memref<8x32xf32, #tpu.memory_space<vmem>>, vector<8x32xf32>,
    return
  }
}

module attributes {stable_mosaic.version = 11 : i64} {
  func.func @_poisson_losses_kernel(%arg0: memref<8x32xf32, #tpu.memory_space<vmem>>, %arg1: memref<8x32xf32, #tpu.memory_space<vmem>>, %arg2: memref<3x8x32xf32, #tpu.memory_space<vmem>>, %arg3: memref<3xf32, #tpu.memory_space<smem>>) attributes {dimension_semantics = [], scalar_prefetch = 0 : i64, scratch_operands = 0 : i64, tpu.core_type = #tpu.core_type<tc>} {
    %c0 = arith.constant 0 : index
    %c0_0 = arith.constant 0 : index
    %0 = vector.load %arg0[%c0, %c0_0] : memref<8x32xf32, #tpu.memory_space<vmem>>, vector<8x32xf32>
    %c0_1 = arith.constant 0 : index
    %c0_2 = arith.constant 0 : index
    %1 = vector.load %arg1[%c0_1, %c0_2] : memref<8x32xf32, #tpu.memory_space<vmem>>, vector<8x32xf32>
    %c0_3 = arith.constant 0 : index
    %c0_4 = arith.constant 0 : index
    %c0_5 = arith.constant 0 : index
    %2 = vector.load %arg2[%c0_3, %c0_4, %c0_5] : memref<3x8x32xf32, #tpu.memory_space<vmem>>, vector<1x8x32xf32>
    %3 = vector.shape_cast %2 : vector<1x8x32xf32> to vector<8x32xf32>
    %cst = arith.constant 1.000000e-30 : f32
    %4 = vector.broadcast %cst : f32 to vector<8x32xf32>
    %5 = arith.maximumf %3, %4 : vector<8x32xf32>
    %6 = math.log %5 : vector<8x32xf32>
    %7 = arith.mulf %0, %6 : vector<8x32xf32>
    %8 = arith.subf %7, %3 : vector<8x32xf32>
    %9 = arith.subf %8, %1 : vector<8x32xf32>
    %10 = vector.shape_cast %9 : vector<8x32xf32> to vector<1x8x32xf32>
    %cst_6 = arith.constant dense<0.000000e+00> : vector<1xf32>
    %11 = vector.multi_reduction <add>, %10, %cst_6 [1, 2] : vector<1x8x32xf32> to vector<1xf32>
    %12 = vector.shape_cast %11 : vector<1xf32> to vector<1x1x1xf32>
    %13 = vector.extract %12[0, 0, 0] : f32 from vector<1x1x1xf32>
    %cst_7 = arith.constant -1.250000e-01 : f32
    %14 = arith.mulf %13, %cst_7 : f32
    %c0_8 = arith.constant 0 : index
    %15 = memref.load %arg3[%c0_8] : memref<3xf32, #tpu.memory_space<smem>>
    memref.store %14, %arg3[%c0_8] : memref<3xf32, #tpu.memory_space<smem>>
    %c1 = arith.constant 1 : index
    %c0_9 = arith.constant 0 : index
    %c0_10 = arith.constant 0 : index
    %16 = vector.load %arg2[%c1, %c0_9, %c0_10] : memref<3x8x32xf32, #tpu.memory_space<vmem>>, vector<1x8x32xf32>
    %17 = vector.shape_cast %16 : vector<1x8x32xf32> to vector<8x32xf32>
    %cst_11 = arith.constant 1.000000e-30 : f32
    %18 = vector.broadcast %cst_11 : f32 to vector<8x32xf32>
    %19 = arith.maximumf %17, %18 : vector<8x32xf32>
    %20 = math.log %19 : vector<8x32xf32>
    %21 = arith.mulf %0, %20 : vector<8x32xf32>
    %22 = arith.subf %21, %17 : vector<8x32xf32>
    %23 = arith.subf %22, %1 : vector<8x32xf32>
    %24 = vector.shape_cast %23 : vector<8x32xf32> to vector<1x8x32xf32>
    %cst_12 = arith.constant dense<0.000000e+00> : vector<1xf32>
    %25 = vector.multi_reduction <add>, %24, %cst_12 [1, 2] : vector<1x8x32xf32> to vector<1xf32>
    %26 = vector.shape_cast %25 : vector<1xf32> to vector<1x1x1xf32>
    %27 = vector.extract %26[0, 0, 0] : f32 from vector<1x1x1xf32>
    %cst_13 = arith.constant -1.250000e-01 : f32
    %28 = arith.mulf %27, %cst_13 : f32
    %c1_14 = arith.constant 1 : index
    %29 = memref.load %arg3[%c1_14] : memref<3xf32, #tpu.memory_space<smem>>
    memref.store %28, %arg3[%c1_14] : memref<3xf32, #tpu.memory_space<smem>>
    %c2 = arith.constant 2 : index
    %c0_15 = arith.constant 0 : index
    %c0_16 = arith.constant 0 : index
    %30 = vector.load %arg2[%c2, %c0_15, %c0_16] : memref<3x8x32xf32, #tpu.memory_space<vmem>>, vector<1x8x32xf32>
    %31 = vector.shape_cast %30 : vector<1x8x32xf32> to vector<8x32xf32>
    %cst_17 = arith.constant 1.000000e-30 : f32
    %32 = vector.broadcast %cst_17 : f32 to vector<8x32xf32>
    %33 = arith.maximumf %31, %32 : vector<8x32xf32>
    %34 = math.log %33 : vector<8x32xf32>
    %35 = arith.mulf %0, %34 : vector<8x32xf32>
    %36 = arith.subf %35, %31 : vector<8x32xf32>
    %37 = arith.subf %36, %1 : vector<8x32xf32>
    %38 = vector.shape_cast %37 : vector<8x32xf32> to vector<1x8x32xf32>
    %cst_18 = arith.constant dense<0.000000e+00> : vector<1xf32>
    %39 = vector.multi_reduction <add>, %38, %cst_18 [1, 2] : vector<1x8x32xf32> to vector<1xf32>
    %40 = vector.shape_cast %39 : vector<1xf32> to vector<1x1x1xf32>
    %41 = vector.extract %40[0, 0, 0] : f32 from vector<1x1x1xf32>
    %cst_19 = arith.constant -1.250000e-01 : f32
    %42 = arith.mulf %41, %cst_19 : f32
    %c2_20 = arith.constant 2 : index
    %43 = memref.load %arg3[%c2_20] : memref<3xf32, #tpu.memory_space<smem>>
    memref.store %42, %arg3[%c2_20] : memref<3xf32, #tpu.memory_space<smem>>
    return
  }
}

</mosaic_0001>

<llo_original>
// kernel: dcetm_forward.10
$region0: #{dcetm_forward.10}
  #allocation0 [shape = 'u32[]', space=smem, size = 0x4, offset = 0x4, fixed_abs, tag = 'smem constant byte address 0x4 - core index']
  #allocation1 [shape = 'u32[144,128]{1,0:T(1,128)}', space=vmem, size = 0x12000, scoped, tag = 'internal scratch']
  %s0 = inlined_call_operand.vmem [shape: f32[8,32], index: 0, kind: input, shape index: {}]
  %s1 = inlined_call_operand.vmem [shape: f32[32,32], index: 1, kind: input, shape index: {}]
  %s2 = inlined_call_operand.vmem [shape: f32[1,32], index: 2, kind: input, shape index: {}]
  %s3 = inlined_call_operand.vmem [shape: f32[32,32], index: 3, kind: input, shape index: {}]
  %s4 = inlined_call_operand.vmem [shape: f32[1,32], index: 4, kind: input, shape index: {}]
  %s5 = inlined_call_operand.vmem [shape: f32[1,32], index: 5, kind: input, shape index: {}]
  %s6 = inlined_call_operand.vmem [shape: f32[1,32], index: 6, kind: input, shape index: {}]
  %s7 = inlined_call_operand.vmem [shape: f32[8,32], index: 7, kind: output, shape index: {}]
  %s8 = sld [smem:[#allocation0]]
  $region38: #{dcetm_forward.10} parent=0
    _
  %s10 = ssub.s32 1, %s8
  %s11 = scalar_select 0, %s10, %s8
  // Predicated region
  $region2: #{dcetm_forward.10} parent=0 // pred_check
    _
  $region3: #{dcetm_forward.10} parent=0 // pred_check_branch
    %13 = sbr.rel (0) target = $region5
  $region4: #{dcetm_forward.10} parent=0 // pred_region
    _
  $region5: #{dcetm_forward.10} parent=0 // pred_fallthru
    _
  // Predicated region
  $region6: #{dcetm_forward.10} parent=0 // pred_check
    _
  $region7: #{dcetm_forward.10} parent=0 // pred_check_branch
    %15 = sbr.rel (0) target = $region9
  $region8: #{dcetm_forward.10} parent=0 // pred_region
    _
  $region9: #{dcetm_forward.10} parent=0 // pred_fallthru
    _
  // Predicated region
  $region10: #{dcetm_forward.10} parent=0 // pred_check
    _
  $region11: #{dcetm_forward.10} parent=0 // pred_check_branch
    %17 = sbr.rel (0) target = $region13
  $region12: #{dcetm_forward.10} parent=0 // pred_region
    _
  $region13: #{dcetm_forward.10} parent=0 // pred_fallthru
    _
  // Predicated region
  $region14: #{dcetm_forward.10} parent=0 // pred_check
    _
  $region15: #{dcetm_forward.10} parent=0 // pred_check_branch
    %19 = sbr.rel (0) target = $region17
  $region16: #{dcetm_forward.10} parent=0 // pred_region
    _
  $region17: #{dcetm_forward.10} parent=0 // pred_fallthru
    _
  // Predicated region
  $region18: #{dcetm_forward.10} parent=0 // pred_check
    _
  $region19: #{dcetm_forward.10} parent=0 // pred_check_branch
    %21 = sbr.rel (0) target = $region21
  $region20: #{dcetm_forward.10} parent=0 // pred_region
    _
  $region21: #{dcetm_forward.10} parent=0 // pred_fallthru
    _
  // Predicated region
  $region22: #{dcetm_forward.10} parent=0 // pred_check
    _
  $region23: #{dcetm_forward.10} parent=0 // pred_check_branch
    %23 = sbr.rel (0) target = $region25
  $region24: #{dcetm_forward.10} parent=0 // pred_region
    _
  $region25: #{dcetm_forward.10} parent=0 // pred_fallthru
    _
  // Predicated region
  $region26: #{dcetm_forward.10} parent=0 // pred_check
    _
  $region27: #{dcetm_forward.10} parent=0 // pred_check_branch
    %25 = sbr.rel (0) target = $region29
  $region28: #{dcetm_forward.10} parent=0 // pred_region
    _
  $region29: #{dcetm_forward.10} parent=0 // pred_fallthru
    _
  %v26 = vld [vmem:[%s0] sm:$0xff]
  %v27 = vld [vmem:[%s1] sm:$0xff]
  %v28 = vld [vmem:[%s1 + $0x8] sm:$0xff]
  %v29 = vld [vmem:[%s1 + $0x10] sm:$0xff]
  %v30 = vld [vmem:[%s1 + $0x18] sm:$0xff]
  %v31 = vld [vmem:[%s2] sm:$0x1]
  %v33 = vlaneseq
  %v34 = vshrl.u32 %v33, 7
  %v35 = vsub.s32 0, %v34
  %v36 = vrot.slane %v31, %v35
  %vm38 = vcmask 261120
  %v40 = vsel %vm38, %v26, 0
  %42 = vmatprep.subr.mxu0 0.0
  %43 = vmatpush1.msra.mxu0 %v27
  %44 = vmatprep.subr.mxu0 0.0
  %45 = vmatpush1.msra.mxu0 %v28
  %46 = vmatprep.subr.mxu0 0.0
  %47 = vmatpush1.msra.mxu0 %v29
  %48 = vmatprep.subr.mxu0 0.0
  %49 = vmatpush1.msra.mxu0 %v30
  %50 = vmatprep.subr.mxu0 0.0
  %51 = vmatpush1.msra.mxu0 0.0
  %52 = vmatprep.subr.mxu0 0.0
  %53 = vmatpush1.msra.mxu0 0.0
  %54 = vmatprep.subr.mxu0 0.0
  %55 = vmatpush1.msra.mxu0 0.0
  %56 = vmatprep.subr.mxu0 0.0
  %57 = vmatpush1.msra.mxu0 0.0
  %58 = vmatprep.subr.mxu0 0.0
  %59 = vmatpush1.msra.mxu0 0.0
  %60 = vmatprep.subr.mxu0 0.0
  %61 = vmatpush1.msra.mxu0 0.0
  %62 = vmatprep.subr.mxu0 0.0
  %63 = vmatpush1.msra.mxu0 0.0
  %64 = vmatprep.subr.mxu0 0.0
  %65 = vmatpush1.msra.mxu0 0.0
  %66 = vmatprep.subr.mxu0 0.0
  %67 = vmatpush1.msra.mxu0 0.0
  %68 = vmatprep.subr.mxu0 0.0
  %69 = vmatpush1.msra.mxu0 0.0
  %70 = vmatprep.subr.mxu0 0.0
  %71 = vmatpush1.msra.mxu0 0.0
  %72 = vmatprep.subr.mxu0 0.0
  %73 = vmatpush1.msra.mxu0 0.0
  %74 = vmatprep.subr.mxu0 0.0
  %75 = vmatpush1.msra.mxu0 0.0
  %76 = vmatprep.subr.mxu0 0.0
  %77 = vmatpush1.msra.mxu0 0.0
  %78 = vmatprep.subr.mxu0 0.0
  %79 = vmatpush1.msra.mxu0 0.0
  %80 = vmatprep.subr.mxu0 0.0
  %81 = vmatpush1.msra.mxu0 0.0
  %82 = vmatprep.subr.mxu0 0.0
  %83 = vmatpush1.msra.mxu0 0.0
  %84 = vmatprep.subr.mxu0 0.0
  %85 = vmatpush1.msra.mxu0 0.0
  %86 = vmatprep.subr.mxu0 0.0
  %87 = vmatpush1.msra.mxu0 0.0
  %88 = vmatprep.subr.mxu0 0.0
  %89 = vmatpush1.msra.mxu0 0.0
  %90 = vmatprep.subr.mxu0 0.0
  %91 = vmatpush1.msra.mxu0 0.0
  %92 = vmatprep.subr.mxu0 0.0
  %93 = vmatpush1.msra.mxu0 0.0
  %94 = vmatprep.subr.mxu0 0.0
  %95 = vmatpush1.msra.mxu0 0.0
  %96 = vmatprep.subr.mxu0 0.0
  %97 = vmatpush1.msra.mxu0 0.0
  %98 = vmatprep.subr.mxu0 0.0
  %99 = vmatpush1.msra.mxu0 0.0
  %100 = vmatprep.subr.mxu0 0.0
  %101 = vmatpush1.msra.mxu0 0.0
  %102 = vmatprep.subr.mxu0 0.0
  %103 = vmatpush1.msra.mxu0 0.0
  %104 = vmatprep.subr.mxu0 0.0
  %105 = vmatpush1.msra.mxu0 0.0
  %106 = vmatprep.mubr.f32.mxu0 0.0
  %107 = vmatmul.mubr.f32.gmra.mrb[0].mxu0 %v40
  %v108 = vpop.f32.mrb[0].mxu0
  %v109 = vadd.f32 %v36, %v108
  %v110 = vpop.f32.mrb[0].mxu0
  %111 = vdwg.mxu0
  %v112 = vmax.f32 %v109, 0.0
  %v113 = vand.u32 2147483647, %v109
  %v114 = vsub.f32 0.0, %v113
  %v115 = vmul.f32 %v114, 1.442695
  %v116 = vpow.pop %v115
  %v117 = vadd.f32 %v116, 1.0
  %v118 = vlog2.pop %v117
  %v119 = vmul.f32 %v118, 0.6931472
  %v120 = vadd.f32 %v112, %v119
  %v121 = vld [vmem:[%s3] sm:$0xff]
  %v122 = vld [vmem:[%s3 + $0x8] sm:$0xff]
  %v123 = vld [vmem:[%s3 + $0x10] sm:$0xff]
  %v124 = vld [vmem:[%s3 + $0x18] sm:$0xff]
  %v125 = vld [vmem:[%s4] sm:$0x1]
  %v127 = vlaneseq
  %v128 = vshrl.u32 %v127, 7
  %v129 = vsub.s32 0, %v128
  %v130 = vrot.slane %v125, %v129
  %v133 = vsel %vm38, %v120, 0
  %135 = vmatprep.subr.mxu0 0.0
  %136 = vmatpush1.msra.mxu0 %v121
  %137 = vmatprep.subr.mxu0 0.0
  %138 = vmatpush1.msra.mxu0 %v122
  %139 = vmatprep.subr.mxu0 0.0
  %140 = vmatpush1.msra.mxu0 %v123
  %141 = vmatprep.subr.mxu0 0.0
  %142 = vmatpush1.msra.mxu0 %v124
  %143 = vmatprep.subr.mxu0 0.0
  %144 = vmatpush1.msra.mxu0 0.0
  %145 = vmatprep.subr.mxu0 0.0
  %146 = vmatpush1.msra.mxu0 0.0
  %147 = vmatprep.subr.mxu0 0.0
  %148 = vmatpush1.msra.mxu0 0.0
  %149 = vmatprep.subr.mxu0 0.0
  %150 = vmatpush1.msra.mxu0 0.0
  %151 = vmatprep.subr.mxu0 0.0
  %152 = vmatpush1.msra.mxu0 0.0
  %153 = vmatprep.subr.mxu0 0.0
  %154 = vmatpush1.msra.mxu0 0.0
  %155 = vmatprep.subr.mxu0 0.0
  %156 = vmatpush1.msra.mxu0 0.0
  %157 = vmatprep.subr.mxu0 0.0
  %158 = vmatpush1.msra.mxu0 0.0
  %159 = vmatprep.subr.mxu0 0.0
  %160 = vmatpush1.msra.mxu0 0.0
  %161 = vmatprep.subr.mxu0 0.0
  %162 = vmatpush1.msra.mxu0 0.0
  %163 = vmatprep.subr.mxu0 0.0
  %164 = vmatpush1.msra.mxu0 0.0
  %165 = vmatprep.subr.mxu0 0.0
  %166 = vmatpush1.msra.mxu0 0.0
  %167 = vmatprep.subr.mxu0 0.0
  %168 = vmatpush1.msra.mxu0 0.0
  %169 = vmatprep.subr.mxu0 0.0
  %170 = vmatpush1.msra.mxu0 0.0
  %171 = vmatprep.subr.mxu0 0.0
  %172 = vmatpush1.msra.mxu0 0.0
  %173 = vmatprep.subr.mxu0 0.0
  %174 = vmatpush1.msra.mxu0 0.0
  %175 = vmatprep.subr.mxu0 0.0
  %176 = vmatpush1.msra.mxu0 0.0
  %177 = vmatprep.subr.mxu0 0.0
  %178 = vmatpush1.msra.mxu0 0.0
  %179 = vmatprep.subr.mxu0 0.0
  %180 = vmatpush1.msra.mxu0 0.0
  %181 = vmatprep.subr.mxu0 0.0
  %182 = vmatpush1.msra.mxu0 0.0
  %183 = vmatprep.subr.mxu0 0.0
  %184 = vmatpush1.msra.mxu0 0.0
  %185 = vmatprep.subr.mxu0 0.0
  %186 = vmatpush1.msra.mxu0 0.0
  %187 = vmatprep.subr.mxu0 0.0
  %188 = vmatpush1.msra.mxu0 0.0
  %189 = vmatprep.subr.mxu0 0.0
  %190 = vmatpush1.msra.mxu0 0.0
  %191 = vmatprep.subr.mxu0 0.0
  %192 = vmatpush1.msra.mxu0 0.0
  %193 = vmatprep.subr.mxu0 0.0
  %194 = vmatpush1.msra.mxu0 0.0
  %195 = vmatprep.subr.mxu0 0.0
  %196 = vmatpush1.msra.mxu0 0.0
  %197 = vmatprep.subr.mxu0 0.0
  %198 = vmatpush1.msra.mxu0 0.0
  %199 = vmatprep.mubr.f32.mxu0 0.0
  %200 = vmatmul.mubr.f32.gmra.mrb[0].mxu0 %v133
  %v201 = vpop.f32.mrb[0].mxu0
  %v202 = vadd.f32 %v130, %v201
  %v203 = vpop.f32.mrb[0].mxu0
  %204 = vdwg.mxu0
  %v205 = vmax.f32 %v202, 0.0
  %v206 = vand.u32 2147483647, %v202
  %v207 = vsub.f32 0.0, %v206
  %v208 = vmul.f32 %v207, 1.442695
  %v209 = vpow.pop %v208
  %v210 = vadd.f32 %v209, 1.0
  %v211 = vlog2.pop %v210
  %v212 = vmul.f32 %v211, 0.6931472
  %v213 = vadd.f32 %v205, %v212
  %v214 = vsel %vm38, %v213, 0.0
  %v215 = vrot.slane %v214, 4
  %v216 = vadd.f32 %v214, %v215
  %v217 = vrot.slane %v216, 2
  %v218 = vadd.f32 %v216, %v217
  %v219 = vrot.slane %v218, 1
  %v220 = vadd.f32 %v218, %v219
  %v221 = vrcp.pop 8.0
  %v222 = vmul.f32 %v220, %v221
  %v223 = vsub.f32 %v213, %v222
  %v224 = vmul.f32 %v223, %v223
  %v225 = vsel %vm38, %v224, 0.0
  %v226 = vrot.slane %v225, 4
  %v227 = vadd.f32 %v225, %v226
  %v228 = vrot.slane %v227, 2
  %v229 = vadd.f32 %v227, %v228
  %v230 = vrot.slane %v229, 1
  %v231 = vadd.f32 %v229, %v230
  %v232 = vmul.f32 %v231, %v221
  %v233 = vadd.f32 %v232, 1e-05
  %v234 = vrsqrt.pop %v233
  %v235 = vmul.f32 %v223, %v234
  %v236 = vld [vmem:[%s5] sm:$0x1]
  %v238 = vlaneseq
  %v239 = vshrl.u32 %v238, 7
  %v240 = vsub.s32 0, %v239
  %v241 = vrot.slane %v236, %v240
  %v243 = vmul.f32 %v235, %v241
  %v244 = vld [vmem:[%s6] sm:$0x1]
  %v246 = vlaneseq
  %v247 = vshrl.u32 %v246, 7
  %v248 = vsub.s32 0, %v247
  %v249 = vrot.slane %v244, %v248
  %v251 = vadd.f32 %v243, %v249
  %v252 = vmax.f32 %v251, 0.0
  %253 = vst.msk [vmem:[%s7] sm:$0xff] %vm38, %v252
  // Predicated region
  $region30: #{dcetm_forward.10} parent=0 // pred_check
    _
  $region31: #{dcetm_forward.10} parent=0 // pred_check_branch
    %255 = sbr.rel (0) target = $region33
  $region32: #{dcetm_forward.10} parent=0 // pred_region
    _
  $region33: #{dcetm_forward.10} parent=0 // pred_fallthru
    _
  // Predicated region
  $region34: #{dcetm_forward.10} parent=0 // pred_check
    _
  $region35: #{dcetm_forward.10} parent=0 // pred_check_branch
    %257 = sbr.rel (0) target = $region37
  $region36: #{dcetm_forward.10} parent=0 // pred_region
    _
  $region37: #{dcetm_forward.10} parent=0 // pred_fallthru
    _

// kernel: dcetm_forward.11
$region0: #{dcetm_forward.11}
  #allocation0 [shape = 'u32[]', space=smem, size = 0x4, offset = 0x4, fixed_abs, tag = 'smem constant byte address 0x4 - core index']
  #allocation1 [shape = 'u32[144,128]{1,0:T(1,128)}', space=vmem, size = 0x12000, scoped, tag = 'internal scratch']
  %s0 = inlined_call_operand.vmem [shape: f32[8,32], index: 0, kind: input, shape index: {}]
  %s1 = inlined_call_operand.vmem [shape: f32[32,32], index: 1, kind: input, shape index: {}]
  %s2 = inlined_call_operand.vmem [shape: f32[1,32], index: 2, kind: input, shape index: {}]
  %s3 = inlined_call_operand.vmem [shape: f32[32,32], index: 3, kind: input, shape index: {}]
  %s4 = inlined_call_operand.vmem [shape: f32[1,32], index: 4, kind: input, shape index: {}]
  %s5 = inlined_call_operand.vmem [shape: f32[1,32], index: 5, kind: input, shape index: {}]
  %s6 = inlined_call_operand.vmem [shape: f32[1,32], index: 6, kind: input, shape index: {}]
  %s7 = inlined_call_operand.vmem [shape: f32[8,32], index: 7, kind: output, shape index: {}]
  %s8 = sld [smem:[#allocation0]]
  $region38: #{dcetm_forward.11} parent=0
    _
  %s10 = ssub.s32 1, %s8
  %s11 = scalar_select 0, %s10, %s8
  // Predicated region
  $region2: #{dcetm_forward.11} parent=0 // pred_check
    _
  $region3: #{dcetm_forward.11} parent=0 // pred_check_branch
    %13 = sbr.rel (0) target = $region5
  $region4: #{dcetm_forward.11} parent=0 // pred_region
    _
  $region5: #{dcetm_forward.11} parent=0 // pred_fallthru
    _
  // Predicated region
  $region6: #{dcetm_forward.11} parent=0 // pred_check
    _
  $region7: #{dcetm_forward.11} parent=0 // pred_check_branch
    %15 = sbr.rel (0) target = $region9
  $region8: #{dcetm_forward.11} parent=0 // pred_region
    _
  $region9: #{dcetm_forward.11} parent=0 // pred_fallthru
    _
  // Predicated region
  $region10: #{dcetm_forward.11} parent=0 // pred_check
    _
  $region11: #{dcetm_forward.11} parent=0 // pred_check_branch
    %17 = sbr.rel (0) target = $region13
  $region12: #{dcetm_forward.11} parent=0 // pred_region
    _
  $region13: #{dcetm_forward.11} parent=0 // pred_fallthru
    _
  // Predicated region
  $region14: #{dcetm_forward.11} parent=0 // pred_check
    _
  $region15: #{dcetm_forward.11} parent=0 // pred_check_branch
    %19 = sbr.rel (0) target = $region17
  $region16: #{dcetm_forward.11} parent=0 // pred_region
    _
  $region17: #{dcetm_forward.11} parent=0 // pred_fallthru
    _
  // Predicated region
  $region18: #{dcetm_forward.11} parent=0 // pred_check
    _
  $region19: #{dcetm_forward.11} parent=0 // pred_check_branch
    %21 = sbr.rel (0) target = $region21
  $region20: #{dcetm_forward.11} parent=0 // pred_region
    _
  $region21: #{dcetm_forward.11} parent=0 // pred_fallthru
    _
  // Predicated region
  $region22: #{dcetm_forward.11} parent=0 // pred_check
    _
  $region23: #{dcetm_forward.11} parent=0 // pred_check_branch
    %23 = sbr.rel (0) target = $region25
  $region24: #{dcetm_forward.11} parent=0 // pred_region
    _
  $region25: #{dcetm_forward.11} parent=0 // pred_fallthru
    _
  // Predicated region
  $region26: #{dcetm_forward.11} parent=0 // pred_check
    _
  $region27: #{dcetm_forward.11} parent=0 // pred_check_branch
    %25 = sbr.rel (0) target = $region29
  $region28: #{dcetm_forward.11} parent=0 // pred_region
    _
  $region29: #{dcetm_forward.11} parent=0 // pred_fallthru
    _
  %v26 = vld [vmem:[%s0] sm:$0xff]
  %v27 = vld [vmem:[%s1] sm:$0xff]
  %v28 = vld [vmem:[%s1 + $0x8] sm:$0xff]
  %v29 = vld [vmem:[%s1 + $0x10] sm:$0xff]
  %v30 = vld [vmem:[%s1 + $0x18] sm:$0xff]
  %v31 = vld [vmem:[%s2] sm:$0x1]
  %v33 = vlaneseq
  %v34 = vshrl.u32 %v33, 7
  %v35 = vsub.s32 0, %v34
  %v36 = vrot.slane %v31, %v35
  %vm38 = vcmask 261120
  %v40 = vsel %vm38, %v26, 0
  %42 = vmatprep.subr.mxu0 0.0
  %43 = vmatpush1.msra.mxu0 %v27
  %44 = vmatprep.subr.mxu0 0.0
  %45 = vmatpush1.msra.mxu0 %v28
  %46 = vmatprep.subr.mxu0 0.0
  %47 = vmatpush1.msra.mxu0 %v29
  %48 = vmatprep.subr.mxu0 0.0
  %49 = vmatpush1.msra.mxu0 %v30
  %50 = vmatprep.subr.mxu0 0.0
  %51 = vmatpush1.msra.mxu0 0.0
  %52 = vmatprep.subr.mxu0 0.0
  %53 = vmatpush1.msra.mxu0 0.0
  %54 = vmatprep.subr.mxu0 0.0
  %55 = vmatpush1.msra.mxu0 0.0
  %56 = vmatprep.subr.mxu0 0.0
  %57 = vmatpush1.msra.mxu0 0.0
  %58 = vmatprep.subr.mxu0 0.0
  %59 = vmatpush1.msra.mxu0 0.0
  %60 = vmatprep.subr.mxu0 0.0
  %61 = vmatpush1.msra.mxu0 0.0
  %62 = vmatprep.subr.mxu0 0.0
  %63 = vmatpush1.msra.mxu0 0.0
  %64 = vmatprep.subr.mxu0 0.0
  %65 = vmatpush1.msra.mxu0 0.0
  %66 = vmatprep.subr.mxu0 0.0
  %67 = vmatpush1.msra.mxu0 0.0
  %68 = vmatprep.subr.mxu0 0.0
  %69 = vmatpush1.msra.mxu0 0.0
  %70 = vmatprep.subr.mxu0 0.0
  %71 = vmatpush1.msra.mxu0 0.0
  %72 = vmatprep.subr.mxu0 0.0
  %73 = vmatpush1.msra.mxu0 0.0
  %74 = vmatprep.subr.mxu0 0.0
  %75 = vmatpush1.msra.mxu0 0.0
  %76 = vmatprep.subr.mxu0 0.0
  %77 = vmatpush1.msra.mxu0 0.0
  %78 = vmatprep.subr.mxu0 0.0
  %79 = vmatpush1.msra.mxu0 0.0
  %80 = vmatprep.subr.mxu0 0.0
  %81 = vmatpush1.msra.mxu0 0.0
  %82 = vmatprep.subr.mxu0 0.0
  %83 = vmatpush1.msra.mxu0 0.0
  %84 = vmatprep.subr.mxu0 0.0
  %85 = vmatpush1.msra.mxu0 0.0
  %86 = vmatprep.subr.mxu0 0.0
  %87 = vmatpush1.msra.mxu0 0.0
  %88 = vmatprep.subr.mxu0 0.0
  %89 = vmatpush1.msra.mxu0 0.0
  %90 = vmatprep.subr.mxu0 0.0
  %91 = vmatpush1.msra.mxu0 0.0
  %92 = vmatprep.subr.mxu0 0.0
  %93 = vmatpush1.msra.mxu0 0.0
  %94 = vmatprep.subr.mxu0 0.0
  %95 = vmatpush1.msra.mxu0 0.0
  %96 = vmatprep.subr.mxu0 0.0
  %97 = vmatpush1.msra.mxu0 0.0
  %98 = vmatprep.subr.mxu0 0.0
  %99 = vmatpush1.msra.mxu0 0.0
  %100 = vmatprep.subr.mxu0 0.0
  %101 = vmatpush1.msra.mxu0 0.0
  %102 = vmatprep.subr.mxu0 0.0
  %103 = vmatpush1.msra.mxu0 0.0
  %104 = vmatprep.subr.mxu0 0.0
  %105 = vmatpush1.msra.mxu0 0.0
  %106 = vmatprep.mubr.f32.mxu0 0.0
  %107 = vmatmul.mubr.f32.gmra.mrb[0].mxu0 %v40
  %v108 = vpop.f32.mrb[0].mxu0
  %v109 = vadd.f32 %v36, %v108
  %v110 = vpop.f32.mrb[0].mxu0
  %111 = vdwg.mxu0
  %v112 = vmax.f32 %v109, 0.0
  %v113 = vand.u32 2147483647, %v109
  %v114 = vsub.f32 0.0, %v113
  %v115 = vmul.f32 %v114, 1.442695
  %v116 = vpow.pop %v115
  %v117 = vadd.f32 %v116, 1.0
  %v118 = vlog2.pop %v117
  %v119 = vmul.f32 %v118, 0.6931472
  %v120 = vadd.f32 %v112, %v119
  %v121 = vld [vmem:[%s3] sm:$0xff]
  %v122 = vld [vmem:[%s3 + $0x8] sm:$0xff]
  %v123 = vld [vmem:[%s3 + $0x10] sm:$0xff]
  %v124 = vld [vmem:[%s3 + $0x18] sm:$0xff]
  %v125 = vld [vmem:[%s4] sm:$0x1]
  %v127 = vlaneseq
  %v128 = vshrl.u32 %v127, 7
  %v129 = vsub.s32 0, %v128
  %v130 = vrot.slane %v125, %v129
  %v133 = vsel %vm38, %v120, 0
  %135 = vmatprep.subr.mxu0 0.0
  %136 = vmatpush1.msra.mxu0 %v121
  %137 = vmatprep.subr.mxu0 0.0
  %138 = vmatpush1.msra.mxu0 %v122
  %139 = vmatprep.subr.mxu0 0.0
  %140 = vmatpush1.msra.mxu0 %v123
  %141 = vmatprep.subr.mxu0 0.0
  %142 = vmatpush1.msra.mxu0 %v124
  %143 = vmatprep.subr.mxu0 0.0
  %144 = vmatpush1.msra.mxu0 0.0
  %145 = vmatprep.subr.mxu0 0.0
  %146 = vmatpush1.msra.mxu0 0.0
  %147 = vmatprep.subr.mxu0 0.0
  %148 = vmatpush1.msra.mxu0 0.0
  %149 = vmatprep.subr.mxu0 0.0
  %150 = vmatpush1.msra.mxu0 0.0
  %151 = vmatprep.subr.mxu0 0.0
  %152 = vmatpush1.msra.mxu0 0.0
  %153 = vmatprep.subr.mxu0 0.0
  %154 = vmatpush1.msra.mxu0 0.0
  %155 = vmatprep.subr.mxu0 0.0
  %156 = vmatpush1.msra.mxu0 0.0
  %157 = vmatprep.subr.mxu0 0.0
  %158 = vmatpush1.msra.mxu0 0.0
  %159 = vmatprep.subr.mxu0 0.0
  %160 = vmatpush1.msra.mxu0 0.0
  %161 = vmatprep.subr.mxu0 0.0
  %162 = vmatpush1.msra.mxu0 0.0
  %163 = vmatprep.subr.mxu0 0.0
  %164 = vmatpush1.msra.mxu0 0.0
  %165 = vmatprep.subr.mxu0 0.0
  %166 = vmatpush1.msra.mxu0 0.0
  %167 = vmatprep.subr.mxu0 0.0
  %168 = vmatpush1.msra.mxu0 0.0
  %169 = vmatprep.subr.mxu0 0.0
  %170 = vmatpush1.msra.mxu0 0.0
  %171 = vmatprep.subr.mxu0 0.0
  %172 = vmatpush1.msra.mxu0 0.0
  %173 = vmatprep.subr.mxu0 0.0
  %174 = vmatpush1.msra.mxu0 0.0
  %175 = vmatprep.subr.mxu0 0.0
  %176 = vmatpush1.msra.mxu0 0.0
  %177 = vmatprep.subr.mxu0 0.0
  %178 = vmatpush1.msra.mxu0 0.0
  %179 = vmatprep.subr.mxu0 0.0
  %180 = vmatpush1.msra.mxu0 0.0
  %181 = vmatprep.subr.mxu0 0.0
  %182 = vmatpush1.msra.mxu0 0.0
  %183 = vmatprep.subr.mxu0 0.0
  %184 = vmatpush1.msra.mxu0 0.0
  %185 = vmatprep.subr.mxu0 0.0
  %186 = vmatpush1.msra.mxu0 0.0
  %187 = vmatprep.subr.mxu0 0.0
  %188 = vmatpush1.msra.mxu0 0.0
  %189 = vmatprep.subr.mxu0 0.0
  %190 = vmatpush1.msra.mxu0 0.0
  %191 = vmatprep.subr.mxu0 0.0
  %192 = vmatpush1.msra.mxu0 0.0
  %193 = vmatprep.subr.mxu0 0.0
  %194 = vmatpush1.msra.mxu0 0.0
  %195 = vmatprep.subr.mxu0 0.0
  %196 = vmatpush1.msra.mxu0 0.0
  %197 = vmatprep.subr.mxu0 0.0
  %198 = vmatpush1.msra.mxu0 0.0
  %199 = vmatprep.mubr.f32.mxu0 0.0
  %200 = vmatmul.mubr.f32.gmra.mrb[0].mxu0 %v133
  %v201 = vpop.f32.mrb[0].mxu0
  %v202 = vadd.f32 %v130, %v201
  %v203 = vpop.f32.mrb[0].mxu0
  %204 = vdwg.mxu0
  %v205 = vmax.f32 %v202, 0.0
  %v206 = vand.u32 2147483647, %v202
  %v207 = vsub.f32 0.0, %v206
  %v208 = vmul.f32 %v207, 1.442695
  %v209 = vpow.pop %v208
  %v210 = vadd.f32 %v209, 1.0
  %v211 = vlog2.pop %v210
  %v212 = vmul.f32 %v211, 0.6931472
  %v213 = vadd.f32 %v205, %v212
  %v214 = vadd.f32 %v213, %v26
  %v215 = vsel %vm38, %v214, 0.0
  %v216 = vrot.slane %v215, 4
  %v217 = vadd.f32 %v215, %v216
  %v218 = vrot.slane %v217, 2
  %v219 = vadd.f32 %v217, %v218
  %v220 = vrot.slane %v219, 1
  %v221 = vadd.f32 %v219, %v220
  %v222 = vrcp.pop 8.0
  %v223 = vmul.f32 %v221, %v222
  %v224 = vsub.f32 %v214, %v223
  %v225 = vmul.f32 %v224, %v224
  %v226 = vsel %vm38, %v225, 0.0
  %v227 = vrot.slane %v226, 4
  %v228 = vadd.f32 %v226, %v227
  %v229 = vrot.slane %v228, 2
  %v230 = vadd.f32 %v228, %v229
  %v231 = vrot.slane %v230, 1
  %v232 = vadd.f32 %v230, %v231
  %v233 = vmul.f32 %v232, %v222
  %v234 = vadd.f32 %v233, 1e-05
  %v235 = vrsqrt.pop %v234
  %v236 = vmul.f32 %v224, %v235
  %v237 = vld [vmem:[%s5] sm:$0x1]
  %v239 = vlaneseq
  %v240 = vshrl.u32 %v239, 7
  %v241 = vsub.s32 0, %v240
  %v242 = vrot.slane %v237, %v241
  %v244 = vmul.f32 %v236, %v242
  %v245 = vld [vmem:[%s6] sm:$0x1]
  %v247 = vlaneseq
  %v248 = vshrl.u32 %v247, 7
  %v249 = vsub.s32 0, %v248
  %v250 = vrot.slane %v245, %v249
  %v252 = vadd.f32 %v244, %v250
  %v253 = vmax.f32 %v252, 0.0
  %254 = vst.msk [vmem:[%s7] sm:$0xff] %vm38, %v253
  // Predicated region
  $region30: #{dcetm_forward.11} parent=0 // pred_check
    _
  $region31: #{dcetm_forward.11} parent=0 // pred_check_branch
    %256 = sbr.rel (0) target = $region33
  $region32: #{dcetm_forward.11} parent=0 // pred_region
    _
  $region33: #{dcetm_forward.11} parent=0 // pred_fallthru
    _
  // Predicated region
  $region34: #{dcetm_forward.11} parent=0 // pred_check
    _
  $region35: #{dcetm_forward.11} parent=0 // pred_check_branch
    %258 = sbr.rel (0) target = $region37
  $region36: #{dcetm_forward.11} parent=0 // pred_region
    _
  $region37: #{dcetm_forward.11} parent=0 // pred_fallthru
    _

// kernel: dcetm_forward.12
$region0: #{dcetm_forward.12}
  #allocation0 [shape = 'u32[]', space=smem, size = 0x4, offset = 0x4, fixed_abs, tag = 'smem constant byte address 0x4 - core index']
  #allocation1 [shape = 'u32[144,128]{1,0:T(1,128)}', space=vmem, size = 0x12000, scoped, tag = 'internal scratch']
  %s0 = inlined_call_operand.vmem [shape: f32[8,32], index: 0, kind: input, shape index: {}]
  %s1 = inlined_call_operand.vmem [shape: f32[32,8], index: 1, kind: input, shape index: {}]
  %s2 = inlined_call_operand.vmem [shape: f32[1,8], index: 2, kind: input, shape index: {}]
  %s3 = inlined_call_operand.vmem [shape: f32[32,8], index: 3, kind: input, shape index: {}]
  %s4 = inlined_call_operand.vmem [shape: f32[1,8], index: 4, kind: input, shape index: {}]
  %s5 = inlined_call_operand.vmem [shape: f32[8,8], index: 5, kind: output, shape index: {0}]
  %s6 = inlined_call_operand.vmem [shape: f32[8,8], index: 6, kind: output, shape index: {1}]
  %7 = xla_tuple %s5, %s6
  %s8 = sld [smem:[#allocation0]]
  $region38: #{dcetm_forward.12} parent=0
    _
  %s10 = ssub.s32 1, %s8
  %s11 = scalar_select 0, %s10, %s8
  // Predicated region
  $region2: #{dcetm_forward.12} parent=0 // pred_check
    _
  $region3: #{dcetm_forward.12} parent=0 // pred_check_branch
    %13 = sbr.rel (0) target = $region5
  $region4: #{dcetm_forward.12} parent=0 // pred_region
    _
  $region5: #{dcetm_forward.12} parent=0 // pred_fallthru
    _
  // Predicated region
  $region6: #{dcetm_forward.12} parent=0 // pred_check
    _
  $region7: #{dcetm_forward.12} parent=0 // pred_check_branch
    %15 = sbr.rel (0) target = $region9
  $region8: #{dcetm_forward.12} parent=0 // pred_region
    _
  $region9: #{dcetm_forward.12} parent=0 // pred_fallthru
    _
  // Predicated region
  $region10: #{dcetm_forward.12} parent=0 // pred_check
    _
  $region11: #{dcetm_forward.12} parent=0 // pred_check_branch
    %17 = sbr.rel (0) target = $region13
  $region12: #{dcetm_forward.12} parent=0 // pred_region
    _
  $region13: #{dcetm_forward.12} parent=0 // pred_fallthru
    _
  // Predicated region
  $region14: #{dcetm_forward.12} parent=0 // pred_check
    _
  $region15: #{dcetm_forward.12} parent=0 // pred_check_branch
    %19 = sbr.rel (0) target = $region17
  $region16: #{dcetm_forward.12} parent=0 // pred_region
    _
  $region17: #{dcetm_forward.12} parent=0 // pred_fallthru
    _
  // Predicated region
  $region18: #{dcetm_forward.12} parent=0 // pred_check
    _
  $region19: #{dcetm_forward.12} parent=0 // pred_check_branch
    %21 = sbr.rel (0) target = $region21
  $region20: #{dcetm_forward.12} parent=0 // pred_region
    _
  $region21: #{dcetm_forward.12} parent=0 // pred_fallthru
    _
  %v22 = vld [vmem:[%s0] sm:$0xff]
  %v23 = vld [vmem:[%s1] sm:$0xff]
  %v24 = vld [vmem:[%s1 + $0x8] sm:$0xff]
  %v25 = vld [vmem:[%s1 + $0x10] sm:$0xff]
  %v26 = vld [vmem:[%s1 + $0x18] sm:$0xff]
  %v27 = vld [vmem:[%s2] sm:$0x1]
  %v29 = vlaneseq
  %v30 = vshrl.u32 %v29, 7
  %v31 = vsub.s32 0, %v30
  %v32 = vrot.slane %v27, %v31
  %vm34 = vcmask 261120
  %v36 = vsel %vm34, %v22, 0
  %38 = vmatprep.subr.mxu0 0.0
  %39 = vmatpush1.msra.mxu0 %v23
  %40 = vmatprep.subr.mxu0 0.0
  %41 = vmatpush1.msra.mxu0 %v24
  %42 = vmatprep.subr.mxu0 0.0
  %43 = vmatpush1.msra.mxu0 %v25
  %44 = vmatprep.subr.mxu0 0.0
  %45 = vmatpush1.msra.mxu0 %v26
  %46 = vmatprep.subr.mxu0 0.0
  %47 = vmatpush1.msra.mxu0 0.0
  %48 = vmatprep.subr.mxu0 0.0
  %49 = vmatpush1.msra.mxu0 0.0
  %50 = vmatprep.subr.mxu0 0.0
  %51 = vmatpush1.msra.mxu0 0.0
  %52 = vmatprep.subr.mxu0 0.0
  %53 = vmatpush1.msra.mxu0 0.0
  %54 = vmatprep.subr.mxu0 0.0
  %55 = vmatpush1.msra.mxu0 0.0
  %56 = vmatprep.subr.mxu0 0.0
  %57 = vmatpush1.msra.mxu0 0.0
  %58 = vmatprep.subr.mxu0 0.0
  %59 = vmatpush1.msra.mxu0 0.0
  %60 = vmatprep.subr.mxu0 0.0
  %61 = vmatpush1.msra.mxu0 0.0
  %62 = vmatprep.subr.mxu0 0.0
  %63 = vmatpush1.msra.mxu0 0.0
  %64 = vmatprep.subr.mxu0 0.0
  %65 = vmatpush1.msra.mxu0 0.0
  %66 = vmatprep.subr.mxu0 0.0
  %67 = vmatpush1.msra.mxu0 0.0
  %68 = vmatprep.subr.mxu0 0.0
  %69 = vmatpush1.msra.mxu0 0.0
  %70 = vmatprep.subr.mxu0 0.0
  %71 = vmatpush1.msra.mxu0 0.0
  %72 = vmatprep.subr.mxu0 0.0
  %73 = vmatpush1.msra.mxu0 0.0
  %74 = vmatprep.subr.mxu0 0.0
  %75 = vmatpush1.msra.mxu0 0.0
  %76 = vmatprep.subr.mxu0 0.0
  %77 = vmatpush1.msra.mxu0 0.0
  %78 = vmatprep.subr.mxu0 0.0
  %79 = vmatpush1.msra.mxu0 0.0
  %80 = vmatprep.subr.mxu0 0.0
  %81 = vmatpush1.msra.mxu0 0.0
  %82 = vmatprep.subr.mxu0 0.0
  %83 = vmatpush1.msra.mxu0 0.0
  %84 = vmatprep.subr.mxu0 0.0
  %85 = vmatpush1.msra.mxu0 0.0
  %86 = vmatprep.subr.mxu0 0.0
  %87 = vmatpush1.msra.mxu0 0.0
  %88 = vmatprep.subr.mxu0 0.0
  %89 = vmatpush1.msra.mxu0 0.0
  %90 = vmatprep.subr.mxu0 0.0
  %91 = vmatpush1.msra.mxu0 0.0
  %92 = vmatprep.subr.mxu0 0.0
  %93 = vmatpush1.msra.mxu0 0.0
  %94 = vmatprep.subr.mxu0 0.0
  %95 = vmatpush1.msra.mxu0 0.0
  %96 = vmatprep.subr.mxu0 0.0
  %97 = vmatpush1.msra.mxu0 0.0
  %98 = vmatprep.subr.mxu0 0.0
  %99 = vmatpush1.msra.mxu0 0.0
  %100 = vmatprep.subr.mxu0 0.0
  %101 = vmatpush1.msra.mxu0 0.0
  %102 = vmatprep.mubr.f32.mxu0 0.0
  %103 = vmatmul.mubr.f32.gmra.mrb[0].mxu0 %v36
  %v104 = vpop.f32.mrb[0].mxu0
  %v105 = vadd.f32 %v32, %v104
  %v106 = vpop.f32.mrb[0].mxu0
  %107 = vdwg.mxu0
  %v108 = vld [vmem:[%s3] sm:$0xff]
  %v109 = vld [vmem:[%s3 + $0x8] sm:$0xff]
  %v110 = vld [vmem:[%s3 + $0x10] sm:$0xff]
  %v111 = vld [vmem:[%s3 + $0x18] sm:$0xff]
  %v112 = vld [vmem:[%s4] sm:$0x1]
  %v114 = vlaneseq
  %v115 = vshrl.u32 %v114, 7
  %v116 = vsub.s32 0, %v115
  %v117 = vrot.slane %v112, %v116
  %119 = vmatprep.subr.mxu0 0.0
  %120 = vmatpush1.msra.mxu0 %v108
  %121 = vmatprep.subr.mxu0 0.0
  %122 = vmatpush1.msra.mxu0 %v109
  %123 = vmatprep.subr.mxu0 0.0
  %124 = vmatpush1.msra.mxu0 %v110
  %125 = vmatprep.subr.mxu0 0.0
  %126 = vmatpush1.msra.mxu0 %v111
  %127 = vmatprep.subr.mxu0 0.0
  %128 = vmatpush1.msra.mxu0 0.0
  %129 = vmatprep.subr.mxu0 0.0
  %130 = vmatpush1.msra.mxu0 0.0
  %131 = vmatprep.subr.mxu0 0.0
  %132 = vmatpush1.msra.mxu0 0.0
  %133 = vmatprep.subr.mxu0 0.0
  %134 = vmatpush1.msra.mxu0 0.0
  %135 = vmatprep.subr.mxu0 0.0
  %136 = vmatpush1.msra.mxu0 0.0
  %137 = vmatprep.subr.mxu0 0.0
  %138 = vmatpush1.msra.mxu0 0.0
  %139 = vmatprep.subr.mxu0 0.0
  %140 = vmatpush1.msra.mxu0 0.0
  %141 = vmatprep.subr.mxu0 0.0
  %142 = vmatpush1.msra.mxu0 0.0
  %143 = vmatprep.subr.mxu0 0.0
  %144 = vmatpush1.msra.mxu0 0.0
  %145 = vmatprep.subr.mxu0 0.0
  %146 = vmatpush1.msra.mxu0 0.0
  %147 = vmatprep.subr.mxu0 0.0
  %148 = vmatpush1.msra.mxu0 0.0
  %149 = vmatprep.subr.mxu0 0.0
  %150 = vmatpush1.msra.mxu0 0.0
  %151 = vmatprep.subr.mxu0 0.0
  %152 = vmatpush1.msra.mxu0 0.0
  %153 = vmatprep.subr.mxu0 0.0
  %154 = vmatpush1.msra.mxu0 0.0
  %155 = vmatprep.subr.mxu0 0.0
  %156 = vmatpush1.msra.mxu0 0.0
  %157 = vmatprep.subr.mxu0 0.0
  %158 = vmatpush1.msra.mxu0 0.0
  %159 = vmatprep.subr.mxu0 0.0
  %160 = vmatpush1.msra.mxu0 0.0
  %161 = vmatprep.subr.mxu0 0.0
  %162 = vmatpush1.msra.mxu0 0.0
  %163 = vmatprep.subr.mxu0 0.0
  %164 = vmatpush1.msra.mxu0 0.0
  %165 = vmatprep.subr.mxu0 0.0
  %166 = vmatpush1.msra.mxu0 0.0
  %167 = vmatprep.subr.mxu0 0.0
  %168 = vmatpush1.msra.mxu0 0.0
  %169 = vmatprep.subr.mxu0 0.0
  %170 = vmatpush1.msra.mxu0 0.0
  %171 = vmatprep.subr.mxu0 0.0
  %172 = vmatpush1.msra.mxu0 0.0
  %173 = vmatprep.subr.mxu0 0.0
  %174 = vmatpush1.msra.mxu0 0.0
  %175 = vmatprep.subr.mxu0 0.0
  %176 = vmatpush1.msra.mxu0 0.0
  %177 = vmatprep.subr.mxu0 0.0
  %178 = vmatpush1.msra.mxu0 0.0
  %179 = vmatprep.subr.mxu0 0.0
  %180 = vmatpush1.msra.mxu0 0.0
  %181 = vmatprep.subr.mxu0 0.0
  %182 = vmatpush1.msra.mxu0 0.0
  %183 = vmatprep.mubr.f32.mxu0 0.0
  %184 = vmatmul.mubr.f32.gmra.mrb[0].mxu0 %v36
  %v185 = vpop.f32.mrb[0].mxu0
  %v186 = vadd.f32 %v117, %v185
  %v187 = vpop.f32.mrb[0].mxu0
  %188 = vdwg.mxu0
  %v189 = vmax.f32 %v105, 0.0
  %v190 = vand.u32 2147483647, %v105
  %v191 = vsub.f32 0.0, %v190
  %v192 = vmul.f32 %v191, 1.442695
  %v193 = vpow.pop %v192
  %v194 = vadd.f32 %v193, 1.0
  %v195 = vlog2.pop %v194
  %v196 = vmul.f32 %v195, 0.6931472
  %v197 = vadd.f32 %v189, %v196
  %v198 = vmax.f32 %v197, 1e-30
  %v199 = vmin.f32 %v198, 10.0
  %vm200 = vcmask 64512
  %201 = vst.msk [vmem:[%s5] sm:$0xff] %vm200, %v199
  %v202 = vmax.f32 %v186, 0.0
  %v203 = vand.u32 2147483647, %v186
  %v204 = vsub.f32 0.0, %v203
  %v205 = vmul.f32 %v204, 1.442695
  %v206 = vpow.pop %v205
  %v207 = vadd.f32 %v206, 1.0
  %v208 = vlog2.pop %v207
  %v209 = vmul.f32 %v208, 0.6931472
  %v210 = vadd.f32 %v202, %v209
  %v211 = vmax.f32 %v210, 1e-30
  %212 = vst.msk [vmem:[%s6] sm:$0xff] %vm200, %v211
  // Predicated region
  $region22: #{dcetm_forward.12} parent=0 // pred_check
    _
  $region23: #{dcetm_forward.12} parent=0 // pred_check_branch
    %214 = sbr.rel (0) target = $region25
  $region24: #{dcetm_forward.12} parent=0 // pred_region
    _
  $region25: #{dcetm_forward.12} parent=0 // pred_fallthru
    _
  // Predicated region
  $region26: #{dcetm_forward.12} parent=0 // pred_check
    _
  $region27: #{dcetm_forward.12} parent=0 // pred_check_branch
    %216 = sbr.rel (0) target = $region29
  $region28: #{dcetm_forward.12} parent=0 // pred_region
    _
  $region29: #{dcetm_forward.12} parent=0 // pred_fallthru
    _
  // Predicated region
  $region30: #{dcetm_forward.12} parent=0 // pred_check
    _
  $region31: #{dcetm_forward.12} parent=0 // pred_check_branch
    %218 = sbr.rel (0) target = $region33
  $region32: #{dcetm_forward.12} parent=0 // pred_region
    _
  $region33: #{dcetm_forward.12} parent=0 // pred_fallthru
    _
  // Predicated region
  $region34: #{dcetm_forward.12} parent=0 // pred_check
    _
  $region35: #{dcetm_forward.12} parent=0 // pred_check_branch
    %220 = sbr.rel (0) target = $region37
  $region36: #{dcetm_forward.12} parent=0 // pred_region
    _
  $region37: #{dcetm_forward.12} parent=0 // pred_fallthru
    _

// kernel: dcetm_forward.13
$region0: #{dcetm_forward.13}
  #allocation0 [shape = 'u32[]', space=smem, size = 0x4, offset = 0x4, fixed_abs, tag = 'smem constant byte address 0x4 - core index']
  #allocation1 [shape = 'u32[144,128]{1,0:T(1,128)}', space=vmem, size = 0x12000, scoped, tag = 'internal scratch']
  %s0 = inlined_call_operand.vmem [shape: f32[8,16], index: 0, kind: input, shape index: {}]
  %s1 = inlined_call_operand.vmem [shape: f32[16,16], index: 1, kind: input, shape index: {}]
  %s2 = inlined_call_operand.vmem [shape: f32[8,16], index: 2, kind: output, shape index: {}]
  %s3 = sld [smem:[#allocation0]]
  $region18: #{dcetm_forward.13} parent=0
    _
  %s5 = ssub.s32 1, %s3
  %s6 = scalar_select 0, %s5, %s3
  // Predicated region
  $region2: #{dcetm_forward.13} parent=0 // pred_check
    _
  $region3: #{dcetm_forward.13} parent=0 // pred_check_branch
    %8 = sbr.rel (0) target = $region5
  $region4: #{dcetm_forward.13} parent=0 // pred_region
    _
  $region5: #{dcetm_forward.13} parent=0 // pred_fallthru
    _
  // Predicated region
  $region6: #{dcetm_forward.13} parent=0 // pred_check
    _
  $region7: #{dcetm_forward.13} parent=0 // pred_check_branch
    %10 = sbr.rel (0) target = $region9
  $region8: #{dcetm_forward.13} parent=0 // pred_region
    _
  $region9: #{dcetm_forward.13} parent=0 // pred_fallthru
    _
  %v11 = vld [vmem:[%s0] sm:$0xff]
  %v12 = vld [vmem:[%s1] sm:$0xff]
  %v13 = vld [vmem:[%s1 + $0x8] sm:$0xff]
  %vm14 = vcmask 130048
  %v16 = vsel %vm14, %v11, 0
  %v19 = vsel %vm14, %v12, 0
  %v22 = vsel %vm14, %v13, 0
  %24 = vmatprep.subr.mxu0 0.0
  %25 = vmatpush1.xpose.msra.mxu0 %v19
  %26 = vmatprep.subr.mxu0 0.0
  %27 = vmatpush1.xpose.msra.mxu0 %v22
  %28 = vmatprep.subr.mxu0 0.0
  %29 = vmatpush1.xpose.msra.mxu0 0.0
  %30 = vmatprep.subr.mxu0 0.0
  %31 = vmatpush1.xpose.msra.mxu0 0.0
  %32 = vmatprep.subr.mxu0 0.0
  %33 = vmatpush1.xpose.msra.mxu0 0.0
  %34 = vmatprep.subr.mxu0 0.0
  %35 = vmatpush1.xpose.msra.mxu0 0.0
  %36 = vmatprep.subr.mxu0 0.0
  %37 = vmatpush1.xpose.msra.mxu0 0.0
  %38 = vmatprep.subr.mxu0 0.0
  %39 = vmatpush1.xpose.msra.mxu0 0.0
  %40 = vmatprep.subr.mxu0 0.0
  %41 = vmatpush1.xpose.msra.mxu0 0.0
  %42 = vmatprep.subr.mxu0 0.0
  %43 = vmatpush1.xpose.msra.mxu0 0.0
  %44 = vmatprep.subr.mxu0 0.0
  %45 = vmatpush1.xpose.msra.mxu0 0.0
  %46 = vmatprep.subr.mxu0 0.0
  %47 = vmatpush1.xpose.msra.mxu0 0.0
  %48 = vmatprep.subr.mxu0 0.0
  %49 = vmatpush1.xpose.msra.mxu0 0.0
  %50 = vmatprep.subr.mxu0 0.0
  %51 = vmatpush1.xpose.msra.mxu0 0.0
  %52 = vmatprep.subr.mxu0 0.0
  %53 = vmatpush1.xpose.msra.mxu0 0.0
  %54 = vmatprep.subr.mxu0 0.0
  %55 = vmatpush1.xpose.msra.mxu0 0.0
  %56 = vmatprep.subr.mxu0 0.0
  %57 = vmatpush1.xpose.msra.mxu0 0.0
  %58 = vmatprep.subr.mxu0 0.0
  %59 = vmatpush1.xpose.msra.mxu0 0.0
  %60 = vmatprep.subr.mxu0 0.0
  %61 = vmatpush1.xpose.msra.mxu0 0.0
  %62 = vmatprep.subr.mxu0 0.0
  %63 = vmatpush1.xpose.msra.mxu0 0.0
  %64 = vmatprep.subr.mxu0 0.0
  %65 = vmatpush1.xpose.msra.mxu0 0.0
  %66 = vmatprep.subr.mxu0 0.0
  %67 = vmatpush1.xpose.msra.mxu0 0.0
  %68 = vmatprep.subr.mxu0 0.0
  %69 = vmatpush1.xpose.msra.mxu0 0.0
  %70 = vmatprep.subr.mxu0 0.0
  %71 = vmatpush1.xpose.msra.mxu0 0.0
  %72 = vmatprep.subr.mxu0 0.0
  %73 = vmatpush1.xpose.msra.mxu0 0.0
  %74 = vmatprep.subr.mxu0 0.0
  %75 = vmatpush1.xpose.msra.mxu0 0.0
  %76 = vmatprep.subr.mxu0 0.0
  %77 = vmatpush1.xpose.msra.mxu0 0.0
  %78 = vmatprep.subr.mxu0 0.0
  %79 = vmatpush1.xpose.msra.mxu0 0.0
  %80 = vmatprep.subr.mxu0 0.0
  %81 = vmatpush1.xpose.msra.mxu0 0.0
  %82 = vmatprep.subr.mxu0 0.0
  %83 = vmatpush1.xpose.msra.mxu0 0.0
  %84 = vmatprep.subr.mxu0 0.0
  %85 = vmatpush1.xpose.msra.mxu0 0.0
  %86 = vmatprep.subr.mxu0 0.0
  %87 = vmatpush1.xpose.msra.mxu0 0.0
  %88 = vmatprep.mubr.f32.mxu0 0.0
  %89 = vmatmul.mubr.f32.gmra.mrb[0].mxu0 %v16
  %v90 = vpop.f32.mrb[0].mxu0
  %v91 = vadd.f32 0.0, %v90
  %v92 = vpop.f32.mrb[0].mxu0
  %93 = vdwg.mxu0
  %v94 = vsel %vm14, %v91, -inf
  %95 = vmax.xlane.f32.xlu0 %v94
  %v96 = vpop.xlane.xlu0 %95
  %v97 = vsub.f32 %v91, %v96
  %v98 = vmul.f32 %v97, 1.442695
  %v99 = vpow.pop %v98
  %v100 = vsel %vm14, %v99, 0.0
  %101 = vadd.xlane.f32.xlu0 %v100
  %v102 = vpop.xlane.xlu0 %101
  %v103 = vrcp.pop %v102
  %v104 = vmul.f32 %v99, %v103
  %105 = vst.msk [vmem:[%s2] sm:$0xff] %vm14, %v104
  // Predicated region
  $region10: #{dcetm_forward.13} parent=0 // pred_check
    _
  $region11: #{dcetm_forward.13} parent=0 // pred_check_branch
    %107 = sbr.rel (0) target = $region13
  $region12: #{dcetm_forward.13} parent=0 // pred_region
    _
  $region13: #{dcetm_forward.13} parent=0 // pred_fallthru
    _
  // Predicated region
  $region14: #{dcetm_forward.13} parent=0 // pred_check
    _
  $region15: #{dcetm_forward.13} parent=0 // pred_check_branch
    %109 = sbr.rel (0) target = $region17
  $region16: #{dcetm_forward.13} parent=0 // pred_region
    _
  $region17: #{dcetm_forward.13} parent=0 // pred_fallthru
    _

// kernel: dcetm_forward.14
$region0: #{dcetm_forward.14}
  #allocation0 [shape = 'u32[]', space=smem, size = 0x4, offset = 0x4, fixed_abs, tag = 'smem constant byte address 0x4 - core index']
  #allocation1 [shape = 'u32[144,128]{1,0:T(1,128)}', space=vmem, size = 0x12000, scoped, tag = 'internal scratch']
  %s0 = inlined_call_operand.vmem [shape: f32[8,8], index: 0, kind: input, shape index: {}]
  %s1 = inlined_call_operand.vmem [shape: f32[8,8], index: 1, kind: input, shape index: {}]
  %s2 = inlined_call_operand.vmem [shape: f32[50,8,8], index: 2, kind: input, shape index: {}]
  %s3 = inlined_call_operand.vmem [shape: f32[8,16], index: 3, kind: input, shape index: {}]
  %s4 = inlined_call_operand.vmem [shape: f32[8,8], index: 4, kind: output, shape index: {0}]
  %s5 = inlined_call_operand.vmem [shape: f32[8,16], index: 5, kind: output, shape index: {1}]
  %6 = xla_tuple %s4, %s5
  %s7 = sld [smem:[#allocation0]]
  $region34: #{dcetm_forward.14} parent=0
    _
  %s9 = ssub.s32 1, %s7
  %s10 = scalar_select 0, %s9, %s7
  // Predicated region
  $region2: #{dcetm_forward.14} parent=0 // pred_check
    _
  $region3: #{dcetm_forward.14} parent=0 // pred_check_branch
    %12 = sbr.rel (0) target = $region5
  $region4: #{dcetm_forward.14} parent=0 // pred_region
    _
  $region5: #{dcetm_forward.14} parent=0 // pred_fallthru
    _
  // Predicated region
  $region6: #{dcetm_forward.14} parent=0 // pred_check
    _
  $region7: #{dcetm_forward.14} parent=0 // pred_check_branch
    %14 = sbr.rel (0) target = $region9
  $region8: #{dcetm_forward.14} parent=0 // pred_region
    _
  $region9: #{dcetm_forward.14} parent=0 // pred_fallthru
    _
  // Predicated region
  $region10: #{dcetm_forward.14} parent=0 // pred_check
    _
  $region11: #{dcetm_forward.14} parent=0 // pred_check_branch
    %16 = sbr.rel (0) target = $region13
  $region12: #{dcetm_forward.14} parent=0 // pred_region
    _
  $region13: #{dcetm_forward.14} parent=0 // pred_fallthru
    _
  // Predicated region
  $region14: #{dcetm_forward.14} parent=0 // pred_check
    _
  $region15: #{dcetm_forward.14} parent=0 // pred_check_branch
    %18 = sbr.rel (0) target = $region17
  $region16: #{dcetm_forward.14} parent=0 // pred_region
    _
  $region17: #{dcetm_forward.14} parent=0 // pred_fallthru
    _
  %v19 = vld [vmem:[%s0] sm:$0xff]
  %v20 = vld [vmem:[%s1] sm:$0xff]
  %v21 = vld [vmem:[%s2] sm:$0xff]
  %v22 = vld [vmem:[%s2 + $0x8] sm:$0xff]
  %v23 = vld [vmem:[%s2 + $0x10] sm:$0xff]
  %v24 = vld [vmem:[%s2 + $0x18] sm:$0xff]
  %v25 = vld [vmem:[%s2 + $0x20] sm:$0xff]
  %v26 = vld [vmem:[%s2 + $0x28] sm:$0xff]
  %v27 = vld [vmem:[%s2 + $0x30] sm:$0xff]
  %v28 = vld [vmem:[%s2 + $0x38] sm:$0xff]
  %v29 = vld [vmem:[%s2 + $0x40] sm:$0xff]
  %v30 = vld [vmem:[%s2 + $0x48] sm:$0xff]
  %v31 = vld [vmem:[%s2 + $0x50] sm:$0xff]
  %v32 = vld [vmem:[%s2 + $0x58] sm:$0xff]
  %v33 = vld [vmem:[%s2 + $0x60] sm:$0xff]
  %v34 = vld [vmem:[%s2 + $0x68] sm:$0xff]
  %v35 = vld [vmem:[%s2 + $0x70] sm:$0xff]
  %v36 = vld [vmem:[%s2 + $0x78] sm:$0xff]
  %v37 = vld [vmem:[%s2 + $0x80] sm:$0xff]
  %v38 = vld [vmem:[%s2 + $0x88] sm:$0xff]
  %v39 = vld [vmem:[%s2 + $0x90] sm:$0xff]
  %v40 = vld [vmem:[%s2 + $0x98] sm:$0xff]
  %v41 = vld [vmem:[%s2 + $0xa0] sm:$0xff]
  %v42 = vld [vmem:[%s2 + $0xa8] sm:$0xff]
  %v43 = vld [vmem:[%s2 + $0xb0] sm:$0xff]
  %v44 = vld [vmem:[%s2 + $0xb8] sm:$0xff]
  %v45 = vld [vmem:[%s2 + $0xc0] sm:$0xff]
  %v46 = vld [vmem:[%s2 + $0xc8] sm:$0xff]
  %v47 = vld [vmem:[%s2 + $0xd0] sm:$0xff]
  %v48 = vld [vmem:[%s2 + $0xd8] sm:$0xff]
  %v49 = vld [vmem:[%s2 + $0xe0] sm:$0xff]
  %v50 = vld [vmem:[%s2 + $0xe8] sm:$0xff]
  %v51 = vld [vmem:[%s2 + $0xf0] sm:$0xff]
  %v52 = vld [vmem:[%s2 + $0xf8] sm:$0xff]
  %v53 = vld [vmem:[%s2 + $0x100] sm:$0xff]
  %v54 = vld [vmem:[%s2 + $0x108] sm:$0xff]
  %v55 = vld [vmem:[%s2 + $0x110] sm:$0xff]
  %v56 = vld [vmem:[%s2 + $0x118] sm:$0xff]
  %v57 = vld [vmem:[%s2 + $0x120] sm:$0xff]
  %v58 = vld [vmem:[%s2 + $0x128] sm:$0xff]
  %v59 = vld [vmem:[%s2 + $0x130] sm:$0xff]
  %v60 = vld [vmem:[%s2 + $0x138] sm:$0xff]
  %v61 = vld [vmem:[%s2 + $0x140] sm:$0xff]
  %v62 = vld [vmem:[%s2 + $0x148] sm:$0xff]
  %v63 = vld [vmem:[%s2 + $0x150] sm:$0xff]
  %v64 = vld [vmem:[%s2 + $0x158] sm:$0xff]
  %v65 = vld [vmem:[%s2 + $0x160] sm:$0xff]
  %v66 = vld [vmem:[%s2 + $0x168] sm:$0xff]
  %v67 = vld [vmem:[%s2 + $0x170] sm:$0xff]
  %v68 = vld [vmem:[%s2 + $0x178] sm:$0xff]
  %v69 = vld [vmem:[%s2 + $0x180] sm:$0xff]
  %v70 = vld [vmem:[%s2 + $0x188] sm:$0xff]
  %v71 = vsub.f32 1.0, %v21
  %v72 = vsub.f32 1.0, %v22
  %v73 = vsub.f32 1.0, %v23
  %v74 = vsub.f32 1.0, %v24
  %v75 = vsub.f32 1.0, %v25
  %v76 = vsub.f32 1.0, %v26
  %v77 = vsub.f32 1.0, %v27
  %v78 = vsub.f32 1.0, %v28
  %v79 = vsub.f32 1.0, %v29
  %v80 = vsub.f32 1.0, %v30
  %v81 = vsub.f32 1.0, %v31
  %v82 = vsub.f32 1.0, %v32
  %v83 = vsub.f32 1.0, %v33
  %v84 = vsub.f32 1.0, %v34
  %v85 = vsub.f32 1.0, %v35
  %v86 = vsub.f32 1.0, %v36
  %v87 = vsub.f32 1.0, %v37
  %v88 = vsub.f32 1.0, %v38
  %v89 = vsub.f32 1.0, %v39
  %v90 = vsub.f32 1.0, %v40
  %v91 = vsub.f32 1.0, %v41
  %v92 = vsub.f32 1.0, %v42
  %v93 = vsub.f32 1.0, %v43
  %v94 = vsub.f32 1.0, %v44
  %v95 = vsub.f32 1.0, %v45
  %v96 = vsub.f32 1.0, %v46
  %v97 = vsub.f32 1.0, %v47
  %v98 = vsub.f32 1.0, %v48
  %v99 = vsub.f32 1.0, %v49
  %v100 = vsub.f32 1.0, %v50
  %v101 = vsub.f32 1.0, %v51
  %v102 = vsub.f32 1.0, %v52
  %v103 = vsub.f32 1.0, %v53
  %v104 = vsub.f32 1.0, %v54
  %v105 = vsub.f32 1.0, %v55
  %v106 = vsub.f32 1.0, %v56
  %v107 = vsub.f32 1.0, %v57
  %v108 = vsub.f32 1.0, %v58
  %v109 = vsub.f32 1.0, %v59
  %v110 = vsub.f32 1.0, %v60
  %v111 = vsub.f32 1.0, %v61
  %v112 = vsub.f32 1.0, %v62
  %v113 = vsub.f32 1.0, %v63
  %v114 = vsub.f32 1.0, %v64
  %v115 = vsub.f32 1.0, %v65
  %v116 = vsub.f32 1.0, %v66
  %v117 = vsub.f32 1.0, %v67
  %v118 = vsub.f32 1.0, %v68
  %v119 = vsub.f32 1.0, %v69
  %v120 = vsub.f32 1.0, %v70
  %v121 = vmax.f32 %v71, 1e-30
  %v122 = vmax.f32 %v72, 1e-30
  %v123 = vmax.f32 %v73, 1e-30
  %v124 = vmax.f32 %v74, 1e-30
  %v125 = vmax.f32 %v75, 1e-30
  %v126 = vmax.f32 %v76, 1e-30
  %v127 = vmax.f32 %v77, 1e-30
  %v128 = vmax.f32 %v78, 1e-30
  %v129 = vmax.f32 %v79, 1e-30
  %v130 = vmax.f32 %v80, 1e-30
  %v131 = vmax.f32 %v81, 1e-30
  %v132 = vmax.f32 %v82, 1e-30
  %v133 = vmax.f32 %v83, 1e-30
  %v134 = vmax.f32 %v84, 1e-30
  %v135 = vmax.f32 %v85, 1e-30
  %v136 = vmax.f32 %v86, 1e-30
  %v137 = vmax.f32 %v87, 1e-30
  %v138 = vmax.f32 %v88, 1e-30
  %v139 = vmax.f32 %v89, 1e-30
  %v140 = vmax.f32 %v90, 1e-30
  %v141 = vmax.f32 %v91, 1e-30
  %v142 = vmax.f32 %v92, 1e-30
  %v143 = vmax.f32 %v93, 1e-30
  %v144 = vmax.f32 %v94, 1e-30
  %v145 = vmax.f32 %v95, 1e-30
  %v146 = vmax.f32 %v96, 1e-30
  %v147 = vmax.f32 %v97, 1e-30
  %v148 = vmax.f32 %v98, 1e-30
  %v149 = vmax.f32 %v99, 1e-30
  %v150 = vmax.f32 %v100, 1e-30
  %v151 = vmax.f32 %v101, 1e-30
  %v152 = vmax.f32 %v102, 1e-30
  %v153 = vmax.f32 %v103, 1e-30
  %v154 = vmax.f32 %v104, 1e-30
  %v155 = vmax.f32 %v105, 1e-30
  %v156 = vmax.f32 %v106, 1e-30
  %v157 = vmax.f32 %v107, 1e-30
  %v158 = vmax.f32 %v108, 1e-30
  %v159 = vmax.f32 %v109, 1e-30
  %v160 = vmax.f32 %v110, 1e-30
  %v161 = vmax.f32 %v111, 1e-30
  %v162 = vmax.f32 %v112, 1e-30
  %v163 = vmax.f32 %v113, 1e-30
  %v164 = vmax.f32 %v114, 1e-30
  %v165 = vmax.f32 %v115, 1e-30
  %v166 = vmax.f32 %v116, 1e-30
  %v167 = vmax.f32 %v117, 1e-30
  %v168 = vmax.f32 %v118, 1e-30
  %v169 = vmax.f32 %v119, 1e-30
  %v170 = vmax.f32 %v120, 1e-30
  %v171 = vlog2.pop %v121
  %v172 = vmul.f32 %v171, 0.6931472
  %v173 = vlog2.pop %v122
  %v174 = vmul.f32 %v173, 0.6931472
  %v175 = vlog2.pop %v123
  %v176 = vmul.f32 %v175, 0.6931472
  %v177 = vlog2.pop %v124
  %v178 = vmul.f32 %v177, 0.6931472
  %v179 = vlog2.pop %v125
  %v180 = vmul.f32 %v179, 0.6931472
  %v181 = vlog2.pop %v126
  %v182 = vmul.f32 %v181, 0.6931472
  %v183 = vlog2.pop %v127
  %v184 = vmul.f32 %v183, 0.6931472
  %v185 = vlog2.pop %v128
  %v186 = vmul.f32 %v185, 0.6931472
  %v187 = vlog2.pop %v129
  %v188 = vmul.f32 %v187, 0.6931472
  %v189 = vlog2.pop %v130
  %v190 = vmul.f32 %v189, 0.6931472
  %v191 = vlog2.pop %v131
  %v192 = vmul.f32 %v191, 0.6931472
  %v193 = vlog2.pop %v132
  %v194 = vmul.f32 %v193, 0.6931472
  %v195 = vlog2.pop %v133
  %v196 = vmul.f32 %v195, 0.6931472
  %v197 = vlog2.pop %v134
  %v198 = vmul.f32 %v197, 0.6931472
  %v199 = vlog2.pop %v135
  %v200 = vmul.f32 %v199, 0.6931472
  %v201 = vlog2.pop %v136
  %v202 = vmul.f32 %v201, 0.6931472
  %v203 = vlog2.pop %v137
  %v204 = vmul.f32 %v203, 0.6931472
  %v205 = vlog2.pop %v138
  %v206 = vmul.f32 %v205, 0.6931472
  %v207 = vlog2.pop %v139
  %v208 = vmul.f32 %v207, 0.6931472
  %v209 = vlog2.pop %v140
  %v210 = vmul.f32 %v209, 0.6931472
  %v211 = vlog2.pop %v141
  %v212 = vmul.f32 %v211, 0.6931472
  %v213 = vlog2.pop %v142
  %v214 = vmul.f32 %v213, 0.6931472
  %v215 = vlog2.pop %v143
  %v216 = vmul.f32 %v215, 0.6931472
  %v217 = vlog2.pop %v144
  %v218 = vmul.f32 %v217, 0.6931472
  %v219 = vlog2.pop %v145
  %v220 = vmul.f32 %v219, 0.6931472
  %v221 = vlog2.pop %v146
  %v222 = vmul.f32 %v221, 0.6931472
  %v223 = vlog2.pop %v147
  %v224 = vmul.f32 %v223, 0.6931472
  %v225 = vlog2.pop %v148
  %v226 = vmul.f32 %v225, 0.6931472
  %v227 = vlog2.pop %v149
  %v228 = vmul.f32 %v227, 0.6931472
  %v229 = vlog2.pop %v150
  %v230 = vmul.f32 %v229, 0.6931472
  %v231 = vlog2.pop %v151
  %v232 = vmul.f32 %v231, 0.6931472
  %v233 = vlog2.pop %v152
  %v234 = vmul.f32 %v233, 0.6931472
  %v235 = vlog2.pop %v153
  %v236 = vmul.f32 %v235, 0.6931472
  %v237 = vlog2.pop %v154
  %v238 = vmul.f32 %v237, 0.6931472
  %v239 = vlog2.pop %v155
  %v240 = vmul.f32 %v239, 0.6931472
  %v241 = vlog2.pop %v156
  %v242 = vmul.f32 %v241, 0.6931472
  %v243 = vlog2.pop %v157
  %v244 = vmul.f32 %v243, 0.6931472
  %v245 = vlog2.pop %v158
  %v246 = vmul.f32 %v245, 0.6931472
  %v247 = vlog2.pop %v159
  %v248 = vmul.f32 %v247, 0.6931472
  %v249 = vlog2.pop %v160
  %v250 = vmul.f32 %v249, 0.6931472
  %v251 = vlog2.pop %v161
  %v252 = vmul.f32 %v251, 0.6931472
  %v253 = vlog2.pop %v162
  %v254 = vmul.f32 %v253, 0.6931472
  %v255 = vlog2.pop %v163
  %v256 = vmul.f32 %v255, 0.6931472
  %v257 = vlog2.pop %v164
  %v258 = vmul.f32 %v257, 0.6931472
  %v259 = vlog2.pop %v165
  %v260 = vmul.f32 %v259, 0.6931472
  %v261 = vlog2.pop %v166
  %v262 = vmul.f32 %v261, 0.6931472
  %v263 = vlog2.pop %v167
  %v264 = vmul.f32 %v263, 0.6931472
  %v265 = vlog2.pop %v168
  %v266 = vmul.f32 %v265, 0.6931472
  %v267 = vlog2.pop %v169
  %v268 = vmul.f32 %v267, 0.6931472
  %v269 = vlog2.pop %v170
  %v270 = vmul.f32 %v269, 0.6931472
  %v271 = vsub.f32 0.0, %v172
  %v272 = vsub.f32 0.0, %v174
  %v273 = vsub.f32 0.0, %v176
  %v274 = vsub.f32 0.0, %v178
  %v275 = vsub.f32 0.0, %v180
  %v276 = vsub.f32 0.0, %v182
  %v277 = vsub.f32 0.0, %v184
  %v278 = vsub.f32 0.0, %v186
  %v279 = vsub.f32 0.0, %v188
  %v280 = vsub.f32 0.0, %v190
  %v281 = vsub.f32 0.0, %v192
  %v282 = vsub.f32 0.0, %v194
  %v283 = vsub.f32 0.0, %v196
  %v284 = vsub.f32 0.0, %v198
  %v285 = vsub.f32 0.0, %v200
  %v286 = vsub.f32 0.0, %v202
  %v287 = vsub.f32 0.0, %v204
  %v288 = vsub.f32 0.0, %v206
  %v289 = vsub.f32 0.0, %v208
  %v290 = vsub.f32 0.0, %v210
  %v291 = vsub.f32 0.0, %v212
  %v292 = vsub.f32 0.0, %v214
  %v293 = vsub.f32 0.0, %v216
  %v294 = vsub.f32 0.0, %v218
  %v295 = vsub.f32 0.0, %v220
  %v296 = vsub.f32 0.0, %v222
  %v297 = vsub.f32 0.0, %v224
  %v298 = vsub.f32 0.0, %v226
  %v299 = vsub.f32 0.0, %v228
  %v300 = vsub.f32 0.0, %v230
  %v301 = vsub.f32 0.0, %v232
  %v302 = vsub.f32 0.0, %v234
  %v303 = vsub.f32 0.0, %v236
  %v304 = vsub.f32 0.0, %v238
  %v305 = vsub.f32 0.0, %v240
  %v306 = vsub.f32 0.0, %v242
  %v307 = vsub.f32 0.0, %v244
  %v308 = vsub.f32 0.0, %v246
  %v309 = vsub.f32 0.0, %v248
  %v310 = vsub.f32 0.0, %v250
  %v311 = vsub.f32 0.0, %v252
  %v312 = vsub.f32 0.0, %v254
  %v313 = vsub.f32 0.0, %v256
  %v314 = vsub.f32 0.0, %v258
  %v315 = vsub.f32 0.0, %v260
  %v316 = vsub.f32 0.0, %v262
  %v317 = vsub.f32 0.0, %v264
  %v318 = vsub.f32 0.0, %v266
  %v319 = vsub.f32 0.0, %v268
  %v320 = vsub.f32 0.0, %v270
  %vm321 = vcmp.gt.f32.partialorder %v271, 0.0
  %vm322 = vcmp.gt.f32.partialorder %v272, 0.0
  %vm323 = vcmp.gt.f32.partialorder %v273, 0.0
  %vm324 = vcmp.gt.f32.partialorder %v274, 0.0
  %vm325 = vcmp.gt.f32.partialorder %v275, 0.0
  %vm326 = vcmp.gt.f32.partialorder %v276, 0.0
  %vm327 = vcmp.gt.f32.partialorder %v277, 0.0
  %vm328 = vcmp.gt.f32.partialorder %v278, 0.0
  %vm329 = vcmp.gt.f32.partialorder %v279, 0.0
  %vm330 = vcmp.gt.f32.partialorder %v280, 0.0
  %vm331 = vcmp.gt.f32.partialorder %v281, 0.0
  %vm332 = vcmp.gt.f32.partialorder %v282, 0.0
  %vm333 = vcmp.gt.f32.partialorder %v283, 0.0
  %vm334 = vcmp.gt.f32.partialorder %v284, 0.0
  %vm335 = vcmp.gt.f32.partialorder %v285, 0.0
  %vm336 = vcmp.gt.f32.partialorder %v286, 0.0
  %vm337 = vcmp.gt.f32.partialorder %v287, 0.0
  %vm338 = vcmp.gt.f32.partialorder %v288, 0.0
  %vm339 = vcmp.gt.f32.partialorder %v289, 0.0
  %vm340 = vcmp.gt.f32.partialorder %v290, 0.0
  %vm341 = vcmp.gt.f32.partialorder %v291, 0.0
  %vm342 = vcmp.gt.f32.partialorder %v292, 0.0
  %vm343 = vcmp.gt.f32.partialorder %v293, 0.0
  %vm344 = vcmp.gt.f32.partialorder %v294, 0.0
  %vm345 = vcmp.gt.f32.partialorder %v295, 0.0
  %vm346 = vcmp.gt.f32.partialorder %v296, 0.0
  %vm347 = vcmp.gt.f32.partialorder %v297, 0.0
  %vm348 = vcmp.gt.f32.partialorder %v298, 0.0
  %vm349 = vcmp.gt.f32.partialorder %v299, 0.0
  %vm350 = vcmp.gt.f32.partialorder %v300, 0.0
  %vm351 = vcmp.gt.f32.partialorder %v301, 0.0
  %vm352 = vcmp.gt.f32.partialorder %v302, 0.0
  %vm353 = vcmp.gt.f32.partialorder %v303, 0.0
  %vm354 = vcmp.gt.f32.partialorder %v304, 0.0
  %vm355 = vcmp.gt.f32.partialorder %v305, 0.0
  %vm356 = vcmp.gt.f32.partialorder %v306, 0.0
  %vm357 = vcmp.gt.f32.partialorder %v307, 0.0
  %vm358 = vcmp.gt.f32.partialorder %v308, 0.0
  %vm359 = vcmp.gt.f32.partialorder %v309, 0.0
  %vm360 = vcmp.gt.f32.partialorder %v310, 0.0
  %vm361 = vcmp.gt.f32.partialorder %v311, 0.0
  %vm362 = vcmp.gt.f32.partialorder %v312, 0.0
  %vm363 = vcmp.gt.f32.partialorder %v313, 0.0
  %vm364 = vcmp.gt.f32.partialorder %v314, 0.0
  %vm365 = vcmp.gt.f32.partialorder %v315, 0.0
  %vm366 = vcmp.gt.f32.partialorder %v316, 0.0
  %vm367 = vcmp.gt.f32.partialorder %v317, 0.0
  %vm368 = vcmp.gt.f32.partialorder %v318, 0.0
  %vm369 = vcmp.gt.f32.partialorder %v319, 0.0
  %vm370 = vcmp.gt.f32.partialorder %v320, 0.0
  %v371 = vsel %vm321, %v271, 1.0
  %v372 = vsel %vm322, %v272, 1.0
  %v373 = vsel %vm323, %v273, 1.0
  %v374 = vsel %vm324, %v274, 1.0
  %v375 = vsel %vm325, %v275, 1.0
  %v376 = vsel %vm326, %v276, 1.0
  %v377 = vsel %vm327, %v277, 1.0
  %v378 = vsel %vm328, %v278, 1.0
  %v379 = vsel %vm329, %v279, 1.0
  %v380 = vsel %vm330, %v280, 1.0
  %v381 = vsel %vm331, %v281, 1.0
  %v382 = vsel %vm332, %v282, 1.0
  %v383 = vsel %vm333, %v283, 1.0
  %v384 = vsel %vm334, %v284, 1.0
  %v385 = vsel %vm335, %v285, 1.0
  %v386 = vsel %vm336, %v286, 1.0
  %v387 = vsel %vm337, %v287, 1.0
  %v388 = vsel %vm338, %v288, 1.0
  %v389 = vsel %vm339, %v289, 1.0
  %v390 = vsel %vm340, %v290, 1.0
  %v391 = vsel %vm341, %v291, 1.0
  %v392 = vsel %vm342, %v292, 1.0
  %v393 = vsel %vm343, %v293, 1.0
  %v394 = vsel %vm344, %v294, 1.0
  %v395 = vsel %vm345, %v295, 1.0
  %v396 = vsel %vm346, %v296, 1.0
  %v397 = vsel %vm347, %v297, 1.0
  %v398 = vsel %vm348, %v298, 1.0
  %v399 = vsel %vm349, %v299, 1.0
  %v400 = vsel %vm350, %v300, 1.0
  %v401 = vsel %vm351, %v301, 1.0
  %v402 = vsel %vm352, %v302, 1.0
  %v403 = vsel %vm353, %v303, 1.0
  %v404 = vsel %vm354, %v304, 1.0
  %v405 = vsel %vm355, %v305, 1.0
  %v406 = vsel %vm356, %v306, 1.0
  %v407 = vsel %vm357, %v307, 1.0
  %v408 = vsel %vm358, %v308, 1.0
  %v409 = vsel %vm359, %v309, 1.0
  %v410 = vsel %vm360, %v310, 1.0
  %v411 = vsel %vm361, %v311, 1.0
  %v412 = vsel %vm362, %v312, 1.0
  %v413 = vsel %vm363, %v313, 1.0
  %v414 = vsel %vm364, %v314, 1.0
  %v415 = vsel %vm365, %v315, 1.0
  %v416 = vsel %vm366, %v316, 1.0
  %v417 = vsel %vm367, %v317, 1.0
  %v418 = vsel %vm368, %v318, 1.0
  %v419 = vsel %vm369, %v319, 1.0
  %v420 = vsel %vm370, %v320, 1.0
  %v421 = vlog2.pop %v371
  %v422 = vmul.f32 %v421, 0.6931472
  %v423 = vlog2.pop %v372
  %v424 = vmul.f32 %v423, 0.6931472
  %v425 = vlog2.pop %v373
  %v426 = vmul.f32 %v425, 0.6931472
  %v427 = vlog2.pop %v374
  %v428 = vmul.f32 %v427, 0.6931472
  %v429 = vlog2.pop %v375
  %v430 = vmul.f32 %v429, 0.6931472
  %v431 = vlog2.pop %v376
  %v432 = vmul.f32 %v431, 0.6931472
  %v433 = vlog2.pop %v377
  %v434 = vmul.f32 %v433, 0.6931472
  %v435 = vlog2.pop %v378
  %v436 = vmul.f32 %v435, 0.6931472
  %v437 = vlog2.pop %v379
  %v438 = vmul.f32 %v437, 0.6931472
  %v439 = vlog2.pop %v380
  %v440 = vmul.f32 %v439, 0.6931472
  %v441 = vlog2.pop %v381
  %v442 = vmul.f32 %v441, 0.6931472
  %v443 = vlog2.pop %v382
  %v444 = vmul.f32 %v443, 0.6931472
  %v445 = vlog2.pop %v383
  %v446 = vmul.f32 %v445, 0.6931472
  %v447 = vlog2.pop %v384
  %v448 = vmul.f32 %v447, 0.6931472
  %v449 = vlog2.pop %v385
  %v450 = vmul.f32 %v449, 0.6931472
  %v451 = vlog2.pop %v386
  %v452 = vmul.f32 %v451, 0.6931472
  %v453 = vlog2.pop %v387
  %v454 = vmul.f32 %v453, 0.6931472
  %v455 = vlog2.pop %v388
  %v456 = vmul.f32 %v455, 0.6931472
  %v457 = vlog2.pop %v389
  %v458 = vmul.f32 %v457, 0.6931472
  %v459 = vlog2.pop %v390
  %v460 = vmul.f32 %v459, 0.6931472
  %v461 = vlog2.pop %v391
  %v462 = vmul.f32 %v461, 0.6931472
  %v463 = vlog2.pop %v392
  %v464 = vmul.f32 %v463, 0.6931472
  %v465 = vlog2.pop %v393
  %v466 = vmul.f32 %v465, 0.6931472
  %v467 = vlog2.pop %v394
  %v468 = vmul.f32 %v467, 0.6931472
  %v469 = vlog2.pop %v395
  %v470 = vmul.f32 %v469, 0.6931472
  %v471 = vlog2.pop %v396
  %v472 = vmul.f32 %v471, 0.6931472
  %v473 = vlog2.pop %v397
  %v474 = vmul.f32 %v473, 0.6931472
  %v475 = vlog2.pop %v398
  %v476 = vmul.f32 %v475, 0.6931472
  %v477 = vlog2.pop %v399
  %v478 = vmul.f32 %v477, 0.6931472
  %v479 = vlog2.pop %v400
  %v480 = vmul.f32 %v479, 0.6931472
  %v481 = vlog2.pop %v401
  %v482 = vmul.f32 %v481, 0.6931472
  %v483 = vlog2.pop %v402
  %v484 = vmul.f32 %v483, 0.6931472
  %v485 = vlog2.pop %v403
  %v486 = vmul.f32 %v485, 0.6931472
  %v487 = vlog2.pop %v404
  %v488 = vmul.f32 %v487, 0.6931472
  %v489 = vlog2.pop %v405
  %v490 = vmul.f32 %v489, 0.6931472
  %v491 = vlog2.pop %v406
  %v492 = vmul.f32 %v491, 0.6931472
  %v493 = vlog2.pop %v407
  %v494 = vmul.f32 %v493, 0.6931472
  %v495 = vlog2.pop %v408
  %v496 = vmul.f32 %v495, 0.6931472
  %v497 = vlog2.pop %v409
  %v498 = vmul.f32 %v497, 0.6931472
  %v499 = vlog2.pop %v410
  %v500 = vmul.f32 %v499, 0.6931472
  %v501 = vlog2.pop %v411
  %v502 = vmul.f32 %v501, 0.6931472
  %v503 = vlog2.pop %v412
  %v504 = vmul.f32 %v503, 0.6931472
  %v505 = vlog2.pop %v413
  %v506 = vmul.f32 %v505, 0.6931472
  %v507 = vlog2.pop %v414
  %v508 = vmul.f32 %v507, 0.6931472
  %v509 = vlog2.pop %v415
  %v510 = vmul.f32 %v509, 0.6931472
  %v511 = vlog2.pop %v416
  %v512 = vmul.f32 %v511, 0.6931472
  %v513 = vlog2.pop %v417
  %v514 = vmul.f32 %v513, 0.6931472
  %v515 = vlog2.pop %v418
  %v516 = vmul.f32 %v515, 0.6931472
  %v517 = vlog2.pop %v419
  %v518 = vmul.f32 %v517, 0.6931472
  %v519 = vlog2.pop %v420
  %v520 = vmul.f32 %v519, 0.6931472
  %v521 = vmul.f32 %v19, %v422
  %v522 = vmul.f32 %v19, %v424
  %v523 = vmul.f32 %v19, %v426
  %v524 = vmul.f32 %v19, %v428
  %v525 = vmul.f32 %v19, %v430
  %v526 = vmul.f32 %v19, %v432
  %v527 = vmul.f32 %v19, %v434
  %v528 = vmul.f32 %v19, %v436
  %v529 = vmul.f32 %v19, %v438
  %v530 = vmul.f32 %v19, %v440
  %v531 = vmul.f32 %v19, %v442
  %v532 = vmul.f32 %v19, %v444
  %v533 = vmul.f32 %v19, %v446
  %v534 = vmul.f32 %v19, %v448
  %v535 = vmul.f32 %v19, %v450
  %v536 = vmul.f32 %v19, %v452
  %v537 = vmul.f32 %v19, %v454
  %v538 = vmul.f32 %v19, %v456
  %v539 = vmul.f32 %v19, %v458
  %v540 = vmul.f32 %v19, %v460
  %v541 = vmul.f32 %v19, %v462
  %v542 = vmul.f32 %v19, %v464
  %v543 = vmul.f32 %v19, %v466
  %v544 = vmul.f32 %v19, %v468
  %v545 = vmul.f32 %v19, %v470
  %v546 = vmul.f32 %v19, %v472
  %v547 = vmul.f32 %v19, %v474
  %v548 = vmul.f32 %v19, %v476
  %v549 = vmul.f32 %v19, %v478
  %v550 = vmul.f32 %v19, %v480
  %v551 = vmul.f32 %v19, %v482
  %v552 = vmul.f32 %v19, %v484
  %v553 = vmul.f32 %v19, %v486
  %v554 = vmul.f32 %v19, %v488
  %v555 = vmul.f32 %v19, %v490
  %v556 = vmul.f32 %v19, %v492
  %v557 = vmul.f32 %v19, %v494
  %v558 = vmul.f32 %v19, %v496
  %v559 = vmul.f32 %v19, %v498
  %v560 = vmul.f32 %v19, %v500
  %v561 = vmul.f32 %v19, %v502
  %v562 = vmul.f32 %v19, %v504
  %v563 = vmul.f32 %v19, %v506
  %v564 = vmul.f32 %v19, %v508
  %v565 = vmul.f32 %v19, %v510
  %v566 = vmul.f32 %v19, %v512
  %v567 = vmul.f32 %v19, %v514
  %v568 = vmul.f32 %v19, %v516
  %v569 = vmul.f32 %v19, %v518
  %v570 = vmul.f32 %v19, %v520
  %v571 = vmul.f32 %v521, 1.442695
  %v572 = vpow.pop %v571
  %v573 = vmul.f32 %v522, 1.442695
  %v574 = vpow.pop %v573
  %v575 = vmul.f32 %v523, 1.442695
  %v576 = vpow.pop %v575
  %v577 = vmul.f32 %v524, 1.442695
  %v578 = vpow.pop %v577
  %v579 = vmul.f32 %v525, 1.442695
  %v580 = vpow.pop %v579
  %v581 = vmul.f32 %v526, 1.442695
  %v582 = vpow.pop %v581
  %v583 = vmul.f32 %v527, 1.442695
  %v584 = vpow.pop %v583
  %v585 = vmul.f32 %v528, 1.442695
  %v586 = vpow.pop %v585
  %v587 = vmul.f32 %v529, 1.442695
  %v588 = vpow.pop %v587
  %v589 = vmul.f32 %v530, 1.442695
  %v590 = vpow.pop %v589
  %v591 = vmul.f32 %v531, 1.442695
  %v592 = vpow.pop %v591
  %v593 = vmul.f32 %v532, 1.442695
  %v594 = vpow.pop %v593
  %v595 = vmul.f32 %v533, 1.442695
  %v596 = vpow.pop %v595
  %v597 = vmul.f32 %v534, 1.442695
  %v598 = vpow.pop %v597
  %v599 = vmul.f32 %v535, 1.442695
  %v600 = vpow.pop %v599
  %v601 = vmul.f32 %v536, 1.442695
  %v602 = vpow.pop %v601
  %v603 = vmul.f32 %v537, 1.442695
  %v604 = vpow.pop %v603
  %v605 = vmul.f32 %v538, 1.442695
  %v606 = vpow.pop %v605
  %v607 = vmul.f32 %v539, 1.442695
  %v608 = vpow.pop %v607
  %v609 = vmul.f32 %v540, 1.442695
  %v610 = vpow.pop %v609
  %v611 = vmul.f32 %v541, 1.442695
  %v612 = vpow.pop %v611
  %v613 = vmul.f32 %v542, 1.442695
  %v614 = vpow.pop %v613
  %v615 = vmul.f32 %v543, 1.442695
  %v616 = vpow.pop %v615
  %v617 = vmul.f32 %v544, 1.442695
  %v618 = vpow.pop %v617
  %v619 = vmul.f32 %v545, 1.442695
  %v620 = vpow.pop %v619
  %v621 = vmul.f32 %v546, 1.442695
  %v622 = vpow.pop %v621
  %v623 = vmul.f32 %v547, 1.442695
  %v624 = vpow.pop %v623
  %v625 = vmul.f32 %v548, 1.442695
  %v626 = vpow.pop %v625
  %v627 = vmul.f32 %v549, 1.442695
  %v628 = vpow.pop %v627
  %v629 = vmul.f32 %v550, 1.442695
  %v630 = vpow.pop %v629
  %v631 = vmul.f32 %v551, 1.442695
  %v632 = vpow.pop %v631
  %v633 = vmul.f32 %v552, 1.442695
  %v634 = vpow.pop %v633
  %v635 = vmul.f32 %v553, 1.442695
  %v636 = vpow.pop %v635
  %v637 = vmul.f32 %v554, 1.442695
  %v638 = vpow.pop %v637
  %v639 = vmul.f32 %v555, 1.442695
  %v640 = vpow.pop %v639
  %v641 = vmul.f32 %v556, 1.442695
  %v642 = vpow.pop %v641
  %v643 = vmul.f32 %v557, 1.442695
  %v644 = vpow.pop %v643
  %v645 = vmul.f32 %v558, 1.442695
  %v646 = vpow.pop %v645
  %v647 = vmul.f32 %v559, 1.442695
  %v648 = vpow.pop %v647
  %v649 = vmul.f32 %v560, 1.442695
  %v650 = vpow.pop %v649
  %v651 = vmul.f32 %v561, 1.442695
  %v652 = vpow.pop %v651
  %v653 = vmul.f32 %v562, 1.442695
  %v654 = vpow.pop %v653
  %v655 = vmul.f32 %v563, 1.442695
  %v656 = vpow.pop %v655
  %v657 = vmul.f32 %v564, 1.442695
  %v658 = vpow.pop %v657
  %v659 = vmul.f32 %v565, 1.442695
  %v660 = vpow.pop %v659
  %v661 = vmul.f32 %v566, 1.442695
  %v662 = vpow.pop %v661
  %v663 = vmul.f32 %v567, 1.442695
  %v664 = vpow.pop %v663
  %v665 = vmul.f32 %v568, 1.442695
  %v666 = vpow.pop %v665
  %v667 = vmul.f32 %v569, 1.442695
  %v668 = vpow.pop %v667
  %v669 = vmul.f32 %v570, 1.442695
  %v670 = vpow.pop %v669
  %v671 = vsel %vm321, %v572, 0.0
  %v672 = vsel %vm322, %v574, 0.0
  %v673 = vsel %vm323, %v576, 0.0
  %v674 = vsel %vm324, %v578, 0.0
  %v675 = vsel %vm325, %v580, 0.0
  %v676 = vsel %vm326, %v582, 0.0
  %v677 = vsel %vm327, %v584, 0.0
  %v678 = vsel %vm328, %v586, 0.0
  %v679 = vsel %vm329, %v588, 0.0
  %v680 = vsel %vm330, %v590, 0.0
  %v681 = vsel %vm331, %v592, 0.0
  %v682 = vsel %vm332, %v594, 0.0
  %v683 = vsel %vm333, %v596, 0.0
  %v684 = vsel %vm334, %v598, 0.0
  %v685 = vsel %vm335, %v600, 0.0
  %v686 = vsel %vm336, %v602, 0.0
  %v687 = vsel %vm337, %v604, 0.0
  %v688 = vsel %vm338, %v606, 0.0
  %v689 = vsel %vm339, %v608, 0.0
  %v690 = vsel %vm340, %v610, 0.0
  %v691 = vsel %vm341, %v612, 0.0
  %v692 = vsel %vm342, %v614, 0.0
  %v693 = vsel %vm343, %v616, 0.0
  %v694 = vsel %vm344, %v618, 0.0
  %v695 = vsel %vm345, %v620, 0.0
  %v696 = vsel %vm346, %v622, 0.0
  %v697 = vsel %vm347, %v624, 0.0
  %v698 = vsel %vm348, %v626, 0.0
  %v699 = vsel %vm349, %v628, 0.0
  %v700 = vsel %vm350, %v630, 0.0
  %v701 = vsel %vm351, %v632, 0.0
  %v702 = vsel %vm352, %v634, 0.0
  %v703 = vsel %vm353, %v636, 0.0
  %v704 = vsel %vm354, %v638, 0.0
  %v705 = vsel %vm355, %v640, 0.0
  %v706 = vsel %vm356, %v642, 0.0
  %v707 = vsel %vm357, %v644, 0.0
  %v708 = vsel %vm358, %v646, 0.0
  %v709 = vsel %vm359, %v648, 0.0
  %v710 = vsel %vm360, %v650, 0.0
  %v711 = vsel %vm361, %v652, 0.0
  %v712 = vsel %vm362, %v654, 0.0
  %v713 = vsel %vm363, %v656, 0.0
  %v714 = vsel %vm364, %v658, 0.0
  %v715 = vsel %vm365, %v660, 0.0
  %v716 = vsel %vm366, %v662, 0.0
  %v717 = vsel %vm367, %v664, 0.0
  %v718 = vsel %vm368, %v666, 0.0
  %v719 = vsel %vm369, %v668, 0.0
  %v720 = vsel %vm370, %v670, 0.0
  %vm721 = vcmask 64512
  %v722 = vsel %vm721, %v671, 0.0
  %v723 = vsel %vm721, %v672, 0.0
  %v724 = vadd.f32 %v722, %v723
  %v725 = vsel %vm721, %v673, 0.0
  %v726 = vadd.f32 %v724, %v725
  %v727 = vsel %vm721, %v674, 0.0
  %v728 = vadd.f32 %v726, %v727
  %v729 = vsel %vm721, %v675, 0.0
  %v730 = vadd.f32 %v728, %v729
  %v731 = vsel %vm721, %v676, 0.0
  %v732 = vadd.f32 %v730, %v731
  %v733 = vsel %vm721, %v677, 0.0
  %v734 = vadd.f32 %v732, %v733
  %v735 = vsel %vm721, %v678, 0.0
  %v736 = vadd.f32 %v734, %v735
  %v737 = vsel %vm721, %v679, 0.0
  %v738 = vadd.f32 %v736, %v737
  %v739 = vsel %vm721, %v680, 0.0
  %v740 = vadd.f32 %v738, %v739
  %v741 = vsel %vm721, %v681, 0.0
  %v742 = vadd.f32 %v740, %v741
  %v743 = vsel %vm721, %v682, 0.0
  %v744 = vadd.f32 %v742, %v743
  %v745 = vsel %vm721, %v683, 0.0
  %v746 = vadd.f32 %v744, %v745
  %v747 = vsel %vm721, %v684, 0.0
  %v748 = vadd.f32 %v746, %v747
  %v749 = vsel %vm721, %v685, 0.0
  %v750 = vadd.f32 %v748, %v749
  %v751 = vsel %vm721, %v686, 0.0
  %v752 = vadd.f32 %v750, %v751
  %v753 = vsel %vm721, %v687, 0.0
  %v754 = vadd.f32 %v752, %v753
  %v755 = vsel %vm721, %v688, 0.0
  %v756 = vadd.f32 %v754, %v755
  %v757 = vsel %vm721, %v689, 0.0
  %v758 = vadd.f32 %v756, %v757
  %v759 = vsel %vm721, %v690, 0.0
  %v760 = vadd.f32 %v758, %v759
  %v761 = vsel %vm721, %v691, 0.0
  %v762 = vadd.f32 %v760, %v761
  %v763 = vsel %vm721, %v692, 0.0
  %v764 = vadd.f32 %v762, %v763
  %v765 = vsel %vm721, %v693, 0.0
  %v766 = vadd.f32 %v764, %v765
  %v767 = vsel %vm721, %v694, 0.0
  %v768 = vadd.f32 %v766, %v767
  %v769 = vsel %vm721, %v695, 0.0
  %v770 = vadd.f32 %v768, %v769
  %v771 = vsel %vm721, %v696, 0.0
  %v772 = vadd.f32 %v770, %v771
  %v773 = vsel %vm721, %v697, 0.0
  %v774 = vadd.f32 %v772, %v773
  %v775 = vsel %vm721, %v698, 0.0
  %v776 = vadd.f32 %v774, %v775
  %v777 = vsel %vm721, %v699, 0.0
  %v778 = vadd.f32 %v776, %v777
  %v779 = vsel %vm721, %v700, 0.0
  %v780 = vadd.f32 %v778, %v779
  %v781 = vsel %vm721, %v701, 0.0
  %v782 = vadd.f32 %v780, %v781
  %v783 = vsel %vm721, %v702, 0.0
  %v784 = vadd.f32 %v782, %v783
  %v785 = vsel %vm721, %v703, 0.0
  %v786 = vadd.f32 %v784, %v785
  %v787 = vsel %vm721, %v704, 0.0
  %v788 = vadd.f32 %v786, %v787
  %v789 = vsel %vm721, %v705, 0.0
  %v790 = vadd.f32 %v788, %v789
  %v791 = vsel %vm721, %v706, 0.0
  %v792 = vadd.f32 %v790, %v791
  %v793 = vsel %vm721, %v707, 0.0
  %v794 = vadd.f32 %v792, %v793
  %v795 = vsel %vm721, %v708, 0.0
  %v796 = vadd.f32 %v794, %v795
  %v797 = vsel %vm721, %v709, 0.0
  %v798 = vadd.f32 %v796, %v797
  %v799 = vsel %vm721, %v710, 0.0
  %v800 = vadd.f32 %v798, %v799
  %v801 = vsel %vm721, %v711, 0.0
  %v802 = vadd.f32 %v800, %v801
  %v803 = vsel %vm721, %v712, 0.0
  %v804 = vadd.f32 %v802, %v803
  %v805 = vsel %vm721, %v713, 0.0
  %v806 = vadd.f32 %v804, %v805
  %v807 = vsel %vm721, %v714, 0.0
  %v808 = vadd.f32 %v806, %v807
  %v809 = vsel %vm721, %v715, 0.0
  %v810 = vadd.f32 %v808, %v809
  %v811 = vsel %vm721, %v716, 0.0
  %v812 = vadd.f32 %v810, %v811
  %v813 = vsel %vm721, %v717, 0.0
  %v814 = vadd.f32 %v812, %v813
  %v815 = vsel %vm721, %v718, 0.0
  %v816 = vadd.f32 %v814, %v815
  %v817 = vsel %vm721, %v719, 0.0
  %v818 = vadd.f32 %v816, %v817
  %v819 = vsel %vm721, %v720, 0.0
  %v820 = vadd.f32 %v818, %v819
  %v821 = vrcp.pop 50.0
  %v822 = vmul.f32 %v820, %v821
  %v823 = vmul.f32 %v20, %v822
  %824 = vst.msk [vmem:[%s4] sm:$0xff] %vm721, %v823
  %v825 = vld [vmem:[%s3] sm:$0xff]
  %v827 = vsel %vm721, %v823, 0
  %829 = vmatprep.subr.mxu0 0.0
  %830 = vmatpush1.msra.mxu0 %v825
  %831 = vmatprep.subr.mxu0 0.0
  %832 = vmatpush1.msra.mxu0 0.0
  %833 = vmatprep.subr.mxu0 0.0
  %834 = vmatpush1.msra.mxu0 0.0
  %835 = vmatprep.subr.mxu0 0.0
  %836 = vmatpush1.msra.mxu0 0.0
  %837 = vmatprep.subr.mxu0 0.0
  %838 = vmatpush1.msra.mxu0 0.0
  %839 = vmatprep.subr.mxu0 0.0
  %840 = vmatpush1.msra.mxu0 0.0
  %841 = vmatprep.subr.mxu0 0.0
  %842 = vmatpush1.msra.mxu0 0.0
  %843 = vmatprep.subr.mxu0 0.0
  %844 = vmatpush1.msra.mxu0 0.0
  %845 = vmatprep.subr.mxu0 0.0
  %846 = vmatpush1.msra.mxu0 0.0
  %847 = vmatprep.subr.mxu0 0.0
  %848 = vmatpush1.msra.mxu0 0.0
  %849 = vmatprep.subr.mxu0 0.0
  %850 = vmatpush1.msra.mxu0 0.0
  %851 = vmatprep.subr.mxu0 0.0
  %852 = vmatpush1.msra.mxu0 0.0
  %853 = vmatprep.subr.mxu0 0.0
  %854 = vmatpush1.msra.mxu0 0.0
  %855 = vmatprep.subr.mxu0 0.0
  %856 = vmatpush1.msra.mxu0 0.0
  %857 = vmatprep.subr.mxu0 0.0
  %858 = vmatpush1.msra.mxu0 0.0
  %859 = vmatprep.subr.mxu0 0.0
  %860 = vmatpush1.msra.mxu0 0.0
  %861 = vmatprep.subr.mxu0 0.0
  %862 = vmatpush1.msra.mxu0 0.0
  %863 = vmatprep.subr.mxu0 0.0
  %864 = vmatpush1.msra.mxu0 0.0
  %865 = vmatprep.subr.mxu0 0.0
  %866 = vmatpush1.msra.mxu0 0.0
  %867 = vmatprep.subr.mxu0 0.0
  %868 = vmatpush1.msra.mxu0 0.0
  %869 = vmatprep.subr.mxu0 0.0
  %870 = vmatpush1.msra.mxu0 0.0
  %871 = vmatprep.subr.mxu0 0.0
  %872 = vmatpush1.msra.mxu0 0.0
  %873 = vmatprep.subr.mxu0 0.0
  %874 = vmatpush1.msra.mxu0 0.0
  %875 = vmatprep.subr.mxu0 0.0
  %876 = vmatpush1.msra.mxu0 0.0
  %877 = vmatprep.subr.mxu0 0.0
  %878 = vmatpush1.msra.mxu0 0.0
  %879 = vmatprep.subr.mxu0 0.0
  %880 = vmatpush1.msra.mxu0 0.0
  %881 = vmatprep.subr.mxu0 0.0
  %882 = vmatpush1.msra.mxu0 0.0
  %883 = vmatprep.subr.mxu0 0.0
  %884 = vmatpush1.msra.mxu0 0.0
  %885 = vmatprep.subr.mxu0 0.0
  %886 = vmatpush1.msra.mxu0 0.0
  %887 = vmatprep.subr.mxu0 0.0
  %888 = vmatpush1.msra.mxu0 0.0
  %889 = vmatprep.subr.mxu0 0.0
  %890 = vmatpush1.msra.mxu0 0.0
  %891 = vmatprep.subr.mxu0 0.0
  %892 = vmatpush1.msra.mxu0 0.0
  %893 = vmatprep.mubr.f32.mxu0 0.0
  %894 = vmatmul.mubr.f32.gmra.mrb[0].mxu0 %v827
  %v895 = vpop.f32.mrb[0].mxu0
  %v896 = vadd.f32 0.0, %v895
  %v897 = vpop.f32.mrb[0].mxu0
  %898 = vdwg.mxu0
  %vm899 = vcmask 130048
  %900 = vst.msk [vmem:[%s5] sm:$0xff] %vm899, %v896
  // Predicated region
  $region18: #{dcetm_forward.14} parent=0 // pred_check
    _
  $region19: #{dcetm_forward.14} parent=0 // pred_check_branch
    %902 = sbr.rel (0) target = $region21
  $region20: #{dcetm_forward.14} parent=0 // pred_region
    _
  $region21: #{dcetm_forward.14} parent=0 // pred_fallthru
    _
  // Predicated region
  $region22: #{dcetm_forward.14} parent=0 // pred_check
    _
  $region23: #{dcetm_forward.14} parent=0 // pred_check_branch
    %904 = sbr.rel (0) target = $region25
  $region24: #{dcetm_forward.14} parent=0 // pred_region
    _
  $region25: #{dcetm_forward.14} parent=0 // pred_fallthru
    _
  // Predicated region
  $region26: #{dcetm_forward.14} parent=0 // pred_check
    _
  $region27: #{dcetm_forward.14} parent=0 // pred_check_branch
    %906 = sbr.rel (0) target = $region29
  $region28: #{dcetm_forward.14} parent=0 // pred_region
    _
  $region29: #{dcetm_forward.14} parent=0 // pred_fallthru
    _
  // Predicated region
  $region30: #{dcetm_forward.14} parent=0 // pred_check
    _
  $region31: #{dcetm_forward.14} parent=0 // pred_check_branch
    %908 = sbr.rel (0) target = $region33
  $region32: #{dcetm_forward.14} parent=0 // pred_region
    _
  $region33: #{dcetm_forward.14} parent=0 // pred_fallthru
    _

// kernel: dcetm_forward.16
$region0: #{dcetm_forward.16}
  #allocation0 [shape = 'u32[]', space=smem, size = 0x4, offset = 0x4, fixed_abs, tag = 'smem constant byte address 0x4 - core index']
  #allocation1 [shape = 'u32[144,128]{1,0:T(1,128)}', space=vmem, size = 0x12000, scoped, tag = 'internal scratch']
  %s0 = inlined_call_operand.vmem [shape: f32[16,16], index: 0, kind: input, shape index: {}]
  %s1 = inlined_call_operand.vmem [shape: f32[32,16], index: 1, kind: input, shape index: {}]
  %s2 = inlined_call_operand.vmem [shape: f32[16,32], index: 2, kind: output, shape index: {}]
  %s3 = sld [smem:[#allocation0]]
  $region18: #{dcetm_forward.16} parent=0
    _
  %s5 = ssub.s32 1, %s3
  %s6 = scalar_select 0, %s5, %s3
  // Predicated region
  $region2: #{dcetm_forward.16} parent=0 // pred_check
    _
  $region3: #{dcetm_forward.16} parent=0 // pred_check_branch
    %8 = sbr.rel (0) target = $region5
  $region4: #{dcetm_forward.16} parent=0 // pred_region
    _
  $region5: #{dcetm_forward.16} parent=0 // pred_fallthru
    _
  // Predicated region
  $region6: #{dcetm_forward.16} parent=0 // pred_check
    _
  $region7: #{dcetm_forward.16} parent=0 // pred_check_branch
    %10 = sbr.rel (0) target = $region9
  $region8: #{dcetm_forward.16} parent=0 // pred_region
    _
  $region9: #{dcetm_forward.16} parent=0 // pred_fallthru
    _
  %v11 = vld [vmem:[%s0] sm:$0xff]
  %v12 = vld [vmem:[%s0 + $0x8] sm:$0xff]
  %v13 = vld [vmem:[%s1] sm:$0xff]
  %v14 = vld [vmem:[%s1 + $0x8] sm:$0xff]
  %v15 = vld [vmem:[%s1 + $0x10] sm:$0xff]
  %v16 = vld [vmem:[%s1 + $0x18] sm:$0xff]
  %vm17 = vcmask 130048
  %v19 = vsel %vm17, %v11, 0
  %v22 = vsel %vm17, %v12, 0
  %v25 = vsel %vm17, %v13, 0
  %v28 = vsel %vm17, %v14, 0
  %v31 = vsel %vm17, %v15, 0
  %v34 = vsel %vm17, %v16, 0
  %36 = vmatprep.subr.mxu0 0.0
  %37 = vmatpush1.xpose.msra.mxu0 %v25
  %38 = vmatprep.subr.mxu0 0.0
  %39 = vmatpush1.xpose.msra.mxu0 %v28
  %40 = vmatprep.subr.mxu0 0.0
  %41 = vmatpush1.xpose.msra.mxu0 %v31
  %42 = vmatprep.subr.mxu0 0.0
  %43 = vmatpush1.xpose.msra.mxu0 %v34
  %44 = vmatprep.subr.mxu0 0.0
  %45 = vmatpush1.xpose.msra.mxu0 0.0
  %46 = vmatprep.subr.mxu0 0.0
  %47 = vmatpush1.xpose.msra.mxu0 0.0
  %48 = vmatprep.subr.mxu0 0.0
  %49 = vmatpush1.xpose.msra.mxu0 0.0
  %50 = vmatprep.subr.mxu0 0.0
  %51 = vmatpush1.xpose.msra.mxu0 0.0
  %52 = vmatprep.subr.mxu0 0.0
  %53 = vmatpush1.xpose.msra.mxu0 0.0
  %54 = vmatprep.subr.mxu0 0.0
  %55 = vmatpush1.xpose.msra.mxu0 0.0
  %56 = vmatprep.subr.mxu0 0.0
  %57 = vmatpush1.xpose.msra.mxu0 0.0
  %58 = vmatprep.subr.mxu0 0.0
  %59 = vmatpush1.xpose.msra.mxu0 0.0
  %60 = vmatprep.subr.mxu0 0.0
  %61 = vmatpush1.xpose.msra.mxu0 0.0
  %62 = vmatprep.subr.mxu0 0.0
  %63 = vmatpush1.xpose.msra.mxu0 0.0
  %64 = vmatprep.subr.mxu0 0.0
  %65 = vmatpush1.xpose.msra.mxu0 0.0
  %66 = vmatprep.subr.mxu0 0.0
  %67 = vmatpush1.xpose.msra.mxu0 0.0
  %68 = vmatprep.subr.mxu0 0.0
  %69 = vmatpush1.xpose.msra.mxu0 0.0
  %70 = vmatprep.subr.mxu0 0.0
  %71 = vmatpush1.xpose.msra.mxu0 0.0
  %72 = vmatprep.subr.mxu0 0.0
  %73 = vmatpush1.xpose.msra.mxu0 0.0
  %74 = vmatprep.subr.mxu0 0.0
  %75 = vmatpush1.xpose.msra.mxu0 0.0
  %76 = vmatprep.subr.mxu0 0.0
  %77 = vmatpush1.xpose.msra.mxu0 0.0
  %78 = vmatprep.subr.mxu0 0.0
  %79 = vmatpush1.xpose.msra.mxu0 0.0
  %80 = vmatprep.subr.mxu0 0.0
  %81 = vmatpush1.xpose.msra.mxu0 0.0
  %82 = vmatprep.subr.mxu0 0.0
  %83 = vmatpush1.xpose.msra.mxu0 0.0
  %84 = vmatprep.subr.mxu0 0.0
  %85 = vmatpush1.xpose.msra.mxu0 0.0
  %86 = vmatprep.subr.mxu0 0.0
  %87 = vmatpush1.xpose.msra.mxu0 0.0
  %88 = vmatprep.subr.mxu0 0.0
  %89 = vmatpush1.xpose.msra.mxu0 0.0
  %90 = vmatprep.subr.mxu0 0.0
  %91 = vmatpush1.xpose.msra.mxu0 0.0
  %92 = vmatprep.subr.mxu0 0.0
  %93 = vmatpush1.xpose.msra.mxu0 0.0
  %94 = vmatprep.subr.mxu0 0.0
  %95 = vmatpush1.xpose.msra.mxu0 0.0
  %96 = vmatprep.subr.mxu0 0.0
  %97 = vmatpush1.xpose.msra.mxu0 0.0
  %98 = vmatprep.subr.mxu0 0.0
  %99 = vmatpush1.xpose.msra.mxu0 0.0
  %100 = vmatprep.mubr.f32.mxu0 0.0
  %101 = vmatmul.mubr.f32.gmra.mrb[0].mxu0 %v19
  %v102 = vpop.f32.mrb[0].mxu0
  %v103 = vadd.f32 0.0, %v102
  %v104 = vpop.f32.mrb[0].mxu0
  %105 = vmatprep.mubr.f32.mxu0 0.0
  %106 = vmatmul.mubr.f32.gmra.mrb[0].mxu0 %v22
  %v107 = vpop.f32.mrb[0].mxu0
  %v108 = vadd.f32 0.0, %v107
  %v109 = vpop.f32.mrb[0].mxu0
  %110 = vdwg.mxu0
  %vm111 = vcmask 261120
  %v112 = vsel %vm111, %v103, -inf
  %113 = vmax.xlane.f32.xlu0 %v112
  %v114 = vpop.xlane.xlu0 %113
  %v115 = vsel %vm111, %v108, -inf
  %116 = vmax.xlane.f32.xlu0 %v115
  %v117 = vpop.xlane.xlu0 %116
  %v118 = vsub.f32 %v103, %v114
  %v119 = vsub.f32 %v108, %v117
  %v120 = vmul.f32 %v118, 1.442695
  %v121 = vpow.pop %v120
  %v122 = vmul.f32 %v119, 1.442695
  %v123 = vpow.pop %v122
  %v124 = vsel %vm111, %v121, 0.0
  %125 = vadd.xlane.f32.xlu0 %v124
  %v126 = vpop.xlane.xlu0 %125
  %v127 = vsel %vm111, %v123, 0.0
  %128 = vadd.xlane.f32.xlu0 %v127
  %v129 = vpop.xlane.xlu0 %128
  %v130 = vrcp.pop %v126
  %v131 = vmul.f32 %v121, %v130
  %v132 = vrcp.pop %v129
  %v133 = vmul.f32 %v123, %v132
  %134 = vst.msk [vmem:[%s2] sm:$0xff] %vm111, %v131
  %135 = vst.msk [vmem:[%s2 + $0x8] sm:$0xff] %vm111, %v133
  // Predicated region
  $region10: #{dcetm_forward.16} parent=0 // pred_check
    _
  $region11: #{dcetm_forward.16} parent=0 // pred_check_branch
    %137 = sbr.rel (0) target = $region13
  $region12: #{dcetm_forward.16} parent=0 // pred_region
    _
  $region13: #{dcetm_forward.16} parent=0 // pred_fallthru
    _
  // Predicated region
  $region14: #{dcetm_forward.16} parent=0 // pred_check
    _
  $region15: #{dcetm_forward.16} parent=0 // pred_check_branch
    %139 = sbr.rel (0) target = $region17
  $region16: #{dcetm_forward.16} parent=0 // pred_region
    _
  $region17: #{dcetm_forward.16} parent=0 // pred_fallthru
    _

// kernel: dcetm_forward.18
$region0: #{dcetm_forward.18}
  #allocation0 [shape = 'u32[]', space=smem, size = 0x4, offset = 0x4, fixed_abs, tag = 'smem constant byte address 0x4 - core index']
  #allocation1 [shape = 'u32[144,128]{1,0:T(1,128)}', space=vmem, size = 0x12000, scoped, tag = 'internal scratch']
  %s0 = inlined_call_operand.vmem [shape: f32[8,16], index: 0, kind: input, shape index: {}]
  %s1 = inlined_call_operand.vmem [shape: f32[16,32], index: 1, kind: input, shape index: {}]
  %s2 = inlined_call_operand.vmem [shape: f32[8,32], index: 2, kind: output, shape index: {}]
  %s3 = sld [smem:[#allocation0]]
  $region18: #{dcetm_forward.18} parent=0
    _
  %s5 = ssub.s32 1, %s3
  %s6 = scalar_select 0, %s5, %s3
  // Predicated region
  $region2: #{dcetm_forward.18} parent=0 // pred_check
    _
  $region3: #{dcetm_forward.18} parent=0 // pred_check_branch
    %8 = sbr.rel (0) target = $region5
  $region4: #{dcetm_forward.18} parent=0 // pred_region
    _
  $region5: #{dcetm_forward.18} parent=0 // pred_fallthru
    _
  // Predicated region
  $region6: #{dcetm_forward.18} parent=0 // pred_check
    _
  $region7: #{dcetm_forward.18} parent=0 // pred_check_branch
    %10 = sbr.rel (0) target = $region9
  $region8: #{dcetm_forward.18} parent=0 // pred_region
    _
  $region9: #{dcetm_forward.18} parent=0 // pred_fallthru
    _
  %v11 = vld [vmem:[%s0] sm:$0xff]
  %v12 = vld [vmem:[%s1] sm:$0xff]
  %v13 = vld [vmem:[%s1 + $0x8] sm:$0xff]
  %vm14 = vcmask 130048
  %v16 = vsel %vm14, %v11, 0
  %18 = vmatprep.subr.mxu0 0.0
  %19 = vmatpush1.msra.mxu0 %v12
  %20 = vmatprep.subr.mxu0 0.0
  %21 = vmatpush1.msra.mxu0 %v13
  %22 = vmatprep.subr.mxu0 0.0
  %23 = vmatpush1.msra.mxu0 0.0
  %24 = vmatprep.subr.mxu0 0.0
  %25 = vmatpush1.msra.mxu0 0.0
  %26 = vmatprep.subr.mxu0 0.0
  %27 = vmatpush1.msra.mxu0 0.0
  %28 = vmatprep.subr.mxu0 0.0
  %29 = vmatpush1.msra.mxu0 0.0
  %30 = vmatprep.subr.mxu0 0.0
  %31 = vmatpush1.msra.mxu0 0.0
  %32 = vmatprep.subr.mxu0 0.0
  %33 = vmatpush1.msra.mxu0 0.0
  %34 = vmatprep.subr.mxu0 0.0
  %35 = vmatpush1.msra.mxu0 0.0
  %36 = vmatprep.subr.mxu0 0.0
  %37 = vmatpush1.msra.mxu0 0.0
  %38 = vmatprep.subr.mxu0 0.0
  %39 = vmatpush1.msra.mxu0 0.0
  %40 = vmatprep.subr.mxu0 0.0
  %41 = vmatpush1.msra.mxu0 0.0
  %42 = vmatprep.subr.mxu0 0.0
  %43 = vmatpush1.msra.mxu0 0.0
  %44 = vmatprep.subr.mxu0 0.0
  %45 = vmatpush1.msra.mxu0 0.0
  %46 = vmatprep.subr.mxu0 0.0
  %47 = vmatpush1.msra.mxu0 0.0
  %48 = vmatprep.subr.mxu0 0.0
  %49 = vmatpush1.msra.mxu0 0.0
  %50 = vmatprep.subr.mxu0 0.0
  %51 = vmatpush1.msra.mxu0 0.0
  %52 = vmatprep.subr.mxu0 0.0
  %53 = vmatpush1.msra.mxu0 0.0
  %54 = vmatprep.subr.mxu0 0.0
  %55 = vmatpush1.msra.mxu0 0.0
  %56 = vmatprep.subr.mxu0 0.0
  %57 = vmatpush1.msra.mxu0 0.0
  %58 = vmatprep.subr.mxu0 0.0
  %59 = vmatpush1.msra.mxu0 0.0
  %60 = vmatprep.subr.mxu0 0.0
  %61 = vmatpush1.msra.mxu0 0.0
  %62 = vmatprep.subr.mxu0 0.0
  %63 = vmatpush1.msra.mxu0 0.0
  %64 = vmatprep.subr.mxu0 0.0
  %65 = vmatpush1.msra.mxu0 0.0
  %66 = vmatprep.subr.mxu0 0.0
  %67 = vmatpush1.msra.mxu0 0.0
  %68 = vmatprep.subr.mxu0 0.0
  %69 = vmatpush1.msra.mxu0 0.0
  %70 = vmatprep.subr.mxu0 0.0
  %71 = vmatpush1.msra.mxu0 0.0
  %72 = vmatprep.subr.mxu0 0.0
  %73 = vmatpush1.msra.mxu0 0.0
  %74 = vmatprep.subr.mxu0 0.0
  %75 = vmatpush1.msra.mxu0 0.0
  %76 = vmatprep.subr.mxu0 0.0
  %77 = vmatpush1.msra.mxu0 0.0
  %78 = vmatprep.subr.mxu0 0.0
  %79 = vmatpush1.msra.mxu0 0.0
  %80 = vmatprep.subr.mxu0 0.0
  %81 = vmatpush1.msra.mxu0 0.0
  %82 = vmatprep.mubr.f32.mxu0 0.0
  %83 = vmatmul.mubr.f32.gmra.mrb[0].mxu0 %v16
  %v84 = vpop.f32.mrb[0].mxu0
  %v85 = vadd.f32 0.0, %v84
  %v86 = vpop.f32.mrb[0].mxu0
  %87 = vdwg.mxu0
  %vm88 = vcmask 261120
  %89 = vst.msk [vmem:[%s2] sm:$0xff] %vm88, %v85
  // Predicated region
  $region10: #{dcetm_forward.18} parent=0 // pred_check
    _
  $region11: #{dcetm_forward.18} parent=0 // pred_check_branch
    %91 = sbr.rel (0) target = $region13
  $region12: #{dcetm_forward.18} parent=0 // pred_region
    _
  $region13: #{dcetm_forward.18} parent=0 // pred_fallthru
    _
  // Predicated region
  $region14: #{dcetm_forward.18} parent=0 // pred_check
    _
  $region15: #{dcetm_forward.18} parent=0 // pred_check_branch
    %93 = sbr.rel (0) target = $region17
  $region16: #{dcetm_forward.18} parent=0 // pred_region
    _
  $region17: #{dcetm_forward.18} parent=0 // pred_fallthru
    _

// kernel: dcetm_forward.15
$region0: #{dcetm_forward.15}
  #allocation0 [shape = 'u32[]', space=smem, size = 0x4, offset = 0x4, fixed_abs, tag = 'smem constant byte address 0x4 - core index']
  #allocation1 [shape = 'u32[144,128]{1,0:T(1,128)}', space=vmem, size = 0x12000, scoped, tag = 'internal scratch']
  %s0 = inlined_call_operand.vmem [shape: f32[8,48], index: 0, kind: input, shape index: {}]
  %s1 = inlined_call_operand.vmem [shape: f32[48,16], index: 1, kind: input, shape index: {}]
  %s2 = inlined_call_operand.vmem [shape: f32[1,16], index: 2, kind: input, shape index: {}]
  %s3 = inlined_call_operand.vmem [shape: f32[48,16], index: 3, kind: input, shape index: {}]
  %s4 = inlined_call_operand.vmem [shape: f32[1,16], index: 4, kind: input, shape index: {}]
  %s5 = inlined_call_operand.vmem [shape: f32[8,16], index: 5, kind: output, shape index: {0}]
  %s6 = inlined_call_operand.vmem [shape: f32[8,16], index: 6, kind: output, shape index: {1}]
  %7 = xla_tuple %s5, %s6
  %s8 = sld [smem:[#allocation0]]
  $region38: #{dcetm_forward.15} parent=0
    _
  %s10 = ssub.s32 1, %s8
  %s11 = scalar_select 0, %s10, %s8
  // Predicated region
  $region2: #{dcetm_forward.15} parent=0 // pred_check
    _
  $region3: #{dcetm_forward.15} parent=0 // pred_check_branch
    %13 = sbr.rel (0) target = $region5
  $region4: #{dcetm_forward.15} parent=0 // pred_region
    _
  $region5: #{dcetm_forward.15} parent=0 // pred_fallthru
    _
  // Predicated region
  $region6: #{dcetm_forward.15} parent=0 // pred_check
    _
  $region7: #{dcetm_forward.15} parent=0 // pred_check_branch
    %15 = sbr.rel (0) target = $region9
  $region8: #{dcetm_forward.15} parent=0 // pred_region
    _
  $region9: #{dcetm_forward.15} parent=0 // pred_fallthru
    _
  // Predicated region
  $region10: #{dcetm_forward.15} parent=0 // pred_check
    _
  $region11: #{dcetm_forward.15} parent=0 // pred_check_branch
    %17 = sbr.rel (0) target = $region13
  $region12: #{dcetm_forward.15} parent=0 // pred_region
    _
  $region13: #{dcetm_forward.15} parent=0 // pred_fallthru
    _
  // Predicated region
  $region14: #{dcetm_forward.15} parent=0 // pred_check
    _
  $region15: #{dcetm_forward.15} parent=0 // pred_check_branch
    %19 = sbr.rel (0) target = $region17
  $region16: #{dcetm_forward.15} parent=0 // pred_region
    _
  $region17: #{dcetm_forward.15} parent=0 // pred_fallthru
    _
  // Predicated region
  $region18: #{dcetm_forward.15} parent=0 // pred_check
    _
  $region19: #{dcetm_forward.15} parent=0 // pred_check_branch
    %21 = sbr.rel (0) target = $region21
  $region20: #{dcetm_forward.15} parent=0 // pred_region
    _
  $region21: #{dcetm_forward.15} parent=0 // pred_fallthru
    _
  %v22 = vld [vmem:[%s0] sm:$0xff]
  %v23 = vld [vmem:[%s1] sm:$0xff]
  %v24 = vld [vmem:[%s1 + $0x8] sm:$0xff]
  %v25 = vld [vmem:[%s1 + $0x10] sm:$0xff]
  %v26 = vld [vmem:[%s1 + $0x18] sm:$0xff]
  %v27 = vld [vmem:[%s1 + $0x20] sm:$0xff]
  %v28 = vld [vmem:[%s1 + $0x28] sm:$0xff]
  %v29 = vld [vmem:[%s2] sm:$0x1]
  %v31 = vlaneseq
  %v32 = vshrl.u32 %v31, 7
  %v33 = vsub.s32 0, %v32
  %v34 = vrot.slane %v29, %v33
  %vm36 = vcmask 392192
  %v38 = vsel %vm36, %v22, 0
  %40 = vmatprep.subr.mxu0 0.0
  %41 = vmatpush1.msra.mxu0 %v23
  %42 = vmatprep.subr.mxu0 0.0
  %43 = vmatpush1.msra.mxu0 %v24
  %44 = vmatprep.subr.mxu0 0.0
  %45 = vmatpush1.msra.mxu0 %v25
  %46 = vmatprep.subr.mxu0 0.0
  %47 = vmatpush1.msra.mxu0 %v26
  %48 = vmatprep.subr.mxu0 0.0
  %49 = vmatpush1.msra.mxu0 %v27
  %50 = vmatprep.subr.mxu0 0.0
  %51 = vmatpush1.msra.mxu0 %v28
  %52 = vmatprep.subr.mxu0 0.0
  %53 = vmatpush1.msra.mxu0 0.0
  %54 = vmatprep.subr.mxu0 0.0
  %55 = vmatpush1.msra.mxu0 0.0
  %56 = vmatprep.subr.mxu0 0.0
  %57 = vmatpush1.msra.mxu0 0.0
  %58 = vmatprep.subr.mxu0 0.0
  %59 = vmatpush1.msra.mxu0 0.0
  %60 = vmatprep.subr.mxu0 0.0
  %61 = vmatpush1.msra.mxu0 0.0
  %62 = vmatprep.subr.mxu0 0.0
  %63 = vmatpush1.msra.mxu0 0.0
  %64 = vmatprep.subr.mxu0 0.0
  %65 = vmatpush1.msra.mxu0 0.0
  %66 = vmatprep.subr.mxu0 0.0
  %67 = vmatpush1.msra.mxu0 0.0
  %68 = vmatprep.subr.mxu0 0.0
  %69 = vmatpush1.msra.mxu0 0.0
  %70 = vmatprep.subr.mxu0 0.0
  %71 = vmatpush1.msra.mxu0 0.0
  %72 = vmatprep.subr.mxu0 0.0
  %73 = vmatpush1.msra.mxu0 0.0
  %74 = vmatprep.subr.mxu0 0.0
  %75 = vmatpush1.msra.mxu0 0.0
  %76 = vmatprep.subr.mxu0 0.0
  %77 = vmatpush1.msra.mxu0 0.0
  %78 = vmatprep.subr.mxu0 0.0
  %79 = vmatpush1.msra.mxu0 0.0
  %80 = vmatprep.subr.mxu0 0.0
  %81 = vmatpush1.msra.mxu0 0.0
  %82 = vmatprep.subr.mxu0 0.0
  %83 = vmatpush1.msra.mxu0 0.0
  %84 = vmatprep.subr.mxu0 0.0
  %85 = vmatpush1.msra.mxu0 0.0
  %86 = vmatprep.subr.mxu0 0.0
  %87 = vmatpush1.msra.mxu0 0.0
  %88 = vmatprep.subr.mxu0 0.0
  %89 = vmatpush1.msra.mxu0 0.0
  %90 = vmatprep.subr.mxu0 0.0
  %91 = vmatpush1.msra.mxu0 0.0
  %92 = vmatprep.subr.mxu0 0.0
  %93 = vmatpush1.msra.mxu0 0.0
  %94 = vmatprep.subr.mxu0 0.0
  %95 = vmatpush1.msra.mxu0 0.0
  %96 = vmatprep.subr.mxu0 0.0
  %97 = vmatpush1.msra.mxu0 0.0
  %98 = vmatprep.subr.mxu0 0.0
  %99 = vmatpush1.msra.mxu0 0.0
  %100 = vmatprep.subr.mxu0 0.0
  %101 = vmatpush1.msra.mxu0 0.0
  %102 = vmatprep.subr.mxu0 0.0
  %103 = vmatpush1.msra.mxu0 0.0
  %104 = vmatprep.mubr.f32.mxu0 0.0
  %105 = vmatmul.mubr.f32.gmra.mrb[0].mxu0 %v38
  %v106 = vpop.f32.mrb[0].mxu0
  %v107 = vadd.f32 %v34, %v106
  %v108 = vpop.f32.mrb[0].mxu0
  %109 = vdwg.mxu0
  %v110 = vld [vmem:[%s3] sm:$0xff]
  %v111 = vld [vmem:[%s3 + $0x8] sm:$0xff]
  %v112 = vld [vmem:[%s3 + $0x10] sm:$0xff]
  %v113 = vld [vmem:[%s3 + $0x18] sm:$0xff]
  %v114 = vld [vmem:[%s3 + $0x20] sm:$0xff]
  %v115 = vld [vmem:[%s3 + $0x28] sm:$0xff]
  %v116 = vld [vmem:[%s4] sm:$0x1]
  %v118 = vlaneseq
  %v119 = vshrl.u32 %v118, 7
  %v120 = vsub.s32 0, %v119
  %v121 = vrot.slane %v116, %v120
  %123 = vmatprep.subr.mxu0 0.0
  %124 = vmatpush1.msra.mxu0 %v110
  %125 = vmatprep.subr.mxu0 0.0
  %126 = vmatpush1.msra.mxu0 %v111
  %127 = vmatprep.subr.mxu0 0.0
  %128 = vmatpush1.msra.mxu0 %v112
  %129 = vmatprep.subr.mxu0 0.0
  %130 = vmatpush1.msra.mxu0 %v113
  %131 = vmatprep.subr.mxu0 0.0
  %132 = vmatpush1.msra.mxu0 %v114
  %133 = vmatprep.subr.mxu0 0.0
  %134 = vmatpush1.msra.mxu0 %v115
  %135 = vmatprep.subr.mxu0 0.0
  %136 = vmatpush1.msra.mxu0 0.0
  %137 = vmatprep.subr.mxu0 0.0
  %138 = vmatpush1.msra.mxu0 0.0
  %139 = vmatprep.subr.mxu0 0.0
  %140 = vmatpush1.msra.mxu0 0.0
  %141 = vmatprep.subr.mxu0 0.0
  %142 = vmatpush1.msra.mxu0 0.0
  %143 = vmatprep.subr.mxu0 0.0
  %144 = vmatpush1.msra.mxu0 0.0
  %145 = vmatprep.subr.mxu0 0.0
  %146 = vmatpush1.msra.mxu0 0.0
  %147 = vmatprep.subr.mxu0 0.0
  %148 = vmatpush1.msra.mxu0 0.0
  %149 = vmatprep.subr.mxu0 0.0
  %150 = vmatpush1.msra.mxu0 0.0
  %151 = vmatprep.subr.mxu0 0.0
  %152 = vmatpush1.msra.mxu0 0.0
  %153 = vmatprep.subr.mxu0 0.0
  %154 = vmatpush1.msra.mxu0 0.0
  %155 = vmatprep.subr.mxu0 0.0
  %156 = vmatpush1.msra.mxu0 0.0
  %157 = vmatprep.subr.mxu0 0.0
  %158 = vmatpush1.msra.mxu0 0.0
  %159 = vmatprep.subr.mxu0 0.0
  %160 = vmatpush1.msra.mxu0 0.0
  %161 = vmatprep.subr.mxu0 0.0
  %162 = vmatpush1.msra.mxu0 0.0
  %163 = vmatprep.subr.mxu0 0.0
  %164 = vmatpush1.msra.mxu0 0.0
  %165 = vmatprep.subr.mxu0 0.0
  %166 = vmatpush1.msra.mxu0 0.0
  %167 = vmatprep.subr.mxu0 0.0
  %168 = vmatpush1.msra.mxu0 0.0
  %169 = vmatprep.subr.mxu0 0.0
  %170 = vmatpush1.msra.mxu0 0.0
  %171 = vmatprep.subr.mxu0 0.0
  %172 = vmatpush1.msra.mxu0 0.0
  %173 = vmatprep.subr.mxu0 0.0
  %174 = vmatpush1.msra.mxu0 0.0
  %175 = vmatprep.subr.mxu0 0.0
  %176 = vmatpush1.msra.mxu0 0.0
  %177 = vmatprep.subr.mxu0 0.0
  %178 = vmatpush1.msra.mxu0 0.0
  %179 = vmatprep.subr.mxu0 0.0
  %180 = vmatpush1.msra.mxu0 0.0
  %181 = vmatprep.subr.mxu0 0.0
  %182 = vmatpush1.msra.mxu0 0.0
  %183 = vmatprep.subr.mxu0 0.0
  %184 = vmatpush1.msra.mxu0 0.0
  %185 = vmatprep.subr.mxu0 0.0
  %186 = vmatpush1.msra.mxu0 0.0
  %187 = vmatprep.mubr.f32.mxu0 0.0
  %188 = vmatmul.mubr.f32.gmra.mrb[0].mxu0 %v38
  %v189 = vpop.f32.mrb[0].mxu0
  %v190 = vadd.f32 %v121, %v189
  %v191 = vpop.f32.mrb[0].mxu0
  %192 = vdwg.mxu0
  %v193 = vmax.f32 %v107, 0.0
  %v194 = vand.u32 2147483647, %v107
  %v195 = vsub.f32 0.0, %v194
  %v196 = vmul.f32 %v195, 1.442695
  %v197 = vpow.pop %v196
  %v198 = vadd.f32 %v197, 1.0
  %v199 = vlog2.pop %v198
  %v200 = vmul.f32 %v199, 0.6931472
  %v201 = vadd.f32 %v193, %v200
  %v202 = vmax.f32 %v201, 1e-30
  %v203 = vmin.f32 %v202, 10.0
  %vm204 = vcmask 130048
  %205 = vst.msk [vmem:[%s5] sm:$0xff] %vm204, %v203
  %v206 = vmax.f32 %v190, 0.0
  %v207 = vand.u32 2147483647, %v190
  %v208 = vsub.f32 0.0, %v207
  %v209 = vmul.f32 %v208, 1.442695
  %v210 = vpow.pop %v209
  %v211 = vadd.f32 %v210, 1.0
  %v212 = vlog2.pop %v211
  %v213 = vmul.f32 %v212, 0.6931472
  %v214 = vadd.f32 %v206, %v213
  %v215 = vmax.f32 %v214, 1e-30
  %216 = vst.msk [vmem:[%s6] sm:$0xff] %vm204, %v215
  // Predicated region
  $region22: #{dcetm_forward.15} parent=0 // pred_check
    _
  $region23: #{dcetm_forward.15} parent=0 // pred_check_branch
    %218 = sbr.rel (0) target = $region25
  $region24: #{dcetm_forward.15} parent=0 // pred_region
    _
  $region25: #{dcetm_forward.15} parent=0 // pred_fallthru
    _
  // Predicated region
  $region26: #{dcetm_forward.15} parent=0 // pred_check
    _
  $region27: #{dcetm_forward.15} parent=0 // pred_check_branch
    %220 = sbr.rel (0) target = $region29
  $region28: #{dcetm_forward.15} parent=0 // pred_region
    _
  $region29: #{dcetm_forward.15} parent=0 // pred_fallthru
    _
  // Predicated region
  $region30: #{dcetm_forward.15} parent=0 // pred_check
    _
  $region31: #{dcetm_forward.15} parent=0 // pred_check_branch
    %222 = sbr.rel (0) target = $region33
  $region32: #{dcetm_forward.15} parent=0 // pred_region
    _
  $region33: #{dcetm_forward.15} parent=0 // pred_fallthru
    _
  // Predicated region
  $region34: #{dcetm_forward.15} parent=0 // pred_check
    _
  $region35: #{dcetm_forward.15} parent=0 // pred_check_branch
    %224 = sbr.rel (0) target = $region37
  $region36: #{dcetm_forward.15} parent=0 // pred_region
    _
  $region37: #{dcetm_forward.15} parent=0 // pred_fallthru
    _

// kernel: dcetm_forward.17
$region0: #{dcetm_forward.17}
  #allocation0 [shape = 'u32[]', space=smem, size = 0x4, offset = 0x4, fixed_abs, tag = 'smem constant byte address 0x4 - core index']
  #allocation1 [shape = 'u32[144,128]{1,0:T(1,128)}', space=vmem, size = 0x12000, scoped, tag = 'internal scratch']
  %s0 = inlined_call_operand.vmem [shape: f32[8,16], index: 0, kind: input, shape index: {}]
  %s1 = inlined_call_operand.vmem [shape: f32[8,16], index: 1, kind: input, shape index: {}]
  %s2 = inlined_call_operand.vmem [shape: f32[50,8,16], index: 2, kind: input, shape index: {}]
  %s3 = inlined_call_operand.vmem [shape: f32[16,32], index: 3, kind: input, shape index: {}]
  %s4 = inlined_call_operand.hbm [shape: f32[8,16], index: 4, kind: output, shape index: {0}]
  %s5 = inlined_call_operand.vmem [shape: f32[8,32], index: 5, kind: output, shape index: {1}]
  %6 = xla_tuple %s4, %s5
  %s7 = sld [smem:[#allocation0]]
  $region34: #{dcetm_forward.17} parent=0
    _
  %s9 = ssub.s32 1, %s7
  %s10 = scalar_select 0, %s9, %s7
  $region1: #{dcetm_forward.17} parent=0
    #allocation2 [shape = 'u8[4096]{0}', space=vmem, size = 0x1000, scoped, tag = 'output window, operand 0, single buffered']
    #allocation3 [shape = 's32[1]{0}', space=sflag, size = 0x4, scoped, tag = 'scoped memory for dcetm_forward.17']
    %11 = vsyncpa [#allocation3], 0
    // Predicated region
    $region2: #{dcetm_forward.17} parent=1 // pred_check
      _
    $region3: #{dcetm_forward.17} parent=1 // pred_check_branch
      %13 = sbr.rel (0) target = $region5
    $region4: #{dcetm_forward.17} parent=1 // pred_region
      _
    $region5: #{dcetm_forward.17} parent=1 // pred_fallthru
      _
    // Predicated region
    $region6: #{dcetm_forward.17} parent=1 // pred_check
      _
    $region7: #{dcetm_forward.17} parent=1 // pred_check_branch
      %15 = sbr.rel (0) target = $region9
    $region8: #{dcetm_forward.17} parent=1 // pred_region
      _
    $region9: #{dcetm_forward.17} parent=1 // pred_fallthru
      _
    // Predicated region
    $region10: #{dcetm_forward.17} parent=1 // pred_check
      _
    $region11: #{dcetm_forward.17} parent=1 // pred_check_branch
      %17 = sbr.rel (0) target = $region13
    $region12: #{dcetm_forward.17} parent=1 // pred_region
      _
    $region13: #{dcetm_forward.17} parent=1 // pred_fallthru
      _
    // Predicated region
    $region14: #{dcetm_forward.17} parent=1 // pred_check
      _
    $region15: #{dcetm_forward.17} parent=1 // pred_check_branch
      %19 = sbr.rel (0) target = $region17
    $region16: #{dcetm_forward.17} parent=1 // pred_region
      _
    $region17: #{dcetm_forward.17} parent=1 // pred_fallthru
      _
    %v20 = vld [vmem:[%s0] sm:$0xff]
    %v21 = vld [vmem:[%s1] sm:$0xff]
    %v22 = vld [vmem:[%s2] sm:$0xff]
    %v23 = vld [vmem:[%s2 + $0x8] sm:$0xff]
    %v24 = vld [vmem:[%s2 + $0x10] sm:$0xff]
    %v25 = vld [vmem:[%s2 + $0x18] sm:$0xff]
    %v26 = vld [vmem:[%s2 + $0x20] sm:$0xff]
    %v27 = vld [vmem:[%s2 + $0x28] sm:$0xff]
    %v28 = vld [vmem:[%s2 + $0x30] sm:$0xff]
    %v29 = vld [vmem:[%s2 + $0x38] sm:$0xff]
    %v30 = vld [vmem:[%s2 + $0x40] sm:$0xff]
    %v31 = vld [vmem:[%s2 + $0x48] sm:$0xff]
    %v32 = vld [vmem:[%s2 + $0x50] sm:$0xff]
    %v33 = vld [vmem:[%s2 + $0x58] sm:$0xff]
    %v34 = vld [vmem:[%s2 + $0x60] sm:$0xff]
    %v35 = vld [vmem:[%s2 + $0x68] sm:$0xff]
    %v36 = vld [vmem:[%s2 + $0x70] sm:$0xff]
    %v37 = vld [vmem:[%s2 + $0x78] sm:$0xff]
    %v38 = vld [vmem:[%s2 + $0x80] sm:$0xff]
    %v39 = vld [vmem:[%s2 + $0x88] sm:$0xff]
    %v40 = vld [vmem:[%s2 + $0x90] sm:$0xff]
    %v41 = vld [vmem:[%s2 + $0x98] sm:$0xff]
    %v42 = vld [vmem:[%s2 + $0xa0] sm:$0xff]
    %v43 = vld [vmem:[%s2 + $0xa8] sm:$0xff]
    %v44 = vld [vmem:[%s2 + $0xb0] sm:$0xff]
    %v45 = vld [vmem:[%s2 + $0xb8] sm:$0xff]
    %v46 = vld [vmem:[%s2 + $0xc0] sm:$0xff]
    %v47 = vld [vmem:[%s2 + $0xc8] sm:$0xff]
    %v48 = vld [vmem:[%s2 + $0xd0] sm:$0xff]
    %v49 = vld [vmem:[%s2 + $0xd8] sm:$0xff]
    %v50 = vld [vmem:[%s2 + $0xe0] sm:$0xff]
    %v51 = vld [vmem:[%s2 + $0xe8] sm:$0xff]
    %v52 = vld [vmem:[%s2 + $0xf0] sm:$0xff]
    %v53 = vld [vmem:[%s2 + $0xf8] sm:$0xff]
    %v54 = vld [vmem:[%s2 + $0x100] sm:$0xff]
    %v55 = vld [vmem:[%s2 + $0x108] sm:$0xff]
    %v56 = vld [vmem:[%s2 + $0x110] sm:$0xff]
    %v57 = vld [vmem:[%s2 + $0x118] sm:$0xff]
    %v58 = vld [vmem:[%s2 + $0x120] sm:$0xff]
    %v59 = vld [vmem:[%s2 + $0x128] sm:$0xff]
    %v60 = vld [vmem:[%s2 + $0x130] sm:$0xff]
    %v61 = vld [vmem:[%s2 + $0x138] sm:$0xff]
    %v62 = vld [vmem:[%s2 + $0x140] sm:$0xff]
    %v63 = vld [vmem:[%s2 + $0x148] sm:$0xff]
    %v64 = vld [vmem:[%s2 + $0x150] sm:$0xff]
    %v65 = vld [vmem:[%s2 + $0x158] sm:$0xff]
    %v66 = vld [vmem:[%s2 + $0x160] sm:$0xff]
    %v67 = vld [vmem:[%s2 + $0x168] sm:$0xff]
    %v68 = vld [vmem:[%s2 + $0x170] sm:$0xff]
    %v69 = vld [vmem:[%s2 + $0x178] sm:$0xff]
    %v70 = vld [vmem:[%s2 + $0x180] sm:$0xff]
    %v71 = vld [vmem:[%s2 + $0x188] sm:$0xff]
    %v72 = vsub.f32 1.0, %v22
    %v73 = vsub.f32 1.0, %v23
    %v74 = vsub.f32 1.0, %v24
    %v75 = vsub.f32 1.0, %v25
    %v76 = vsub.f32 1.0, %v26
    %v77 = vsub.f32 1.0, %v27
    %v78 = vsub.f32 1.0, %v28
    %v79 = vsub.f32 1.0, %v29
    %v80 = vsub.f32 1.0, %v30
    %v81 = vsub.f32 1.0, %v31
    %v82 = vsub.f32 1.0, %v32
    %v83 = vsub.f32 1.0, %v33
    %v84 = vsub.f32 1.0, %v34
    %v85 = vsub.f32 1.0, %v35
    %v86 = vsub.f32 1.0, %v36
    %v87 = vsub.f32 1.0, %v37
    %v88 = vsub.f32 1.0, %v38
    %v89 = vsub.f32 1.0, %v39
    %v90 = vsub.f32 1.0, %v40
    %v91 = vsub.f32 1.0, %v41
    %v92 = vsub.f32 1.0, %v42
    %v93 = vsub.f32 1.0, %v43
    %v94 = vsub.f32 1.0, %v44
    %v95 = vsub.f32 1.0, %v45
    %v96 = vsub.f32 1.0, %v46
    %v97 = vsub.f32 1.0, %v47
    %v98 = vsub.f32 1.0, %v48
    %v99 = vsub.f32 1.0, %v49
    %v100 = vsub.f32 1.0, %v50
    %v101 = vsub.f32 1.0, %v51
    %v102 = vsub.f32 1.0, %v52
    %v103 = vsub.f32 1.0, %v53
    %v104 = vsub.f32 1.0, %v54
    %v105 = vsub.f32 1.0, %v55
    %v106 = vsub.f32 1.0, %v56
    %v107 = vsub.f32 1.0, %v57
    %v108 = vsub.f32 1.0, %v58
    %v109 = vsub.f32 1.0, %v59
    %v110 = vsub.f32 1.0, %v60
    %v111 = vsub.f32 1.0, %v61
    %v112 = vsub.f32 1.0, %v62
    %v113 = vsub.f32 1.0, %v63
    %v114 = vsub.f32 1.0, %v64
    %v115 = vsub.f32 1.0, %v65
    %v116 = vsub.f32 1.0, %v66
    %v117 = vsub.f32 1.0, %v67
    %v118 = vsub.f32 1.0, %v68
    %v119 = vsub.f32 1.0, %v69
    %v120 = vsub.f32 1.0, %v70
    %v121 = vsub.f32 1.0, %v71
    %v122 = vmax.f32 %v72, 1e-30
    %v123 = vmax.f32 %v73, 1e-30
    %v124 = vmax.f32 %v74, 1e-30
    %v125 = vmax.f32 %v75, 1e-30
    %v126 = vmax.f32 %v76, 1e-30
    %v127 = vmax.f32 %v77, 1e-30
    %v128 = vmax.f32 %v78, 1e-30
    %v129 = vmax.f32 %v79, 1e-30
    %v130 = vmax.f32 %v80, 1e-30
    %v131 = vmax.f32 %v81, 1e-30
    %v132 = vmax.f32 %v82, 1e-30
    %v133 = vmax.f32 %v83, 1e-30
    %v134 = vmax.f32 %v84, 1e-30
    %v135 = vmax.f32 %v85, 1e-30
    %v136 = vmax.f32 %v86, 1e-30
    %v137 = vmax.f32 %v87, 1e-30
    %v138 = vmax.f32 %v88, 1e-30
    %v139 = vmax.f32 %v89, 1e-30
    %v140 = vmax.f32 %v90, 1e-30
    %v141 = vmax.f32 %v91, 1e-30
    %v142 = vmax.f32 %v92, 1e-30
    %v143 = vmax.f32 %v93, 1e-30
    %v144 = vmax.f32 %v94, 1e-30
    %v145 = vmax.f32 %v95, 1e-30
    %v146 = vmax.f32 %v96, 1e-30
    %v147 = vmax.f32 %v97, 1e-30
    %v148 = vmax.f32 %v98, 1e-30
    %v149 = vmax.f32 %v99, 1e-30
    %v150 = vmax.f32 %v100, 1e-30
    %v151 = vmax.f32 %v101, 1e-30
    %v152 = vmax.f32 %v102, 1e-30
    %v153 = vmax.f32 %v103, 1e-30
    %v154 = vmax.f32 %v104, 1e-30
    %v155 = vmax.f32 %v105, 1e-30
    %v156 = vmax.f32 %v106, 1e-30
    %v157 = vmax.f32 %v107, 1e-30
    %v158 = vmax.f32 %v108, 1e-30
    %v159 = vmax.f32 %v109, 1e-30
    %v160 = vmax.f32 %v110, 1e-30
    %v161 = vmax.f32 %v111, 1e-30
    %v162 = vmax.f32 %v112, 1e-30
    %v163 = vmax.f32 %v113, 1e-30
    %v164 = vmax.f32 %v114, 1e-30
    %v165 = vmax.f32 %v115, 1e-30
    %v166 = vmax.f32 %v116, 1e-30
    %v167 = vmax.f32 %v117, 1e-30
    %v168 = vmax.f32 %v118, 1e-30
    %v169 = vmax.f32 %v119, 1e-30
    %v170 = vmax.f32 %v120, 1e-30
    %v171 = vmax.f32 %v121, 1e-30
    %v172 = vlog2.pop %v122
    %v173 = vmul.f32 %v172, 0.6931472
    %v174 = vlog2.pop %v123
    %v175 = vmul.f32 %v174, 0.6931472
    %v176 = vlog2.pop %v124
    %v177 = vmul.f32 %v176, 0.6931472
    %v178 = vlog2.pop %v125
    %v179 = vmul.f32 %v178, 0.6931472
    %v180 = vlog2.pop %v126
    %v181 = vmul.f32 %v180, 0.6931472
    %v182 = vlog2.pop %v127
    %v183 = vmul.f32 %v182, 0.6931472
    %v184 = vlog2.pop %v128
    %v185 = vmul.f32 %v184, 0.6931472
    %v186 = vlog2.pop %v129
    %v187 = vmul.f32 %v186, 0.6931472
    %v188 = vlog2.pop %v130
    %v189 = vmul.f32 %v188, 0.6931472
    %v190 = vlog2.pop %v131
    %v191 = vmul.f32 %v190, 0.6931472
    %v192 = vlog2.pop %v132
    %v193 = vmul.f32 %v192, 0.6931472
    %v194 = vlog2.pop %v133
    %v195 = vmul.f32 %v194, 0.6931472
    %v196 = vlog2.pop %v134
    %v197 = vmul.f32 %v196, 0.6931472
    %v198 = vlog2.pop %v135
    %v199 = vmul.f32 %v198, 0.6931472
    %v200 = vlog2.pop %v136
    %v201 = vmul.f32 %v200, 0.6931472
    %v202 = vlog2.pop %v137
    %v203 = vmul.f32 %v202, 0.6931472
    %v204 = vlog2.pop %v138
    %v205 = vmul.f32 %v204, 0.6931472
    %v206 = vlog2.pop %v139
    %v207 = vmul.f32 %v206, 0.6931472
    %v208 = vlog2.pop %v140
    %v209 = vmul.f32 %v208, 0.6931472
    %v210 = vlog2.pop %v141
    %v211 = vmul.f32 %v210, 0.6931472
    %v212 = vlog2.pop %v142
    %v213 = vmul.f32 %v212, 0.6931472
    %v214 = vlog2.pop %v143
    %v215 = vmul.f32 %v214, 0.6931472
    %v216 = vlog2.pop %v144
    %v217 = vmul.f32 %v216, 0.6931472
    %v218 = vlog2.pop %v145
    %v219 = vmul.f32 %v218, 0.6931472
    %v220 = vlog2.pop %v146
    %v221 = vmul.f32 %v220, 0.6931472
    %v222 = vlog2.pop %v147
    %v223 = vmul.f32 %v222, 0.6931472
    %v224 = vlog2.pop %v148
    %v225 = vmul.f32 %v224, 0.6931472
    %v226 = vlog2.pop %v149
    %v227 = vmul.f32 %v226, 0.6931472
    %v228 = vlog2.pop %v150
    %v229 = vmul.f32 %v228, 0.6931472
    %v230 = vlog2.pop %v151
    %v231 = vmul.f32 %v230, 0.6931472
    %v232 = vlog2.pop %v152
    %v233 = vmul.f32 %v232, 0.6931472
    %v234 = vlog2.pop %v153
    %v235 = vmul.f32 %v234, 0.6931472
    %v236 = vlog2.pop %v154
    %v237 = vmul.f32 %v236, 0.6931472
    %v238 = vlog2.pop %v155
    %v239 = vmul.f32 %v238, 0.6931472
    %v240 = vlog2.pop %v156
    %v241 = vmul.f32 %v240, 0.6931472
    %v242 = vlog2.pop %v157
    %v243 = vmul.f32 %v242, 0.6931472
    %v244 = vlog2.pop %v158
    %v245 = vmul.f32 %v244, 0.6931472
    %v246 = vlog2.pop %v159
    %v247 = vmul.f32 %v246, 0.6931472
    %v248 = vlog2.pop %v160
    %v249 = vmul.f32 %v248, 0.6931472
    %v250 = vlog2.pop %v161
    %v251 = vmul.f32 %v250, 0.6931472
    %v252 = vlog2.pop %v162
    %v253 = vmul.f32 %v252, 0.6931472
    %v254 = vlog2.pop %v163
    %v255 = vmul.f32 %v254, 0.6931472
    %v256 = vlog2.pop %v164
    %v257 = vmul.f32 %v256, 0.6931472
    %v258 = vlog2.pop %v165
    %v259 = vmul.f32 %v258, 0.6931472
    %v260 = vlog2.pop %v166
    %v261 = vmul.f32 %v260, 0.6931472
    %v262 = vlog2.pop %v167
    %v263 = vmul.f32 %v262, 0.6931472
    %v264 = vlog2.pop %v168
    %v265 = vmul.f32 %v264, 0.6931472
    %v266 = vlog2.pop %v169
    %v267 = vmul.f32 %v266, 0.6931472
    %v268 = vlog2.pop %v170
    %v269 = vmul.f32 %v268, 0.6931472
    %v270 = vlog2.pop %v171
    %v271 = vmul.f32 %v270, 0.6931472
    %v272 = vsub.f32 0.0, %v173
    %v273 = vsub.f32 0.0, %v175
    %v274 = vsub.f32 0.0, %v177
    %v275 = vsub.f32 0.0, %v179
    %v276 = vsub.f32 0.0, %v181
    %v277 = vsub.f32 0.0, %v183
    %v278 = vsub.f32 0.0, %v185
    %v279 = vsub.f32 0.0, %v187
    %v280 = vsub.f32 0.0, %v189
    %v281 = vsub.f32 0.0, %v191
    %v282 = vsub.f32 0.0, %v193
    %v283 = vsub.f32 0.0, %v195
    %v284 = vsub.f32 0.0, %v197
    %v285 = vsub.f32 0.0, %v199
    %v286 = vsub.f32 0.0, %v201
    %v287 = vsub.f32 0.0, %v203
    %v288 = vsub.f32 0.0, %v205
    %v289 = vsub.f32 0.0, %v207
    %v290 = vsub.f32 0.0, %v209
    %v291 = vsub.f32 0.0, %v211
    %v292 = vsub.f32 0.0, %v213
    %v293 = vsub.f32 0.0, %v215
    %v294 = vsub.f32 0.0, %v217
    %v295 = vsub.f32 0.0, %v219
    %v296 = vsub.f32 0.0, %v221
    %v297 = vsub.f32 0.0, %v223
    %v298 = vsub.f32 0.0, %v225
    %v299 = vsub.f32 0.0, %v227
    %v300 = vsub.f32 0.0, %v229
    %v301 = vsub.f32 0.0, %v231
    %v302 = vsub.f32 0.0, %v233
    %v303 = vsub.f32 0.0, %v235
    %v304 = vsub.f32 0.0, %v237
    %v305 = vsub.f32 0.0, %v239
    %v306 = vsub.f32 0.0, %v241
    %v307 = vsub.f32 0.0, %v243
    %v308 = vsub.f32 0.0, %v245
    %v309 = vsub.f32 0.0, %v247
    %v310 = vsub.f32 0.0, %v249
    %v311 = vsub.f32 0.0, %v251
    %v312 = vsub.f32 0.0, %v253
    %v313 = vsub.f32 0.0, %v255
    %v314 = vsub.f32 0.0, %v257
    %v315 = vsub.f32 0.0, %v259
    %v316 = vsub.f32 0.0, %v261
    %v317 = vsub.f32 0.0, %v263
    %v318 = vsub.f32 0.0, %v265
    %v319 = vsub.f32 0.0, %v267
    %v320 = vsub.f32 0.0, %v269
    %v321 = vsub.f32 0.0, %v271
    %vm322 = vcmp.gt.f32.partialorder %v272, 0.0
    %vm323 = vcmp.gt.f32.partialorder %v273, 0.0
    %vm324 = vcmp.gt.f32.partialorder %v274, 0.0
    %vm325 = vcmp.gt.f32.partialorder %v275, 0.0
    %vm326 = vcmp.gt.f32.partialorder %v276, 0.0
    %vm327 = vcmp.gt.f32.partialorder %v277, 0.0
    %vm328 = vcmp.gt.f32.partialorder %v278, 0.0
    %vm329 = vcmp.gt.f32.partialorder %v279, 0.0
    %vm330 = vcmp.gt.f32.partialorder %v280, 0.0
    %vm331 = vcmp.gt.f32.partialorder %v281, 0.0
    %vm332 = vcmp.gt.f32.partialorder %v282, 0.0
    %vm333 = vcmp.gt.f32.partialorder %v283, 0.0
    %vm334 = vcmp.gt.f32.partialorder %v284, 0.0
    %vm335 = vcmp.gt.f32.partialorder %v285, 0.0
    %vm336 = vcmp.gt.f32.partialorder %v286, 0.0
    %vm337 = vcmp.gt.f32.partialorder %v287, 0.0
    %vm338 = vcmp.gt.f32.partialorder %v288, 0.0
    %vm339 = vcmp.gt.f32.partialorder %v289, 0.0
    %vm340 = vcmp.gt.f32.partialorder %v290, 0.0
    %vm341 = vcmp.gt.f32.partialorder %v291, 0.0
    %vm342 = vcmp.gt.f32.partialorder %v292, 0.0
    %vm343 = vcmp.gt.f32.partialorder %v293, 0.0
    %vm344 = vcmp.gt.f32.partialorder %v294, 0.0
    %vm345 = vcmp.gt.f32.partialorder %v295, 0.0
    %vm346 = vcmp.gt.f32.partialorder %v296, 0.0
    %vm347 = vcmp.gt.f32.partialorder %v297, 0.0
    %vm348 = vcmp.gt.f32.partialorder %v298, 0.0
    %vm349 = vcmp.gt.f32.partialorder %v299, 0.0
    %vm350 = vcmp.gt.f32.partialorder %v300, 0.0
    %vm351 = vcmp.gt.f32.partialorder %v301, 0.0
    %vm352 = vcmp.gt.f32.partialorder %v302, 0.0
    %vm353 = vcmp.gt.f32.partialorder %v303, 0.0
    %vm354 = vcmp.gt.f32.partialorder %v304, 0.0
    %vm355 = vcmp.gt.f32.partialorder %v305, 0.0
    %vm356 = vcmp.gt.f32.partialorder %v306, 0.0
    %vm357 = vcmp.gt.f32.partialorder %v307, 0.0
    %vm358 = vcmp.gt.f32.partialorder %v308, 0.0
    %vm359 = vcmp.gt.f32.partialorder %v309, 0.0
    %vm360 = vcmp.gt.f32.partialorder %v310, 0.0
    %vm361 = vcmp.gt.f32.partialorder %v311, 0.0
    %vm362 = vcmp.gt.f32.partialorder %v312, 0.0
    %vm363 = vcmp.gt.f32.partialorder %v313, 0.0
    %vm364 = vcmp.gt.f32.partialorder %v314, 0.0
    %vm365 = vcmp.gt.f32.partialorder %v315, 0.0
    %vm366 = vcmp.gt.f32.partialorder %v316, 0.0
    %vm367 = vcmp.gt.f32.partialorder %v317, 0.0
    %vm368 = vcmp.gt.f32.partialorder %v318, 0.0
    %vm369 = vcmp.gt.f32.partialorder %v319, 0.0
    %vm370 = vcmp.gt.f32.partialorder %v320, 0.0
    %vm371 = vcmp.gt.f32.partialorder %v321, 0.0
    %v372 = vsel %vm322, %v272, 1.0
    %v373 = vsel %vm323, %v273, 1.0
    %v374 = vsel %vm324, %v274, 1.0
    %v375 = vsel %vm325, %v275, 1.0
    %v376 = vsel %vm326, %v276, 1.0
    %v377 = vsel %vm327, %v277, 1.0
    %v378 = vsel %vm328, %v278, 1.0
    %v379 = vsel %vm329, %v279, 1.0
    %v380 = vsel %vm330, %v280, 1.0
    %v381 = vsel %vm331, %v281, 1.0
    %v382 = vsel %vm332, %v282, 1.0
    %v383 = vsel %vm333, %v283, 1.0
    %v384 = vsel %vm334, %v284, 1.0
    %v385 = vsel %vm335, %v285, 1.0
    %v386 = vsel %vm336, %v286, 1.0
    %v387 = vsel %vm337, %v287, 1.0
    %v388 = vsel %vm338, %v288, 1.0
    %v389 = vsel %vm339, %v289, 1.0
    %v390 = vsel %vm340, %v290, 1.0
    %v391 = vsel %vm341, %v291, 1.0
    %v392 = vsel %vm342, %v292, 1.0
    %v393 = vsel %vm343, %v293, 1.0
    %v394 = vsel %vm344, %v294, 1.0
    %v395 = vsel %vm345, %v295, 1.0
    %v396 = vsel %vm346, %v296, 1.0
    %v397 = vsel %vm347, %v297, 1.0
    %v398 = vsel %vm348, %v298, 1.0
    %v399 = vsel %vm349, %v299, 1.0
    %v400 = vsel %vm350, %v300, 1.0
    %v401 = vsel %vm351, %v301, 1.0
    %v402 = vsel %vm352, %v302, 1.0
    %v403 = vsel %vm353, %v303, 1.0
    %v404 = vsel %vm354, %v304, 1.0
    %v405 = vsel %vm355, %v305, 1.0
    %v406 = vsel %vm356, %v306, 1.0
    %v407 = vsel %vm357, %v307, 1.0
    %v408 = vsel %vm358, %v308, 1.0
    %v409 = vsel %vm359, %v309, 1.0
    %v410 = vsel %vm360, %v310, 1.0
    %v411 = vsel %vm361, %v311, 1.0
    %v412 = vsel %vm362, %v312, 1.0
    %v413 = vsel %vm363, %v313, 1.0
    %v414 = vsel %vm364, %v314, 1.0
    %v415 = vsel %vm365, %v315, 1.0
    %v416 = vsel %vm366, %v316, 1.0
    %v417 = vsel %vm367, %v317, 1.0
    %v418 = vsel %vm368, %v318, 1.0
    %v419 = vsel %vm369, %v319, 1.0
    %v420 = vsel %vm370, %v320, 1.0
    %v421 = vsel %vm371, %v321, 1.0
    %v422 = vlog2.pop %v372
    %v423 = vmul.f32 %v422, 0.6931472
    %v424 = vlog2.pop %v373
    %v425 = vmul.f32 %v424, 0.6931472
    %v426 = vlog2.pop %v374
    %v427 = vmul.f32 %v426, 0.6931472
    %v428 = vlog2.pop %v375
    %v429 = vmul.f32 %v428, 0.6931472
    %v430 = vlog2.pop %v376
    %v431 = vmul.f32 %v430, 0.6931472
    %v432 = vlog2.pop %v377
    %v433 = vmul.f32 %v432, 0.6931472
    %v434 = vlog2.pop %v378
    %v435 = vmul.f32 %v434, 0.6931472
    %v436 = vlog2.pop %v379
    %v437 = vmul.f32 %v436, 0.6931472
    %v438 = vlog2.pop %v380
    %v439 = vmul.f32 %v438, 0.6931472
    %v440 = vlog2.pop %v381
    %v441 = vmul.f32 %v440, 0.6931472
    %v442 = vlog2.pop %v382
    %v443 = vmul.f32 %v442, 0.6931472
    %v444 = vlog2.pop %v383
    %v445 = vmul.f32 %v444, 0.6931472
    %v446 = vlog2.pop %v384
    %v447 = vmul.f32 %v446, 0.6931472
    %v448 = vlog2.pop %v385
    %v449 = vmul.f32 %v448, 0.6931472
    %v450 = vlog2.pop %v386
    %v451 = vmul.f32 %v450, 0.6931472
    %v452 = vlog2.pop %v387
    %v453 = vmul.f32 %v452, 0.6931472
    %v454 = vlog2.pop %v388
    %v455 = vmul.f32 %v454, 0.6931472
    %v456 = vlog2.pop %v389
    %v457 = vmul.f32 %v456, 0.6931472
    %v458 = vlog2.pop %v390
    %v459 = vmul.f32 %v458, 0.6931472
    %v460 = vlog2.pop %v391
    %v461 = vmul.f32 %v460, 0.6931472
    %v462 = vlog2.pop %v392
    %v463 = vmul.f32 %v462, 0.6931472
    %v464 = vlog2.pop %v393
    %v465 = vmul.f32 %v464, 0.6931472
    %v466 = vlog2.pop %v394
    %v467 = vmul.f32 %v466, 0.6931472
    %v468 = vlog2.pop %v395
    %v469 = vmul.f32 %v468, 0.6931472
    %v470 = vlog2.pop %v396
    %v471 = vmul.f32 %v470, 0.6931472
    %v472 = vlog2.pop %v397
    %v473 = vmul.f32 %v472, 0.6931472
    %v474 = vlog2.pop %v398
    %v475 = vmul.f32 %v474, 0.6931472
    %v476 = vlog2.pop %v399
    %v477 = vmul.f32 %v476, 0.6931472
    %v478 = vlog2.pop %v400
    %v479 = vmul.f32 %v478, 0.6931472
    %v480 = vlog2.pop %v401
    %v481 = vmul.f32 %v480, 0.6931472
    %v482 = vlog2.pop %v402
    %v483 = vmul.f32 %v482, 0.6931472
    %v484 = vlog2.pop %v403
    %v485 = vmul.f32 %v484, 0.6931472
    %v486 = vlog2.pop %v404
    %v487 = vmul.f32 %v486, 0.6931472
    %v488 = vlog2.pop %v405
    %v489 = vmul.f32 %v488, 0.6931472
    %v490 = vlog2.pop %v406
    %v491 = vmul.f32 %v490, 0.6931472
    %v492 = vlog2.pop %v407
    %v493 = vmul.f32 %v492, 0.6931472
    %v494 = vlog2.pop %v408
    %v495 = vmul.f32 %v494, 0.6931472
    %v496 = vlog2.pop %v409
    %v497 = vmul.f32 %v496, 0.6931472
    %v498 = vlog2.pop %v410
    %v499 = vmul.f32 %v498, 0.6931472
    %v500 = vlog2.pop %v411
    %v501 = vmul.f32 %v500, 0.6931472
    %v502 = vlog2.pop %v412
    %v503 = vmul.f32 %v502, 0.6931472
    %v504 = vlog2.pop %v413
    %v505 = vmul.f32 %v504, 0.6931472
    %v506 = vlog2.pop %v414
    %v507 = vmul.f32 %v506, 0.6931472
    %v508 = vlog2.pop %v415
    %v509 = vmul.f32 %v508, 0.6931472
    %v510 = vlog2.pop %v416
    %v511 = vmul.f32 %v510, 0.6931472
    %v512 = vlog2.pop %v417
    %v513 = vmul.f32 %v512, 0.6931472
    %v514 = vlog2.pop %v418
    %v515 = vmul.f32 %v514, 0.6931472
    %v516 = vlog2.pop %v419
    %v517 = vmul.f32 %v516, 0.6931472
    %v518 = vlog2.pop %v420
    %v519 = vmul.f32 %v518, 0.6931472
    %v520 = vlog2.pop %v421
    %v521 = vmul.f32 %v520, 0.6931472
    %v522 = vmul.f32 %v20, %v423
    %v523 = vmul.f32 %v20, %v425
    %v524 = vmul.f32 %v20, %v427
    %v525 = vmul.f32 %v20, %v429
    %v526 = vmul.f32 %v20, %v431
    %v527 = vmul.f32 %v20, %v433
    %v528 = vmul.f32 %v20, %v435
    %v529 = vmul.f32 %v20, %v437
    %v530 = vmul.f32 %v20, %v439
    %v531 = vmul.f32 %v20, %v441
    %v532 = vmul.f32 %v20, %v443
    %v533 = vmul.f32 %v20, %v445
    %v534 = vmul.f32 %v20, %v447
    %v535 = vmul.f32 %v20, %v449
    %v536 = vmul.f32 %v20, %v451
    %v537 = vmul.f32 %v20, %v453
    %v538 = vmul.f32 %v20, %v455
    %v539 = vmul.f32 %v20, %v457
    %v540 = vmul.f32 %v20, %v459
    %v541 = vmul.f32 %v20, %v461
    %v542 = vmul.f32 %v20, %v463
    %v543 = vmul.f32 %v20, %v465
    %v544 = vmul.f32 %v20, %v467
    %v545 = vmul.f32 %v20, %v469
    %v546 = vmul.f32 %v20, %v471
    %v547 = vmul.f32 %v20, %v473
    %v548 = vmul.f32 %v20, %v475
    %v549 = vmul.f32 %v20, %v477
    %v550 = vmul.f32 %v20, %v479
    %v551 = vmul.f32 %v20, %v481
    %v552 = vmul.f32 %v20, %v483
    %v553 = vmul.f32 %v20, %v485
    %v554 = vmul.f32 %v20, %v487
    %v555 = vmul.f32 %v20, %v489
    %v556 = vmul.f32 %v20, %v491
    %v557 = vmul.f32 %v20, %v493
    %v558 = vmul.f32 %v20, %v495
    %v559 = vmul.f32 %v20, %v497
    %v560 = vmul.f32 %v20, %v499
    %v561 = vmul.f32 %v20, %v501
    %v562 = vmul.f32 %v20, %v503
    %v563 = vmul.f32 %v20, %v505
    %v564 = vmul.f32 %v20, %v507
    %v565 = vmul.f32 %v20, %v509
    %v566 = vmul.f32 %v20, %v511
    %v567 = vmul.f32 %v20, %v513
    %v568 = vmul.f32 %v20, %v515
    %v569 = vmul.f32 %v20, %v517
    %v570 = vmul.f32 %v20, %v519
    %v571 = vmul.f32 %v20, %v521
    %v572 = vmul.f32 %v522, 1.442695
    %v573 = vpow.pop %v572
    %v574 = vmul.f32 %v523, 1.442695
    %v575 = vpow.pop %v574
    %v576 = vmul.f32 %v524, 1.442695
    %v577 = vpow.pop %v576
    %v578 = vmul.f32 %v525, 1.442695
    %v579 = vpow.pop %v578
    %v580 = vmul.f32 %v526, 1.442695
    %v581 = vpow.pop %v580
    %v582 = vmul.f32 %v527, 1.442695
    %v583 = vpow.pop %v582
    %v584 = vmul.f32 %v528, 1.442695
    %v585 = vpow.pop %v584
    %v586 = vmul.f32 %v529, 1.442695
    %v587 = vpow.pop %v586
    %v588 = vmul.f32 %v530, 1.442695
    %v589 = vpow.pop %v588
    %v590 = vmul.f32 %v531, 1.442695
    %v591 = vpow.pop %v590
    %v592 = vmul.f32 %v532, 1.442695
    %v593 = vpow.pop %v592
    %v594 = vmul.f32 %v533, 1.442695
    %v595 = vpow.pop %v594
    %v596 = vmul.f32 %v534, 1.442695
    %v597 = vpow.pop %v596
    %v598 = vmul.f32 %v535, 1.442695
    %v599 = vpow.pop %v598
    %v600 = vmul.f32 %v536, 1.442695
    %v601 = vpow.pop %v600
    %v602 = vmul.f32 %v537, 1.442695
    %v603 = vpow.pop %v602
    %v604 = vmul.f32 %v538, 1.442695
    %v605 = vpow.pop %v604
    %v606 = vmul.f32 %v539, 1.442695
    %v607 = vpow.pop %v606
    %v608 = vmul.f32 %v540, 1.442695
    %v609 = vpow.pop %v608
    %v610 = vmul.f32 %v541, 1.442695
    %v611 = vpow.pop %v610
    %v612 = vmul.f32 %v542, 1.442695
    %v613 = vpow.pop %v612
    %v614 = vmul.f32 %v543, 1.442695
    %v615 = vpow.pop %v614
    %v616 = vmul.f32 %v544, 1.442695
    %v617 = vpow.pop %v616
    %v618 = vmul.f32 %v545, 1.442695
    %v619 = vpow.pop %v618
    %v620 = vmul.f32 %v546, 1.442695
    %v621 = vpow.pop %v620
    %v622 = vmul.f32 %v547, 1.442695
    %v623 = vpow.pop %v622
    %v624 = vmul.f32 %v548, 1.442695
    %v625 = vpow.pop %v624
    %v626 = vmul.f32 %v549, 1.442695
    %v627 = vpow.pop %v626
    %v628 = vmul.f32 %v550, 1.442695
    %v629 = vpow.pop %v628
    %v630 = vmul.f32 %v551, 1.442695
    %v631 = vpow.pop %v630
    %v632 = vmul.f32 %v552, 1.442695
    %v633 = vpow.pop %v632
    %v634 = vmul.f32 %v553, 1.442695
    %v635 = vpow.pop %v634
    %v636 = vmul.f32 %v554, 1.442695
    %v637 = vpow.pop %v636
    %v638 = vmul.f32 %v555, 1.442695
    %v639 = vpow.pop %v638
    %v640 = vmul.f32 %v556, 1.442695
    %v641 = vpow.pop %v640
    %v642 = vmul.f32 %v557, 1.442695
    %v643 = vpow.pop %v642
    %v644 = vmul.f32 %v558, 1.442695
    %v645 = vpow.pop %v644
    %v646 = vmul.f32 %v559, 1.442695
    %v647 = vpow.pop %v646
    %v648 = vmul.f32 %v560, 1.442695
    %v649 = vpow.pop %v648
    %v650 = vmul.f32 %v561, 1.442695
    %v651 = vpow.pop %v650
    %v652 = vmul.f32 %v562, 1.442695
    %v653 = vpow.pop %v652
    %v654 = vmul.f32 %v563, 1.442695
    %v655 = vpow.pop %v654
    %v656 = vmul.f32 %v564, 1.442695
    %v657 = vpow.pop %v656
    %v658 = vmul.f32 %v565, 1.442695
    %v659 = vpow.pop %v658
    %v660 = vmul.f32 %v566, 1.442695
    %v661 = vpow.pop %v660
    %v662 = vmul.f32 %v567, 1.442695
    %v663 = vpow.pop %v662
    %v664 = vmul.f32 %v568, 1.442695
    %v665 = vpow.pop %v664
    %v666 = vmul.f32 %v569, 1.442695
    %v667 = vpow.pop %v666
    %v668 = vmul.f32 %v570, 1.442695
    %v669 = vpow.pop %v668
    %v670 = vmul.f32 %v571, 1.442695
    %v671 = vpow.pop %v670
    %v672 = vsel %vm322, %v573, 0.0
    %v673 = vsel %vm323, %v575, 0.0
    %v674 = vsel %vm324, %v577, 0.0
    %v675 = vsel %vm325, %v579, 0.0
    %v676 = vsel %vm326, %v581, 0.0
    %v677 = vsel %vm327, %v583, 0.0
    %v678 = vsel %vm328, %v585, 0.0
    %v679 = vsel %vm329, %v587, 0.0
    %v680 = vsel %vm330, %v589, 0.0
    %v681 = vsel %vm331, %v591, 0.0
    %v682 = vsel %vm332, %v593, 0.0
    %v683 = vsel %vm333, %v595, 0.0
    %v684 = vsel %vm334, %v597, 0.0
    %v685 = vsel %vm335, %v599, 0.0
    %v686 = vsel %vm336, %v601, 0.0
    %v687 = vsel %vm337, %v603, 0.0
    %v688 = vsel %vm338, %v605, 0.0
    %v689 = vsel %vm339, %v607, 0.0
    %v690 = vsel %vm340, %v609, 0.0
    %v691 = vsel %vm341, %v611, 0.0
    %v692 = vsel %vm342, %v613, 0.0
    %v693 = vsel %vm343, %v615, 0.0
    %v694 = vsel %vm344, %v617, 0.0
    %v695 = vsel %vm345, %v619, 0.0
    %v696 = vsel %vm346, %v621, 0.0
    %v697 = vsel %vm347, %v623, 0.0
    %v698 = vsel %vm348, %v625, 0.0
    %v699 = vsel %vm349, %v627, 0.0
    %v700 = vsel %vm350, %v629, 0.0
    %v701 = vsel %vm351, %v631, 0.0
    %v702 = vsel %vm352, %v633, 0.0
    %v703 = vsel %vm353, %v635, 0.0
    %v704 = vsel %vm354, %v637, 0.0
    %v705 = vsel %vm355, %v639, 0.0
    %v706 = vsel %vm356, %v641, 0.0
    %v707 = vsel %vm357, %v643, 0.0
    %v708 = vsel %vm358, %v645, 0.0
    %v709 = vsel %vm359, %v647, 0.0
    %v710 = vsel %vm360, %v649, 0.0
    %v711 = vsel %vm361, %v651, 0.0
    %v712 = vsel %vm362, %v653, 0.0
    %v713 = vsel %vm363, %v655, 0.0
    %v714 = vsel %vm364, %v657, 0.0
    %v715 = vsel %vm365, %v659, 0.0
    %v716 = vsel %vm366, %v661, 0.0
    %v717 = vsel %vm367, %v663, 0.0
    %v718 = vsel %vm368, %v665, 0.0
    %v719 = vsel %vm369, %v667, 0.0
    %v720 = vsel %vm370, %v669, 0.0
    %v721 = vsel %vm371, %v671, 0.0
    %vm722 = vcmask 130048
    %v723 = vsel %vm722, %v672, 0.0
    %v724 = vsel %vm722, %v673, 0.0
    %v725 = vadd.f32 %v723, %v724
    %v726 = vsel %vm722, %v674, 0.0
    %v727 = vadd.f32 %v725, %v726
    %v728 = vsel %vm722, %v675, 0.0
    %v729 = vadd.f32 %v727, %v728
    %v730 = vsel %vm722, %v676, 0.0
    %v731 = vadd.f32 %v729, %v730
    %v732 = vsel %vm722, %v677, 0.0
    %v733 = vadd.f32 %v731, %v732
    %v734 = vsel %vm722, %v678, 0.0
    %v735 = vadd.f32 %v733, %v734
    %v736 = vsel %vm722, %v679, 0.0
    %v737 = vadd.f32 %v735, %v736
    %v738 = vsel %vm722, %v680, 0.0
    %v739 = vadd.f32 %v737, %v738
    %v740 = vsel %vm722, %v681, 0.0
    %v741 = vadd.f32 %v739, %v740
    %v742 = vsel %vm722, %v682, 0.0
    %v743 = vadd.f32 %v741, %v742
    %v744 = vsel %vm722, %v683, 0.0
    %v745 = vadd.f32 %v743, %v744
    %v746 = vsel %vm722, %v684, 0.0
    %v747 = vadd.f32 %v745, %v746
    %v748 = vsel %vm722, %v685, 0.0
    %v749 = vadd.f32 %v747, %v748
    %v750 = vsel %vm722, %v686, 0.0
    %v751 = vadd.f32 %v749, %v750
    %v752 = vsel %vm722, %v687, 0.0
    %v753 = vadd.f32 %v751, %v752
    %v754 = vsel %vm722, %v688, 0.0
    %v755 = vadd.f32 %v753, %v754
    %v756 = vsel %vm722, %v689, 0.0
    %v757 = vadd.f32 %v755, %v756
    %v758 = vsel %vm722, %v690, 0.0
    %v759 = vadd.f32 %v757, %v758
    %v760 = vsel %vm722, %v691, 0.0
    %v761 = vadd.f32 %v759, %v760
    %v762 = vsel %vm722, %v692, 0.0
    %v763 = vadd.f32 %v761, %v762
    %v764 = vsel %vm722, %v693, 0.0
    %v765 = vadd.f32 %v763, %v764
    %v766 = vsel %vm722, %v694, 0.0
    %v767 = vadd.f32 %v765, %v766
    %v768 = vsel %vm722, %v695, 0.0
    %v769 = vadd.f32 %v767, %v768
    %v770 = vsel %vm722, %v696, 0.0
    %v771 = vadd.f32 %v769, %v770
    %v772 = vsel %vm722, %v697, 0.0
    %v773 = vadd.f32 %v771, %v772
    %v774 = vsel %vm722, %v698, 0.0
    %v775 = vadd.f32 %v773, %v774
    %v776 = vsel %vm722, %v699, 0.0
    %v777 = vadd.f32 %v775, %v776
    %v778 = vsel %vm722, %v700, 0.0
    %v779 = vadd.f32 %v777, %v778
    %v780 = vsel %vm722, %v701, 0.0
    %v781 = vadd.f32 %v779, %v780
    %v782 = vsel %vm722, %v702, 0.0
    %v783 = vadd.f32 %v781, %v782
    %v784 = vsel %vm722, %v703, 0.0
    %v785 = vadd.f32 %v783, %v784
    %v786 = vsel %vm722, %v704, 0.0
    %v787 = vadd.f32 %v785, %v786
    %v788 = vsel %vm722, %v705, 0.0
    %v789 = vadd.f32 %v787, %v788
    %v790 = vsel %vm722, %v706, 0.0
    %v791 = vadd.f32 %v789, %v790
    %v792 = vsel %vm722, %v707, 0.0
    %v793 = vadd.f32 %v791, %v792
    %v794 = vsel %vm722, %v708, 0.0
    %v795 = vadd.f32 %v793, %v794
    %v796 = vsel %vm722, %v709, 0.0
    %v797 = vadd.f32 %v795, %v796
    %v798 = vsel %vm722, %v710, 0.0
    %v799 = vadd.f32 %v797, %v798
    %v800 = vsel %vm722, %v711, 0.0
    %v801 = vadd.f32 %v799, %v800
    %v802 = vsel %vm722, %v712, 0.0
    %v803 = vadd.f32 %v801, %v802
    %v804 = vsel %vm722, %v713, 0.0
    %v805 = vadd.f32 %v803, %v804
    %v806 = vsel %vm722, %v714, 0.0
    %v807 = vadd.f32 %v805, %v806
    %v808 = vsel %vm722, %v715, 0.0
    %v809 = vadd.f32 %v807, %v808
    %v810 = vsel %vm722, %v716, 0.0
    %v811 = vadd.f32 %v809, %v810
    %v812 = vsel %vm722, %v717, 0.0
    %v813 = vadd.f32 %v811, %v812
    %v814 = vsel %vm722, %v718, 0.0
    %v815 = vadd.f32 %v813, %v814
    %v816 = vsel %vm722, %v719, 0.0
    %v817 = vadd.f32 %v815, %v816
    %v818 = vsel %vm722, %v720, 0.0
    %v819 = vadd.f32 %v817, %v818
    %v820 = vsel %vm722, %v721, 0.0
    %v821 = vadd.f32 %v819, %v820
    %v822 = vrcp.pop 50.0
    %v823 = vmul.f32 %v821, %v822
    %v824 = vmul.f32 %v21, %v823
    %825 = vst.msk [vmem:[#allocation2] sm:$0xff] %vm722, %v824
    %v826 = vld [vmem:[%s3] sm:$0xff]
    %v827 = vld [vmem:[%s3 + $0x8] sm:$0xff]
    %v829 = vsel %vm722, %v824, 0
    %831 = vmatprep.subr.mxu0 0.0
    %832 = vmatpush1.msra.mxu0 %v826
    %833 = vmatprep.subr.mxu0 0.0
    %834 = vmatpush1.msra.mxu0 %v827
    %835 = vmatprep.subr.mxu0 0.0
    %836 = vmatpush1.msra.mxu0 0.0
    %837 = vmatprep.subr.mxu0 0.0
    %838 = vmatpush1.msra.mxu0 0.0
    %839 = vmatprep.subr.mxu0 0.0
    %840 = vmatpush1.msra.mxu0 0.0
    %841 = vmatprep.subr.mxu0 0.0
    %842 = vmatpush1.msra.mxu0 0.0
    %843 = vmatprep.subr.mxu0 0.0
    %844 = vmatpush1.msra.mxu0 0.0
    %845 = vmatprep.subr.mxu0 0.0
    %846 = vmatpush1.msra.mxu0 0.0
    %847 = vmatprep.subr.mxu0 0.0
    %848 = vmatpush1.msra.mxu0 0.0
    %849 = vmatprep.subr.mxu0 0.0
    %850 = vmatpush1.msra.mxu0 0.0
    %851 = vmatprep.subr.mxu0 0.0
    %852 = vmatpush1.msra.mxu0 0.0
    %853 = vmatprep.subr.mxu0 0.0
    %854 = vmatpush1.msra.mxu0 0.0
    %855 = vmatprep.subr.mxu0 0.0
    %856 = vmatpush1.msra.mxu0 0.0
    %857 = vmatprep.subr.mxu0 0.0
    %858 = vmatpush1.msra.mxu0 0.0
    %859 = vmatprep.subr.mxu0 0.0
    %860 = vmatpush1.msra.mxu0 0.0
    %861 = vmatprep.subr.mxu0 0.0
    %862 = vmatpush1.msra.mxu0 0.0
    %863 = vmatprep.subr.mxu0 0.0
    %864 = vmatpush1.msra.mxu0 0.0
    %865 = vmatprep.subr.mxu0 0.0
    %866 = vmatpush1.msra.mxu0 0.0
    %867 = vmatprep.subr.mxu0 0.0
    %868 = vmatpush1.msra.mxu0 0.0
    %869 = vmatprep.subr.mxu0 0.0
    %870 = vmatpush1.msra.mxu0 0.0
    %871 = vmatprep.subr.mxu0 0.0
    %872 = vmatpush1.msra.mxu0 0.0
    %873 = vmatprep.subr.mxu0 0.0
    %874 = vmatpush1.msra.mxu0 0.0
    %875 = vmatprep.subr.mxu0 0.0
    %876 = vmatpush1.msra.mxu0 0.0
    %877 = vmatprep.subr.mxu0 0.0
    %878 = vmatpush1.msra.mxu0 0.0
    %879 = vmatprep.subr.mxu0 0.0
    %880 = vmatpush1.msra.mxu0 0.0
    %881 = vmatprep.subr.mxu0 0.0
    %882 = vmatpush1.msra.mxu0 0.0
    %883 = vmatprep.subr.mxu0 0.0
    %884 = vmatpush1.msra.mxu0 0.0
    %885 = vmatprep.subr.mxu0 0.0
    %886 = vmatpush1.msra.mxu0 0.0
    %887 = vmatprep.subr.mxu0 0.0
    %888 = vmatpush1.msra.mxu0 0.0
    %889 = vmatprep.subr.mxu0 0.0
    %890 = vmatpush1.msra.mxu0 0.0
    %891 = vmatprep.subr.mxu0 0.0
    %892 = vmatpush1.msra.mxu0 0.0
    %893 = vmatprep.subr.mxu0 0.0
    %894 = vmatpush1.msra.mxu0 0.0
    %895 = vmatprep.mubr.f32.mxu0 0.0
    %896 = vmatmul.mubr.f32.gmra.mrb[0].mxu0 %v829
    %v897 = vpop.f32.mrb[0].mxu0
    %v898 = vadd.f32 0.0, %v897
    %v899 = vpop.f32.mrb[0].mxu0
    %900 = vdwg.mxu0
    %vm901 = vcmask 261120
    %902 = vst.msk [vmem:[%s5] sm:$0xff] %vm901, %v898
    // Predicated region
    $region18: #{dcetm_forward.17} parent=1 // pred_check
      _
    $region19: #{dcetm_forward.17} parent=1 // pred_check_branch
      %904 = sbr.rel (0) target = $region21
    $region20: #{dcetm_forward.17} parent=1 // pred_region
      %s906 = ssub.s32 128, 128
      %907 = vsyncadd [#allocation3], %s906
      %s909 = sshll.u32 [#allocation2], 4
      %s910 = int_to_ptr.vmem [resolvable:$true] %s909
      %912 = dma.vmem_to_hbm [thread:$0]  %s910, 128, %s4, [#allocation3]
    $region21: #{dcetm_forward.17} parent=1 // pred_fallthru
      _
    // Predicated region
    $region22: #{dcetm_forward.17} parent=1 // pred_check
      _
    $region23: #{dcetm_forward.17} parent=1 // pred_check_branch
      %914 = sbr.rel (0) target = $region25
    $region24: #{dcetm_forward.17} parent=1 // pred_region
      _
    $region25: #{dcetm_forward.17} parent=1 // pred_fallthru
      _
    // Predicated region
    $region26: #{dcetm_forward.17} parent=1 // pred_check
      _
    $region27: #{dcetm_forward.17} parent=1 // pred_check_branch
      %916 = sbr.rel (0) target = $region29
    $region28: #{dcetm_forward.17} parent=1 // pred_region
      %917 = dma.done [#allocation3], 128
    $region29: #{dcetm_forward.17} parent=1 // pred_fallthru
      _
    // Predicated region
    $region30: #{dcetm_forward.17} parent=1 // pred_check
      _
    $region31: #{dcetm_forward.17} parent=1 // pred_check_branch
      %919 = sbr.rel (0) target = $region33
    $region32: #{dcetm_forward.17} parent=1 // pred_region
      _
    $region33: #{dcetm_forward.17} parent=1 // pred_fallthru
      _
    %920 = vsyncpa [#allocation3], 1

// kernel: dcetm_forward.19
$region0: #{dcetm_forward.19}
  #allocation0 [shape = 'u32[]', space=smem, size = 0x4, offset = 0x4, fixed_abs, tag = 'smem constant byte address 0x4 - core index']
  #allocation1 [shape = 'u32[144,128]{1,0:T(1,128)}', space=vmem, size = 0x12000, scoped, tag = 'internal scratch']
  %s0 = inlined_call_operand.vmem [shape: f32[8,32], index: 0, kind: input, shape index: {}]
  %s1 = inlined_call_operand.vmem [shape: f32[8,32], index: 1, kind: input, shape index: {}]
  %s2 = inlined_call_operand.vmem [shape: f32[3,8,32], index: 2, kind: input, shape index: {}]
  %s3 = inlined_call_operand.vmem [shape: f32[3], index: 3, kind: output, shape index: {}]
  %s4 = sld [smem:[#allocation0]]
  $region22: #{dcetm_forward.19} parent=0
    _
  %s6 = ssub.s32 1, %s4
  %s7 = scalar_select 0, %s6, %s4
  $region1: #{dcetm_forward.19} parent=0
    #allocation2 [shape = 'u8[512]{0}', space=smem, size = 0x200, scoped, tag = 'output window, operand 0, single buffered']
    #allocation3 [shape = 's32[1]{0}', space=sflag, size = 0x4, scoped, tag = 'scoped memory for dcetm_forward.19']
    %8 = vsyncpa [#allocation3], 0
    // Predicated region
    $region2: #{dcetm_forward.19} parent=1 // pred_check
      _
    $region3: #{dcetm_forward.19} parent=1 // pred_check_branch
      %10 = sbr.rel (0) target = $region5
    $region4: #{dcetm_forward.19} parent=1 // pred_region
      _
    $region5: #{dcetm_forward.19} parent=1 // pred_fallthru
      _
    // Predicated region
    $region6: #{dcetm_forward.19} parent=1 // pred_check
      _
    $region7: #{dcetm_forward.19} parent=1 // pred_check_branch
      %12 = sbr.rel (0) target = $region9
    $region8: #{dcetm_forward.19} parent=1 // pred_region
      _
    $region9: #{dcetm_forward.19} parent=1 // pred_fallthru
      _
    // Predicated region
    $region10: #{dcetm_forward.19} parent=1 // pred_check
      _
    $region11: #{dcetm_forward.19} parent=1 // pred_check_branch
      %14 = sbr.rel (0) target = $region13
    $region12: #{dcetm_forward.19} parent=1 // pred_region
      _
    $region13: #{dcetm_forward.19} parent=1 // pred_fallthru
      _
    %v15 = vld [vmem:[%s0] sm:$0xff]
    %v16 = vld [vmem:[%s1] sm:$0xff]
    %v17 = vld [vmem:[%s2] sm:$0xff]
    %v18 = vmax.f32 %v17, 1e-30
    %v19 = vlog2.pop %v18
    %v20 = vmul.f32 %v19, 0.6931472
    %v21 = vmul.f32 %v15, %v20
    %v22 = vsub.f32 %v21, %v17
    %v23 = vsub.f32 %v22, %v16
    %vm24 = vcmask 261120
    %v25 = vsel %vm24, %v23, 0.0
    %26 = vadd.xlane.f32.xlu0 %v25
    %v27 = vpop.xlane.xlu0 %26
    %v28 = vrot.slane %v27, 4
    %v29 = vadd.f32 %v27, %v28
    %v30 = vrot.slane %v29, 2
    %v31 = vadd.f32 %v29, %v30
    %v32 = vrot.slane %v31, 1
    %v33 = vadd.f32 %v31, %v32
    %s34 = vtos %v33
    %s35 = smul.f32 %s34, -0.125
    %s36 = scalar_lea.smem [#allocation2], 0
    %37 = sst [smem:[%s36]] %s35
    %s38 = scalar_lea.vmem %s2, 8
    %v39 = vld [vmem:[%s38] sm:$0xff]
    %v40 = vmax.f32 %v39, 1e-30
    %v41 = vlog2.pop %v40
    %v42 = vmul.f32 %v41, 0.6931472
    %v43 = vmul.f32 %v15, %v42
    %v44 = vsub.f32 %v43, %v39
    %v45 = vsub.f32 %v44, %v16
    %v46 = vsel %vm24, %v45, 0.0
    %47 = vadd.xlane.f32.xlu0 %v46
    %v48 = vpop.xlane.xlu0 %47
    %v49 = vrot.slane %v48, 4
    %v50 = vadd.f32 %v48, %v49
    %v51 = vrot.slane %v50, 2
    %v52 = vadd.f32 %v50, %v51
    %v53 = vrot.slane %v52, 1
    %v54 = vadd.f32 %v52, %v53
    %s55 = vtos %v54
    %s56 = smul.f32 %s55, -0.125
    %s57 = scalar_lea.smem [#allocation2], 1
    %58 = sst [smem:[%s57]] %s56
    %s59 = scalar_lea.vmem %s2, 16
    %v60 = vld [vmem:[%s59] sm:$0xff]
    %v61 = vmax.f32 %v60, 1e-30
    %v62 = vlog2.pop %v61
    %v63 = vmul.f32 %v62, 0.6931472
    %v64 = vmul.f32 %v15, %v63
    %v65 = vsub.f32 %v64, %v60
    %v66 = vsub.f32 %v65, %v16
    %v67 = vsel %vm24, %v66, 0.0
    %68 = vadd.xlane.f32.xlu0 %v67
    %v69 = vpop.xlane.xlu0 %68
    %v70 = vrot.slane %v69, 4
    %v71 = vadd.f32 %v69, %v70
    %v72 = vrot.slane %v71, 2
    %v73 = vadd.f32 %v71, %v72
    %v74 = vrot.slane %v73, 1
    %v75 = vadd.f32 %v73, %v74
    %s76 = vtos %v75
    %s77 = smul.f32 %s76, -0.125
    %s78 = scalar_lea.smem [#allocation2], 2
    %79 = sst [smem:[%s78]] %s77
    // Predicated region
    $region14: #{dcetm_forward.19} parent=1 // pred_check
      _
    $region15: #{dcetm_forward.19} parent=1 // pred_check_branch
      %81 = sbr.rel (0) target = $region17
    $region16: #{dcetm_forward.19} parent=1 // pred_region
      %s83 = ssub.s32 16, 16
      %84 = vsyncadd [#allocation3], %s83
      %s86 = sshll.u32 %s3, 4
      %s87 = int_to_ptr.vmem [resolvable:$true] %s86
      %89 = dma.smem_to_vmem [#allocation2], 16, %s87, [#allocation3]
    $region17: #{dcetm_forward.19} parent=1 // pred_fallthru
      _
    // Predicated region
    $region18: #{dcetm_forward.19} parent=1 // pred_check
      _
    $region19: #{dcetm_forward.19} parent=1 // pred_check_branch
      %91 = sbr.rel (0) target = $region21
    $region20: #{dcetm_forward.19} parent=1 // pred_region
      %92 = dma.done [#allocation3], 16
    $region21: #{dcetm_forward.19} parent=1 // pred_fallthru
      _
    %93 = sfence
    %94 = vsyncpa [#allocation3], 1

</llo_original>
